<compile_context>
chip_gen: v7x
topology: tpu7x:2x2x1
jax: 0.10.0
libtpu: 0.0.40
codegen_flags: <defaults>
</compile_context>

<pallas_src>
import math
import jax
import jax.numpy as jnp
from jax import lax
from jax.experimental import pallas as pl
from jax.experimental.pallas import tpu as pltpu

B = 2              # batch
S = 8              # sequence length
H = 768            # BERT hidden size (module hard-codes 770 = 768 + 2)
BS = B * S
VOCAB = 64         # tiny vocab for the synthetic embedding table
NUM_RANKS = 8      # len(RANKS)
FEAT = H + 2       # 770  (CLS embedding ++ fts ++ code_lens)
HEAD_W = 16        # padded fused-head width: [sig | 8 class logits | 0-pad]
OUT_W = 128        # lane-dense packed head output width


def quantize_cols(w):
    """Symmetric per-output-column int8 quantization with f32 scales."""
    amax = jnp.max(jnp.abs(w), axis=0, keepdims=True)              # (1, N)
    scale = jnp.maximum(amax, 1e-8) / 127.0
    q = jnp.clip(jnp.round(w / scale), -127.0, 127.0).astype(jnp.int8)
    return q, scale.astype(jnp.float32)


# --------------------------------------------------------------------------
# Fused kernel.  grid=(3,): step 0 -> q(CLS rows), step 1 -> k, step 2 -> v +
# attention + residual LayerNorm + fused heads + LogSoftmax + packed store.
# --------------------------------------------------------------------------
def fused_kernel(emb_ref, cls_ref, bias_ref, aux_ref,
                 wqkv_ref, qs_ref, wo_ref, wos_ref,
                 ln_ref, wh_ref, hc_ref,
                 out_ref, qcls_sc, k_sc):
    f32 = jnp.float32
    bf16 = jnp.bfloat16
    g = pl.program_id(0)

    # int8 -> bf16 dequant-cast of the current Wqkv column block (exact);
    # per-column scale is applied to the small f32 accumulator below.
    w_blk = wqkv_ref[...].astype(f32).astype(bf16)                  # (H, H)
    scale = qs_ref[...]                                             # (1, H)

    @pl.when(g == 0)
    def _():
        # q for the 2 CLS rows only.
        x_cls = cls_ref[...].astype(bf16)                           # (B, H)
        qcls_sc[...] = jnp.dot(x_cls, w_blk,
                               preferred_element_type=f32) * scale  # (B, H)

    @pl.when(g == 1)
    def _():
        x = emb_ref[...].astype(bf16)                               # (BS, H)
        k_sc[...] = jnp.dot(x, w_blk,
                            preferred_element_type=f32) * scale     # (BS, H)

    @pl.when(g == 2)
    def _():
        x = emb_ref[...].astype(bf16)
        v = jnp.dot(x, w_blk, preferred_element_type=f32) * scale   # (BS, H)

        # CLS-row attention over the whole (block-masked) batch of keys.
        q_cls = qcls_sc[...]                                        # (B, H)
        k = k_sc[...]                                               # (BS, H)
        scores = lax.dot_general(q_cls, k, (((1,), (1,)), ((), ())),
                                 preferred_element_type=f32)        # (B, BS)
        scores = scores * (1.0 / math.sqrt(H)) + bias_ref[...]
        m = jnp.max(scores, axis=-1, keepdims=True)
        p = jnp.exp(scores - m)
        p = p / jnp.sum(p, axis=-1, keepdims=True)                  # f32 softmax

        ctx = jnp.dot(p, v, preferred_element_type=f32)             # (B, H)
        wo_bf = wo_ref[...].astype(f32).astype(bf16)
        attn = jnp.dot(ctx.astype(bf16), wo_bf,
                       preferred_element_type=f32) * wos_ref[...]   # (B, H)

        # Residual + LayerNorm on the 2 CLS rows, all in f32 (VPU/EUP-safe
        # on v5e which has no bf16 vector path).
        h = cls_ref[...] + attn
        mu = jnp.mean(h, axis=-1, keepdims=True)
        var = jnp.mean((h - mu) ** 2, axis=-1, keepdims=True)
        gamma = ln_ref[0:1, :]
        beta = ln_ref[1:2, :]
        hidden = (h - mu) * lax.rsqrt(var + 1e-12) * gamma + beta   # (B, H)
        # nn.Dropout(0.2) is identity in eval mode.
        # TODO(synk): training-mode dropout (pltpu.prng_*) not reproduced.

        # Fused heads: one (768,16) bf16 MXU pass -> col 0 = sigmoid_top main,
        # cols 1..8 = class_top main.  fts/code_lens tail = two broadcast
        # FMAs; biases live in head_const row 2; the "sigmoid feeds class_top"
        # column weight lives in head_const row 3.
        aux = aux_ref[...]                                          # (B, 2)
        hc = hc_ref[...]                                            # (4, HEAD_W)
        head = (jnp.dot(hidden.astype(bf16), wh_ref[...],
                        preferred_element_type=f32)
                + aux[:, 0:1] * hc[0:1, :]
                + aux[:, 1:2] * hc[1:2, :]
                + hc[2:3, :])                                       # (B, HEAD_W)

        sig = head[:, 0:1]                                          # (B, 1) raw
        cls_lin = (head[:, 1:1 + NUM_RANKS]
                   + sig * hc[3:4, 1:1 + NUM_RANKS])                # (B, R)

        mm = jnp.max(cls_lin, axis=-1, keepdims=True)
        lse = jnp.log(jnp.sum(jnp.exp(cls_lin - mm),
                              axis=-1, keepdims=True)) + mm
        logp = cls_lin - lse                                        # LogSoftmax

        # Single lane-dense (B, 128) store: [sig | log_softmax | zero pad].
        pad = jnp.zeros((B, OUT_W - 1 - NUM_RANKS), f32)
        out_ref[...] = jnp.concatenate([sig, logp, pad], axis=1)


def run_fused(emb, emb_cls, attn_bias, aux, p):
    grid_spec = pltpu.PrefetchScalarGridSpec(
        num_scalar_prefetch=0,
        grid=(3,),
        in_specs=[
            pl.BlockSpec((BS, H), lambda g: (0, 0)),        # emb (f32)
            pl.BlockSpec((B, H), lambda g: (0, 0)),         # emb CLS rows
            pl.BlockSpec((B, BS), lambda g: (0, 0)),        # attn bias
            pl.BlockSpec((B, 2), lambda g: (0, 0)),         # aux = [fts|len]
            pl.BlockSpec((H, H), lambda g: (0, g)),         # Wqkv int8 block
            pl.BlockSpec((1, H), lambda g: (0, g)),         # Wqkv col scales
            pl.BlockSpec((H, H), lambda g: (0, 0)),         # Wo int8
            pl.BlockSpec((1, H), lambda g: (0, 0)),         # Wo col scales
            pl.BlockSpec((2, H), lambda g: (0, 0)),         # LayerNorm g/b
            pl.BlockSpec((H, HEAD_W), lambda g: (0, 0)),    # fused head bf16
            pl.BlockSpec((4, HEAD_W), lambda g: (0, 0)),    # head constants
        ],
        out_specs=pl.BlockSpec((B, OUT_W), lambda g: (0, 0)),
        scratch_shapes=[pltpu.VMEM((B, H), jnp.float32),    # q (CLS rows)
                        pltpu.VMEM((BS, H), jnp.float32)],  # k (all rows)
    )
    return pl.pallas_call(
        fused_kernel,
        out_shape=jax.ShapeDtypeStruct((B, OUT_W), jnp.float32),
        grid_spec=grid_spec,
        compiler_params=pltpu.CompilerParams(
            dimension_semantics=("arbitrary",)),
    )(emb, emb_cls, attn_bias, aux,
      p["wqkv_q8"], p["qkv_scale"], p["wo_q8"], p["wo_scale"],
      p["ln_const"], p["w_heads"], p["head_const"])


# --------------------------------------------------------------------------
# Parameters (deterministic, synthetic).  Big matrices quantized to int8.
# --------------------------------------------------------------------------
def init_params(key):
    ks = jax.random.split(key, 10)
    s = 0.02
    wq = jax.random.normal(ks[2], (H, H), jnp.float32) * s
    wk = jax.random.normal(ks[3], (H, H), jnp.float32) * s
    wv = jax.random.normal(ks[4], (H, H), jnp.float32) * s
    wo = jax.random.normal(ks[5], (H, H), jnp.float32) * s
    wqkv_q8, qkv_scale = quantize_cols(jnp.concatenate([wq, wk, wv], axis=1))
    wo_q8, wo_scale = quantize_cols(wo)

    # sigmoid_top: Linear(770, 1); class_top: Linear(771, NUM_RANKS).
    w_sig = jax.random.normal(ks[6], (FEAT, 1), jnp.float32) / math.sqrt(FEAT)
    w_cls = (jax.random.normal(ks[7], (FEAT + 1, NUM_RANKS), jnp.float32)
             / math.sqrt(FEAT + 1))
    b_sig = jnp.float32(0.01)
    b_cls = jax.random.normal(ks[9], (NUM_RANKS,), jnp.float32) * s

    # Fused head weight: col 0 = sigmoid_top rows [0:768], cols 1..8 =
    # class_top rows [0:768], cols 9..15 zero padding.
    w_heads = jnp.zeros((H, HEAD_W), jnp.float32)
    w_heads = w_heads.at[:, 0].set(w_sig[:H, 0])
    w_heads = w_heads.at[:, 1:1 + NUM_RANKS].set(w_cls[:H, :])

    # Head constant table (4, 16):
    #   row 0: fts-row of both heads,   row 1: code_lens-row of both heads,
    #   row 2: [b_sig | b_cls | 0],     row 3: [0 | class_top sigmoid-col | 0]
    head_const = jnp.zeros((4, HEAD_W), jnp.float32)
    head_const = head_const.at[0, 0].set(w_sig[H, 0])
    head_const = head_const.at[1, 0].set(w_sig[H + 1, 0])
    head_const = head_const.at[0, 1:1 + NUM_RANKS].set(w_cls[H, :])
    head_const = head_const.at[1, 1:1 + NUM_RANKS].set(w_cls[H + 1, :])
    head_const = head_const.at[2, 0].set(b_sig)
    head_const = head_const.at[2, 1:1 + NUM_RANKS].set(b_cls)
    head_const = head_const.at[3, 1:1 + NUM_RANKS].set(w_cls[H + 2, :])

    ln_const = jnp.concatenate([jnp.ones((1, H), jnp.float32),
                                jnp.zeros((1, H), jnp.float32)], axis=0)

    return dict(
        tok_emb=jax.random.normal(ks[0], (VOCAB, H), jnp.float32) * s,
        pos_emb=jax.random.normal(ks[1], (S, H), jnp.float32) * s,
        wqkv_q8=wqkv_q8, qkv_scale=qkv_scale,
        wo_q8=wo_q8, wo_scale=wo_scale,
        ln_const=ln_const,
        w_heads=w_heads.astype(jnp.bfloat16),
        head_const=head_const,
    )


# --------------------------------------------------------------------------
# Full forward: glue (embedding lookup, CLS-row slice, mask bias, output
# slicing) in XLA, all hot compute in the single fused Pallas kernel.
# --------------------------------------------------------------------------
def markdown_two_stage_forward(params, ids, mask, fts, code_lens):
    emb = (params["tok_emb"][ids] + params["pos_emb"][None, :, :]
           ).astype(jnp.float32).reshape(BS, H)                     # (BS, H)
    emb_cls = emb[0::S, :]                                          # (B, H)

    # CLS-query -> key additive bias: own batch's valid keys only.  (B, BS)
    batch_id = jnp.repeat(jnp.arange(B, dtype=jnp.int32), S)
    keep = ((jnp.arange(B, dtype=jnp.int32)[:, None] == batch_id[None, :])
            & (mask.reshape(BS) > 0)[None, :])
    attn_bias = jnp.where(keep, 0.0, -1e9).astype(jnp.float32)

    aux = jnp.concatenate([fts, code_lens], axis=1).astype(jnp.float32)

    packed = run_fused(emb, emb_cls, attn_bias, aux, params)        # (B, 128)
    sigmoid_x = packed[:, 0:1]
    class_x = packed[:, 1:1 + NUM_RANKS]
    return sigmoid_x, class_x


# Pure-JAX reference (dequantized weights, f32 math, PyTorch-style cat+linear).
def reference_forward(params, ids, mask, fts, code_lens):
    wqkv = params["wqkv_q8"].astype(jnp.float32) * params["qkv_scale"]
    wq, wk, wv = wqkv[:, :H], wqkv[:, H:2 * H], wqkv[:, 2 * H:]
    wo = params["wo_q8"].astype(jnp.float32) * params["wo_scale"]
    gamma, beta = params["ln_const"][0], params["ln_const"][1]

    emb = params["tok_emb"][ids] + params["pos_emb"][None, :, :]
    maskf = mask.astype(jnp.float32)
    q, k, v = emb @ wq, emb @ wk, emb @ wv
    sc = jnp.einsum("bqh,bkh->bqk", q, k) / math.sqrt(H)
    sc = sc + jnp.where(maskf > 0, 0.0, -1e9)[:, None, :]
    p = jax.nn.softmax(sc, axis=-1)
    attn = jnp.einsum("bqk,bkh->bqh", p, v) @ wo
    h = emb + attn
    mu = h.mean(-1, keepdims=True)
    var = ((h - mu) ** 2).mean(-1, keepdims=True)
    hid = (h - mu) * jax.lax.rsqrt(var + 1e-12) * gamma + beta

    x = jnp.concatenate([hid[:, 0, :], fts, code_lens], axis=1)     # (B, 770)
    wh = params["w_heads"].astype(jnp.float32)
    hc = params["head_const"]
    w_sig = jnp.concatenate([wh[:, 0:1], hc[0:2, 0:1]], axis=0)     # (770, 1)
    b_sig = hc[2, 0]
    sig = x @ w_sig + b_sig
    x2 = jnp.concatenate([x, sig], axis=1)                          # (B, 771)
    w_cls = jnp.concatenate([wh[:, 1:1 + NUM_RANKS],
                             hc[0:2, 1:1 + NUM_RANKS],
                             hc[3:4, 1:1 + NUM_RANKS]], axis=0)     # (771, R)
    b_cls = hc[2, 1:1 + NUM_RANKS]
    cls = x2 @ w_cls + b_cls
    return sig, jax.nn.log_softmax(cls, axis=1)


if __name__ == "__main__":
    key = jax.random.PRNGKey(0)
    k_par, k_ids, k_fts, k_len = jax.random.split(key, 4)

    params = init_params(k_par)

    ids = jax.random.randint(k_ids, (B, S), 0, VOCAB, dtype=jnp.int32)
    mask = jnp.array([[1] * S, [1, 1, 1, 1, 1, 1, 0, 0]], dtype=jnp.int32)
    fts = jax.random.normal(k_fts, (B, 1), jnp.float32)
    code_lens = jax.random.normal(k_len, (B, 1), jnp.float32)

    sigmoid_x, class_x = jax.jit(markdown_two_stage_forward)(
        params, ids, mask, fts, code_lens)
    jax.block_until_ready((sigmoid_x, class_x))

    ref_sig, ref_cls = reference_forward(params, ids, mask, fts, code_lens)
    assert sigmoid_x.shape == (B, 1) and class_x.shape == (B, NUM_RANKS)
    assert jnp.allclose(sigmoid_x, ref_sig, atol=2e-2, rtol=2e-2)
    assert jnp.allclose(class_x, ref_cls, atol=2e-2, rtol=2e-2)

    print("KERNEL_OK")
</pallas_src>

<mosaic_0001>
module attributes {stable_mosaic.version = 11 : i64} {
  func.func @fused_kernel(%arg0: i32, %arg1: memref<16x768xf32, #tpu.memory_space<vmem>>, %arg2: memref<2x768xf32, #tpu.memory_space<vmem>>, %arg3: memref<2x16xf32, #tpu.memory_space<vmem>>, %arg4: memref<2x2xf32, #tpu.memory_space<vmem>>, %arg5: memref<768x768xi8, #tpu.memory_space<vmem>>, %arg6: memref<1x768xf32, #tpu.memory_space<vmem>>, %arg7: memref<768x768xi8, #tpu.memory_space<vmem>>, %arg8: memref<1x768xf32, #tpu.memory_space<vmem>>, %arg9: memref<2x768xf32, #tpu.memory_space<vmem>>, %arg10: memref<768x16xbf16, #tpu.memory_space<vmem>>, %arg11: memref<4x16xf32, #tpu.memory_space<vmem>>, %arg12: memref<2x128xf32, #tpu.memory_space<vmem>>, %arg13: memref<2x768xf32, #tpu.memory_space<vmem>>, %arg14: memref<16x768xf32, #tpu.memory_space<vmem>>) attributes {dimension_semantics = [#tpu.dimension_semantics<arbitrary>], iteration_bounds = array<i64: 3>, scalar_prefetch = 0 : i64, scratch_operands = 2 : i64, tpu.core_type = #tpu.core_type<tc>, window_params = [{pipeline_mode = #tpu.pipeline_mode<synchronous>, transform_indices = @transform_0, window_bounds = array<i64: 16, 768>}, {pipeline_mode = #tpu.pipeline_mode<synchronous>, transform_indices = @transform_1, window_bounds = array<i64: 2, 768>}, {pipeline_mode = #tpu.pipeline_mode<synchronous>, transform_indices = @transform_2, window_bounds = array<i64: 2, 16>}, {pipeline_mode = #tpu.pipeline_mode<synchronous>, transform_indices = @transform_3, window_bounds = array<i64: 2, 2>}, {transform_indices = @transform_4, window_bounds = array<i64: 768, 768>}, {transform_indices = @transform_5, window_bounds = array<i64: 1, 768>}, {pipeline_mode = #tpu.pipeline_mode<synchronous>, transform_indices = @transform_6, window_bounds = array<i64: 768, 768>}, {pipeline_mode = #tpu.pipeline_mode<synchronous>, transform_indices = @transform_7, window_bounds = array<i64: 1, 768>}, {pipeline_mode = #tpu.pipeline_mode<synchronous>, transform_indices = @transform_8, window_bounds = array<i64: 2, 768>}, {pipeline_mode = #tpu.pipeline_mode<synchronous>, transform_indices = @transform_9, window_bounds = array<i64: 768, 16>}, {pipeline_mode = #tpu.pipeline_mode<synchronous>, transform_indices = @transform_10, window_bounds = array<i64: 4, 16>}, {pipeline_mode = #tpu.pipeline_mode<synchronous>, transform_indices = @transform_11, window_bounds = array<i64: 2, 128>}]} {
    %c0 = arith.constant 0 : index
    %c0_0 = arith.constant 0 : index
    %0 = vector.load %arg5[%c0, %c0_0] : memref<768x768xi8, #tpu.memory_space<vmem>>, vector<768x768xi8>
    %1 = arith.sitofp %0 : vector<768x768xi8> to vector<768x768xf32>
    %2 = arith.truncf %1 : vector<768x768xf32> to vector<768x768xbf16>
    %c0_1 = arith.constant 0 : index
    %c0_2 = arith.constant 0 : index
    %3 = vector.load %arg6[%c0_1, %c0_2] : memref<1x768xf32, #tpu.memory_space<vmem>>, vector<1x768xf32>
    %c0_i32 = arith.constant 0 : i32
    %4 = arith.cmpi eq, %arg0, %c0_i32 : i32
    %5 = arith.extui %4 : i1 to i32
    %c0_i32_3 = arith.constant 0 : i32
    %6 = arith.cmpi ne, %5, %c0_i32_3 : i32
    scf.if %6 {
      %c0_6 = arith.constant 0 : index
      %c0_7 = arith.constant 0 : index
      %13 = vector.load %arg2[%c0_6, %c0_7] : memref<2x768xf32, #tpu.memory_space<vmem>>, vector<2x768xf32>
      %14 = arith.truncf %13 : vector<2x768xf32> to vector<2x768xbf16>
      %cst = arith.constant dense<0.000000e+00> : vector<2x768xf32>
      %15 = tpu.matmul %14, %2, %cst {dimension_numbers = #tpu.dot_dimension_numbers<[1], [0], [0], [1], [0, 0, 1, 1], [], []>} : vector<2x768xbf16>, vector<768x768xbf16>, vector<2x768xf32> -> vector<2x768xf32>
      %16 = vector.broadcast %3 : vector<1x768xf32> to vector<2x768xf32>
      %17 = arith.mulf %15, %16 : vector<2x768xf32>
      %c0_8 = arith.constant 0 : index
      %c0_9 = arith.constant 0 : index
      %18 = vector.load %arg13[%c0_8, %c0_9] : memref<2x768xf32, #tpu.memory_space<vmem>>, vector<2x768xf32>
      tpu.vector_store %arg13[%c0_8, %c0_9], %17 {strides = array<i32>} : memref<2x768xf32, #tpu.memory_space<vmem>>, vector<2x768xf32>,
    } else {
    }
    %c1_i32 = arith.constant 1 : i32
    %7 = arith.cmpi eq, %arg0, %c1_i32 : i32
    %8 = arith.extui %7 : i1 to i32
    %c0_i32_4 = arith.constant 0 : i32
    %9 = arith.cmpi ne, %8, %c0_i32_4 : i32
    scf.if %9 {
      %c0_6 = arith.constant 0 : index
      %c0_7 = arith.constant 0 : index
      %13 = vector.load %arg1[%c0_6, %c0_7] : memref<16x768xf32, #tpu.memory_space<vmem>>, vector<16x768xf32>
      %14 = arith.truncf %13 : vector<16x768xf32> to vector<16x768xbf16>
      %cst = arith.constant dense<0.000000e+00> : vector<16x768xf32>
      %15 = tpu.matmul %14, %2, %cst {dimension_numbers = #tpu.dot_dimension_numbers<[1], [0], [0], [1], [0, 0, 1, 1], [], []>} : vector<16x768xbf16>, vector<768x768xbf16>, vector<16x768xf32> -> vector<16x768xf32>
      %16 = vector.broadcast %3 : vector<1x768xf32> to vector<16x768xf32>
      %17 = arith.mulf %15, %16 : vector<16x768xf32>
      %c0_8 = arith.constant 0 : index
      %c0_9 = arith.constant 0 : index
      %18 = vector.load %arg14[%c0_8, %c0_9] : memref<16x768xf32, #tpu.memory_space<vmem>>, vector<16x768xf32>
      tpu.vector_store %arg14[%c0_8, %c0_9], %17 {strides = array<i32>} : memref<16x768xf32, #tpu.memory_space<vmem>>, vector<16x768xf32>,
    } else {
    }
    %c2_i32 = arith.constant 2 : i32
    %10 = arith.cmpi eq, %arg0, %c2_i32 : i32
    %11 = arith.extui %10 : i1 to i32
    %c0_i32_5 = arith.constant 0 : i32
    %12 = arith.cmpi ne, %11, %c0_i32_5 : i32
    scf.if %12 {
      %c0_6 = arith.constant 0 : index
      %c0_7 = arith.constant 0 : index
      %13 = vector.load %arg1[%c0_6, %c0_7] : memref<16x768xf32, #tpu.memory_space<vmem>>, vector<16x768xf32>
      %14 = arith.truncf %13 : vector<16x768xf32> to vector<16x768xbf16>
      %cst = arith.constant dense<0.000000e+00> : vector<16x768xf32>
      %15 = tpu.matmul %14, %2, %cst {dimension_numbers = #tpu.dot_dimension_numbers<[1], [0], [0], [1], [0, 0, 1, 1], [], []>} : vector<16x768xbf16>, vector<768x768xbf16>, vector<16x768xf32> -> vector<16x768xf32>
      %16 = vector.broadcast %3 : vector<1x768xf32> to vector<16x768xf32>
      %17 = arith.mulf %15, %16 : vector<16x768xf32>
      %c0_8 = arith.constant 0 : index
      %c0_9 = arith.constant 0 : index
      %18 = vector.load %arg13[%c0_8, %c0_9] : memref<2x768xf32, #tpu.memory_space<vmem>>, vector<2x768xf32>
      %c0_10 = arith.constant 0 : index
      %c0_11 = arith.constant 0 : index
      %19 = vector.load %arg14[%c0_10, %c0_11] : memref<16x768xf32, #tpu.memory_space<vmem>>, vector<16x768xf32>
      %cst_12 = arith.constant dense<0.000000e+00> : vector<2x16xf32>
      %20 = tpu.matmul %18, %19, %cst_12 {dimension_numbers = #tpu.dot_dimension_numbers<[1], [1], [0], [0], [0, 0, 1, 0], [], []>} : vector<2x768xf32>, vector<16x768xf32>, vector<2x16xf32> -> vector<2x16xf32>
      %cst_13 = arith.constant 0.0360843912 : f32
      %21 = vector.broadcast %cst_13 : f32 to vector<2x16xf32>
      %22 = arith.mulf %20, %21 : vector<2x16xf32>
      %c0_14 = arith.constant 0 : index
      %c0_15 = arith.constant 0 : index
      %23 = vector.load %arg3[%c0_14, %c0_15] : memref<2x16xf32, #tpu.memory_space<vmem>>, vector<2x16xf32>
      %24 = arith.addf %22, %23 : vector<2x16xf32>
      %cst_16 = arith.constant dense<0xFF800000> : vector<2xf32>
      %25 = vector.multi_reduction <maximumf>, %24, %cst_16 [1] : vector<2x16xf32> to vector<2xf32>
      %26 = vector.shape_cast %25 : vector<2xf32> to vector<2x1xf32>
      %27 = vector.broadcast %26 : vector<2x1xf32> to vector<2x16xf32>
      %28 = arith.subf %24, %27 : vector<2x16xf32>
      %29 = math.exp %28 : vector<2x16xf32>
      %cst_17 = arith.constant dense<0.000000e+00> : vector<2xf32>
      %30 = vector.multi_reduction <add>, %29, %cst_17 [1] : vector<2x16xf32> to vector<2xf32>
      %31 = vector.shape_cast %30 : vector<2xf32> to vector<2x1xf32>
      %32 = vector.broadcast %31 : vector<2x1xf32> to vector<2x16xf32>
      %33 = arith.divf %29, %32 : vector<2x16xf32>
      %cst_18 = arith.constant dense<0.000000e+00> : vector<2x768xf32>
      %34 = tpu.matmul %33, %17, %cst_18 {dimension_numbers = #tpu.dot_dimension_numbers<[1], [0], [0], [1], [0, 0, 1, 1], [], []>} : vector<2x16xf32>, vector<16x768xf32>, vector<2x768xf32> -> vector<2x768xf32>
      %c0_19 = arith.constant 0 : index
      %c0_20 = arith.constant 0 : index
      %35 = vector.load %arg7[%c0_19, %c0_20] : memref<768x768xi8, #tpu.memory_space<vmem>>, vector<768x768xi8>
      %36 = arith.sitofp %35 : vector<768x768xi8> to vector<768x768xf32>
      %37 = arith.truncf %36 : vector<768x768xf32> to vector<768x768xbf16>
      %38 = arith.truncf %34 : vector<2x768xf32> to vector<2x768xbf16>
      %cst_21 = arith.constant dense<0.000000e+00> : vector<2x768xf32>
      %39 = tpu.matmul %38, %37, %cst_21 {dimension_numbers = #tpu.dot_dimension_numbers<[1], [0], [0], [1], [0, 0, 1, 1], [], []>} : vector<2x768xbf16>, vector<768x768xbf16>, vector<2x768xf32> -> vector<2x768xf32>
      %c0_22 = arith.constant 0 : index
      %c0_23 = arith.constant 0 : index
      %40 = vector.load %arg8[%c0_22, %c0_23] : memref<1x768xf32, #tpu.memory_space<vmem>>, vector<1x768xf32>
      %41 = vector.broadcast %40 : vector<1x768xf32> to vector<2x768xf32>
      %42 = arith.mulf %39, %41 : vector<2x768xf32>
      %c0_24 = arith.constant 0 : index
      %c0_25 = arith.constant 0 : index
      %43 = vector.load %arg2[%c0_24, %c0_25] : memref<2x768xf32, #tpu.memory_space<vmem>>, vector<2x768xf32>
      %44 = arith.addf %43, %42 : vector<2x768xf32>
      %cst_26 = arith.constant dense<0.000000e+00> : vector<2xf32>
      %45 = vector.multi_reduction <add>, %44, %cst_26 [1] : vector<2x768xf32> to vector<2xf32>
      %46 = vector.shape_cast %45 : vector<2xf32> to vector<2x1xf32>
      %cst_27 = arith.constant 7.680000e+02 : f32
      %47 = vector.broadcast %cst_27 : f32 to vector<2x1xf32>
      %48 = arith.divf %46, %47 : vector<2x1xf32>
      %49 = vector.broadcast %48 : vector<2x1xf32> to vector<2x768xf32>
      %50 = arith.subf %44, %49 : vector<2x768xf32>
      %51 = arith.mulf %50, %50 : vector<2x768xf32>
      %cst_28 = arith.constant dense<0.000000e+00> : vector<2xf32>
      %52 = vector.multi_reduction <add>, %51, %cst_28 [1] : vector<2x768xf32> to vector<2xf32>
      %53 = vector.shape_cast %52 : vector<2xf32> to vector<2x1xf32>
      %cst_29 = arith.constant 7.680000e+02 : f32
      %54 = vector.broadcast %cst_29 : f32 to vector<2x1xf32>
      %55 = arith.divf %53, %54 : vector<2x1xf32>
      %c0_30 = arith.constant 0 : index
      %c0_31 = arith.constant 0 : index
      %56 = vector.load %arg9[%c0_30, %c0_31] : memref<2x768xf32, #tpu.memory_space<vmem>>, vector<1x768xf32>
      %c1 = arith.constant 1 : index
      %c0_32 = arith.constant 0 : index
      %57 = vector.load %arg9[%c1, %c0_32] : memref<2x768xf32, #tpu.memory_space<vmem>>, vector<1x768xf32>
      %58 = vector.broadcast %48 : vector<2x1xf32> to vector<2x768xf32>
      %59 = arith.subf %44, %58 : vector<2x768xf32>
      %cst_33 = arith.constant 9.99999996E-13 : f32
      %60 = vector.broadcast %cst_33 : f32 to vector<2x1xf32>
      %61 = arith.addf %55, %60 : vector<2x1xf32>
      %62 = math.rsqrt %61 : vector<2x1xf32>
      %63 = vector.broadcast %62 : vector<2x1xf32> to vector<2x768xf32>
      %64 = arith.mulf %59, %63 : vector<2x768xf32>
      %65 = vector.broadcast %56 : vector<1x768xf32> to vector<2x768xf32>
      %66 = arith.mulf %64, %65 : vector<2x768xf32>
      %67 = vector.broadcast %57 : vector<1x768xf32> to vector<2x768xf32>
      %68 = arith.addf %66, %67 : vector<2x768xf32>
      %c0_34 = arith.constant 0 : index
      %c0_35 = arith.constant 0 : index
      %69 = vector.load %arg4[%c0_34, %c0_35] : memref<2x2xf32, #tpu.memory_space<vmem>>, vector<2x2xf32>
      %c0_36 = arith.constant 0 : index
      %c0_37 = arith.constant 0 : index
      %70 = vector.load %arg11[%c0_36, %c0_37] : memref<4x16xf32, #tpu.memory_space<vmem>>, vector<4x16xf32>
      %71 = arith.truncf %68 : vector<2x768xf32> to vector<2x768xbf16>
      %c0_38 = arith.constant 0 : index
      %c0_39 = arith.constant 0 : index
      %72 = vector.load %arg10[%c0_38, %c0_39] : memref<768x16xbf16, #tpu.memory_space<vmem>>, vector<768x16xbf16>
      %cst_40 = arith.constant dense<0.000000e+00> : vector<2x16xf32>
      %73 = tpu.matmul %71, %72, %cst_40 {dimension_numbers = #tpu.dot_dimension_numbers<[1], [0], [0], [1], [0, 0, 1, 1], [], []>} : vector<2x768xbf16>, vector<768x16xbf16>, vector<2x16xf32> -> vector<2x16xf32>
      %74 = vector.extract_strided_slice %69 {offsets = [0, 0], sizes = [2, 1], strides = [1, 1]} : vector<2x2xf32> to vector<2x1xf32>
      %75 = vector.extract_strided_slice %70 {offsets = [0, 0], sizes = [1, 16], strides = [1, 1]} : vector<4x16xf32> to vector<1x16xf32>
      %76 = vector.broadcast %74 : vector<2x1xf32> to vector<2x16xf32>
      %77 = vector.broadcast %75 : vector<1x16xf32> to vector<2x16xf32>
      %78 = arith.mulf %76, %77 : vector<2x16xf32>
      %79 = arith.addf %73, %78 : vector<2x16xf32>
      %80 = vector.extract_strided_slice %69 {offsets = [0, 1], sizes = [2, 1], strides = [1, 1]} : vector<2x2xf32> to vector<2x1xf32>
      %81 = vector.extract_strided_slice %70 {offsets = [1, 0], sizes = [1, 16], strides = [1, 1]} : vector<4x16xf32> to vector<1x16xf32>
      %82 = vector.broadcast %80 : vector<2x1xf32> to vector<2x16xf32>
      %83 = vector.broadcast %81 : vector<1x16xf32> to vector<2x16xf32>
      %84 = arith.mulf %82, %83 : vector<2x16xf32>
      %85 = arith.addf %79, %84 : vector<2x16xf32>
      %86 = vector.extract_strided_slice %70 {offsets = [2, 0], sizes = [1, 16], strides = [1, 1]} : vector<4x16xf32> to vector<1x16xf32>
      %87 = vector.broadcast %86 : vector<1x16xf32> to vector<2x16xf32>
      %88 = arith.addf %85, %87 : vector<2x16xf32>
      %89 = vector.extract_strided_slice %88 {offsets = [0, 0], sizes = [2, 1], strides = [1, 1]} : vector<2x16xf32> to vector<2x1xf32>
      %90 = vector.extract_strided_slice %88 {offsets = [0, 1], sizes = [2, 8], strides = [1, 1]} : vector<2x16xf32> to vector<2x8xf32>
      %91 = vector.extract_strided_slice %70 {offsets = [3, 1], sizes = [1, 8], strides = [1, 1]} : vector<4x16xf32> to vector<1x8xf32>
      %92 = vector.broadcast %89 : vector<2x1xf32> to vector<2x8xf32>
      %93 = vector.broadcast %91 : vector<1x8xf32> to vector<2x8xf32>
      %94 = arith.mulf %92, %93 : vector<2x8xf32>
      %95 = arith.addf %90, %94 : vector<2x8xf32>
      %cst_41 = arith.constant dense<0xFF800000> : vector<2xf32>
      %96 = vector.multi_reduction <maximumf>, %95, %cst_41 [1] : vector<2x8xf32> to vector<2xf32>
      %97 = vector.shape_cast %96 : vector<2xf32> to vector<2x1xf32>
      %98 = vector.broadcast %97 : vector<2x1xf32> to vector<2x8xf32>
      %99 = arith.subf %95, %98 : vector<2x8xf32>
      %100 = math.exp %99 : vector<2x8xf32>
      %cst_42 = arith.constant dense<0.000000e+00> : vector<2xf32>
      %101 = vector.multi_reduction <add>, %100, %cst_42 [1] : vector<2x8xf32> to vector<2xf32>
      %102 = vector.shape_cast %101 : vector<2xf32> to vector<2x1xf32>
      %103 = math.log %102 : vector<2x1xf32>
      %104 = arith.addf %103, %97 : vector<2x1xf32>
      %105 = vector.broadcast %104 : vector<2x1xf32> to vector<2x8xf32>
      %106 = arith.subf %95, %105 : vector<2x8xf32>
      %cst_43 = arith.constant 0.000000e+00 : f32
      %107 = vector.broadcast %cst_43 : f32 to vector<2x119xf32>
      %108 = tpu.concatenate %89, %106, %107 in 1 : vector<2x1xf32>, vector<2x8xf32>, vector<2x119xf32> -> vector<2x128xf32>
      %c0_44 = arith.constant 0 : index
      %c0_45 = arith.constant 0 : index
      %109 = vector.load %arg12[%c0_44, %c0_45] : memref<2x128xf32, #tpu.memory_space<vmem>>, vector<2x128xf32>
      tpu.vector_store %arg12[%c0_44, %c0_45], %108 {strides = array<i32>} : memref<2x128xf32, #tpu.memory_space<vmem>>, vector<2x128xf32>,
    } else {
    }
    return
  }
  func.func @transform_0(%arg0: i32) -> (i32, i32) {
    %c0_i32 = arith.constant 0 : i32
    %c0_i32_0 = arith.constant 0 : i32
    %c0_i32_1 = arith.constant 0 : i32
    return %c0_i32, %c0_i32_0 : i32, i32
  }
  func.func @transform_1(%arg0: i32) -> (i32, i32) {
    %c0_i32 = arith.constant 0 : i32
    %c0_i32_0 = arith.constant 0 : i32
    %c0_i32_1 = arith.constant 0 : i32
    return %c0_i32, %c0_i32_0 : i32, i32
  }
  func.func @transform_2(%arg0: i32) -> (i32, i32) {
    %c0_i32 = arith.constant 0 : i32
    %c0_i32_0 = arith.constant 0 : i32
    %c0_i32_1 = arith.constant 0 : i32
    return %c0_i32, %c0_i32_0 : i32, i32
  }
  func.func @transform_3(%arg0: i32) -> (i32, i32) {
    %c0_i32 = arith.constant 0 : i32
    %c0_i32_0 = arith.constant 0 : i32
    %c0_i32_1 = arith.constant 0 : i32
    return %c0_i32, %c0_i32_0 : i32, i32
  }
  func.func @transform_4(%arg0: i32) -> (i32, i32) {
    %c0_i32 = arith.constant 0 : i32
    %c0_i32_0 = arith.constant 0 : i32
    return %c0_i32, %arg0 : i32, i32
  }
  func.func @transform_5(%arg0: i32) -> (i32, i32) {
    %c0_i32 = arith.constant 0 : i32
    %c0_i32_0 = arith.constant 0 : i32
    return %c0_i32, %arg0 : i32, i32
  }
  func.func @transform_6(%arg0: i32) -> (i32, i32) {
    %c0_i32 = arith.constant 0 : i32
    %c0_i32_0 = arith.constant 0 : i32
    %c0_i32_1 = arith.constant 0 : i32
    return %c0_i32, %c0_i32_0 : i32, i32
  }
  func.func @transform_7(%arg0: i32) -> (i32, i32) {
    %c0_i32 = arith.constant 0 : i32
    %c0_i32_0 = arith.constant 0 : i32
    %c0_i32_1 = arith.constant 0 : i32
    return %c0_i32, %c0_i32_0 : i32, i32
  }
  func.func @transform_8(%arg0: i32) -> (i32, i32) {
    %c0_i32 = arith.constant 0 : i32
    %c0_i32_0 = arith.constant 0 : i32
    %c0_i32_1 = arith.constant 0 : i32
    return %c0_i32, %c0_i32_0 : i32, i32
  }
  func.func @transform_9(%arg0: i32) -> (i32, i32) {
    %c0_i32 = arith.constant 0 : i32
    %c0_i32_0 = arith.constant 0 : i32
    %c0_i32_1 = arith.constant 0 : i32
    return %c0_i32, %c0_i32_0 : i32, i32
  }
  func.func @transform_10(%arg0: i32) -> (i32, i32) {
    %c0_i32 = arith.constant 0 : i32
    %c0_i32_0 = arith.constant 0 : i32
    %c0_i32_1 = arith.constant 0 : i32
    return %c0_i32, %c0_i32_0 : i32, i32
  }
  func.func @transform_11(%arg0: i32) -> (i32, i32) {
    %c0_i32 = arith.constant 0 : i32
    %c0_i32_0 = arith.constant 0 : i32
    %c0_i32_1 = arith.constant 0 : i32
    return %c0_i32, %c0_i32_0 : i32, i32
  }
}

</mosaic_0001>

<llo_original>
// kernel: markdown_two_stage_forward.1
$region0: #{markdown_two_stage_forward.1}
  #allocation0 [shape = 'u32[]', space=smem, size = 0x4, offset = 0x4, fixed_abs, tag = 'smem constant byte address 0x4 - core index']
  #allocation1 [shape = 'u32[144,128]{1,0:T(1,128)}', space=vmem, size = 0x12000, scoped, tag = 'internal scratch']
  #allocation2 [shape = 'f32[2,768]{1,0:T(2,128)}', space=vmem, size = 0x1800, scoped, tag = 'scratch operand']
  #allocation3 [shape = 'f32[16,768]{1,0:T(8,128)}', space=vmem, size = 0xc000, scoped, tag = 'scratch operand']
  %s0 = inlined_call_operand.vmem [shape: f32[16,768], index: 0, kind: input, shape index: {}]
  %s1 = inlined_call_operand.vmem [shape: f32[2,768], index: 1, kind: input, shape index: {}]
  %s2 = inlined_call_operand.vmem [shape: f32[2,16], index: 2, kind: input, shape index: {}]
  %s3 = inlined_call_operand.vmem [shape: f32[2,2], index: 3, kind: input, shape index: {}]
  %s4 = inlined_call_operand.hbm [shape: s8[768,2304], index: 4, kind: input, shape index: {}]
  %s5 = inlined_call_operand.hbm [shape: f32[1,2304], index: 5, kind: input, shape index: {}]
  %s6 = inlined_call_operand.hbm [shape: s8[768,768], index: 6, kind: input, shape index: {}]
  %s7 = inlined_call_operand.hbm [shape: f32[1,768], index: 7, kind: input, shape index: {}]
  %s8 = inlined_call_operand.hbm [shape: f32[2,768], index: 8, kind: input, shape index: {}]
  %s9 = inlined_call_operand.vmem [shape: bf16[768,16], index: 9, kind: input, shape index: {}]
  %s10 = inlined_call_operand.hbm [shape: f32[4,16], index: 10, kind: input, shape index: {}]
  %s11 = inlined_call_operand.vmem [shape: f32[2,128], index: 11, kind: output, shape index: {}]
  %s12 = sld [smem:[#allocation0]]
  $region113: #{markdown_two_stage_forward.1} parent=0
    _
  %s14 = ssub.s32 1, %s12
  %s15 = scalar_select 0, %s14, %s12
  $region1: #{markdown_two_stage_forward.1} parent=0
    #allocation4 [shape = 'u8[1179648]{0}', space=vmem, size = 0x120000, scoped, tag = 'input window, operand 4']
    #allocation5 [shape = 's32[2]{0}', space=sflag, size = 0x8, scoped, tag = 'scoped memory for markdown_two_stage_forward.1']
    #allocation6 [shape = 'u8[6144]{0}', space=vmem, size = 0x1800, scoped, tag = 'input window, operand 5']
    #allocation7 [shape = 's32[2]{0}', space=sflag, size = 0x8, scoped, tag = 'scoped memory for markdown_two_stage_forward.1']
    #allocation8 [shape = 'u8[589824]{0}', space=vmem, size = 0x90000, scoped, tag = 'input window, operand 6, single buffered']
    #allocation9 [shape = 'u8[3072]{0}', space=vmem, size = 0xc00, scoped, tag = 'input window, operand 7, single buffered']
    #allocation10 [shape = 's32[1]{0}', space=sflag, size = 0x4, scoped, tag = 'scoped memory for markdown_two_stage_forward.1']
    #allocation11 [shape = 'u8[6144]{0}', space=vmem, size = 0x1800, scoped, tag = 'input window, operand 8, single buffered']
    #allocation12 [shape = 'u8[2048]{0}', space=vmem, size = 0x800, scoped, tag = 'input window, operand 10, single buffered']
    #allocation13 [shape = 's32[1]{0}', space=sflag, size = 0x4, scoped, tag = 'scoped memory for markdown_two_stage_forward.1']
    %16 = vsyncpa [#allocation5], 0
    %s17 = scalar_lea.sflag [#allocation5], 1
    %18 = vsyncpa %s17, 0
    %19 = vsyncpa [#allocation7], 0
    %s20 = scalar_lea.sflag [#allocation7], 1
    %21 = vsyncpa %s20, 0
    %22 = vsyncpa [#allocation10], 0
    %23 = vsyncpa [#allocation13], 0
    loop: start=0, step=1, limit=5
    $region2: #{markdown_two_stage_forward.1} parent=1 // loop_pre_header
      _
    $region3: #{markdown_two_stage_forward.1} parent=1 // loop_header
      %s25 = sphi 0, %s29
      %p26 = scmp.ge.s32.totalorder %s25, 5
      %s33 = sphi 0, %s33
      %s35 = sphi 0, %s33
      %s36 = sphi 0, %s35
      %s50 = sphi 0, %s36
      %s54 = sphi 0, %s54
      %s56 = sphi 0, %s54
      %s57 = sphi 0, %s56
      %s71 = sphi 0, %s57
      %s75 = sphi 0, %s75
      %s77 = sphi 0, %s75
      %s78 = sphi 0, %s77
      %s92 = sphi 0, %s78
      %s96 = sphi 0, %s96
      %s98 = sphi 0, %s96
      %s99 = sphi 0, %s98
      %s113 = sphi 0, %s99
      %s119 = sphi 0, %s121
      %s122 = sphi 0, %s119
      %s123 = sphi 0, %s122
      %s139 = sphi 0, %s123
      %s145 = sphi 0, %s147
      %s148 = sphi 0, %s145
      %s149 = sphi 0, %s148
      %s165 = sphi 0, %s149
      %s169 = sphi 0, %s169
      %s171 = sphi 0, %s169
      %s172 = sphi 0, %s171
      %s186 = sphi 0, %s172
      %s190 = sphi 0, %s190
      %s192 = sphi 0, %s190
      %s193 = sphi 0, %s192
      %s207 = sphi 0, %s193
      %s211 = sphi 0, %s211
      %s213 = sphi 0, %s211
      %s214 = sphi 0, %s213
      %s228 = sphi 0, %s214
      %s232 = sphi 0, %s232
      %s234 = sphi 0, %s232
      %s235 = sphi 0, %s234
      %s249 = sphi 0, %s235
      %s253 = sphi 0, %s253
      %s255 = sphi 0, %s253
      %s256 = sphi 0, %s255
      %s270 = sphi 0, %s256
      %s274 = sphi 0, %s274
      %s276 = sphi 0, %s274
      %s277 = sphi 0, %s276
      %s291 = sphi 0, %s277
    $region4: #{markdown_two_stage_forward.1} parent=1 // loop_header_branch
      %28 = sbr.rel (%p26) target = $region8
    $region5: #{markdown_two_stage_forward.1} parent=1 // loop_body
      %s30 = ssub.s32 %s25, 1
      %s31 = ssub.s32 %s25, 2
      %s32 = sadd.s32 %s25, 1
      %s34 = sadd.s32 %s33, 1
      %p37 = scmp.eq.s32.totalorder %s25, 2
      %p38 = scmp.ne.s32.totalorder %s33, %s35
      %p39 = scmp.eq.s32.totalorder %s25, 0
      %p40 = por %p38, %p39
      %p41 = scmp.ne.s32.totalorder %s33, %s35
      %p42 = scmp.eq.s32.totalorder %s30, 2
      %p43 = por %p41, %p42
      %p44 = scmp.ne.s32.totalorder %s35, %s36
      %p45 = scmp.eq.s32.totalorder %s30, 0
      %p46 = por %p44, %p45
      %p47 = scmp.ne.s32.totalorder %s35, %s36
      %p48 = scmp.eq.s32.totalorder %s31, 2
      %p49 = por %p47, %p48
      %p51 = scmp.ne.s32.totalorder %s36, %s50
      %p52 = scmp.eq.s32.totalorder %s31, 0
      %p53 = por %p51, %p52
      %s55 = sadd.s32 %s54, 1
      %p58 = scmp.eq.s32.totalorder %s25, 2
      %p59 = scmp.ne.s32.totalorder %s54, %s56
      %p60 = scmp.eq.s32.totalorder %s25, 0
      %p61 = por %p59, %p60
      %p62 = scmp.ne.s32.totalorder %s54, %s56
      %p63 = scmp.eq.s32.totalorder %s30, 2
      %p64 = por %p62, %p63
      %p65 = scmp.ne.s32.totalorder %s56, %s57
      %p66 = scmp.eq.s32.totalorder %s30, 0
      %p67 = por %p65, %p66
      %p68 = scmp.ne.s32.totalorder %s56, %s57
      %p69 = scmp.eq.s32.totalorder %s31, 2
      %p70 = por %p68, %p69
      %p72 = scmp.ne.s32.totalorder %s57, %s71
      %p73 = scmp.eq.s32.totalorder %s31, 0
      %p74 = por %p72, %p73
      %s76 = sadd.s32 %s75, 1
      %p79 = scmp.eq.s32.totalorder %s25, 2
      %p80 = scmp.ne.s32.totalorder %s75, %s77
      %p81 = scmp.eq.s32.totalorder %s25, 0
      %p82 = por %p80, %p81
      %p83 = scmp.ne.s32.totalorder %s75, %s77
      %p84 = scmp.eq.s32.totalorder %s30, 2
      %p85 = por %p83, %p84
      %p86 = scmp.ne.s32.totalorder %s77, %s78
      %p87 = scmp.eq.s32.totalorder %s30, 0
      %p88 = por %p86, %p87
      %p89 = scmp.ne.s32.totalorder %s77, %s78
      %p90 = scmp.eq.s32.totalorder %s31, 2
      %p91 = por %p89, %p90
      %p93 = scmp.ne.s32.totalorder %s78, %s92
      %p94 = scmp.eq.s32.totalorder %s31, 0
      %p95 = por %p93, %p94
      %s97 = sadd.s32 %s96, 1
      %p100 = scmp.eq.s32.totalorder %s25, 2
      %p101 = scmp.ne.s32.totalorder %s96, %s98
      %p102 = scmp.eq.s32.totalorder %s25, 0
      %p103 = por %p101, %p102
      %p104 = scmp.ne.s32.totalorder %s96, %s98
      %p105 = scmp.eq.s32.totalorder %s30, 2
      %p106 = por %p104, %p105
      %p107 = scmp.ne.s32.totalorder %s98, %s99
      %p108 = scmp.eq.s32.totalorder %s30, 0
      %p109 = por %p107, %p108
      %p110 = scmp.ne.s32.totalorder %s98, %s99
      %p111 = scmp.eq.s32.totalorder %s31, 2
      %p112 = por %p110, %p111
      %p114 = scmp.ne.s32.totalorder %s99, %s113
      %p115 = scmp.eq.s32.totalorder %s31, 0
      %p116 = por %p114, %p115
      %s117 = ssub.s32 %s25, %s32
      %p118 = scmp.eq.s32.totalorder %s117, 0
      %s120 = sadd.s32 %s119, 1
      %s121 = scalar_select %p118, %s119, %s120
      %p124 = pneg %p118
      %p125 = scmp.eq.s32.totalorder %s25, 2
      %p126 = por %p124, %p125
      %p127 = scmp.ne.s32.totalorder %s119, %s122
      %p128 = scmp.eq.s32.totalorder %s25, 0
      %p129 = por %p127, %p128
      %p130 = scmp.ne.s32.totalorder %s119, %s122
      %p131 = scmp.eq.s32.totalorder %s30, 2
      %p132 = por %p130, %p131
      %p133 = scmp.ne.s32.totalorder %s122, %s123
      %p134 = scmp.eq.s32.totalorder %s30, 0
      %p135 = por %p133, %p134
      %p136 = scmp.ne.s32.totalorder %s122, %s123
      %p137 = scmp.eq.s32.totalorder %s31, 2
      %p138 = por %p136, %p137
      %p140 = scmp.ne.s32.totalorder %s123, %s139
      %p141 = scmp.eq.s32.totalorder %s31, 0
      %p142 = por %p140, %p141
      %s143 = ssub.s32 %s25, %s32
      %p144 = scmp.eq.s32.totalorder %s143, 0
      %s146 = sadd.s32 %s145, 1
      %s147 = scalar_select %p144, %s145, %s146
      %p150 = pneg %p144
      %p151 = scmp.eq.s32.totalorder %s25, 2
      %p152 = por %p150, %p151
      %p153 = scmp.ne.s32.totalorder %s145, %s148
      %p154 = scmp.eq.s32.totalorder %s25, 0
      %p155 = por %p153, %p154
      %p156 = scmp.ne.s32.totalorder %s145, %s148
      %p157 = scmp.eq.s32.totalorder %s30, 2
      %p158 = por %p156, %p157
      %p159 = scmp.ne.s32.totalorder %s148, %s149
      %p160 = scmp.eq.s32.totalorder %s30, 0
      %p161 = por %p159, %p160
      %p162 = scmp.ne.s32.totalorder %s148, %s149
      %p163 = scmp.eq.s32.totalorder %s31, 2
      %p164 = por %p162, %p163
      %p166 = scmp.ne.s32.totalorder %s149, %s165
      %p167 = scmp.eq.s32.totalorder %s31, 0
      %p168 = por %p166, %p167
      %s170 = sadd.s32 %s169, 1
      %p173 = scmp.eq.s32.totalorder %s25, 2
      %p174 = scmp.ne.s32.totalorder %s169, %s171
      %p175 = scmp.eq.s32.totalorder %s25, 0
      %p176 = por %p174, %p175
      %p177 = scmp.ne.s32.totalorder %s169, %s171
      %p178 = scmp.eq.s32.totalorder %s30, 2
      %p179 = por %p177, %p178
      %p180 = scmp.ne.s32.totalorder %s171, %s172
      %p181 = scmp.eq.s32.totalorder %s30, 0
      %p182 = por %p180, %p181
      %p183 = scmp.ne.s32.totalorder %s171, %s172
      %p184 = scmp.eq.s32.totalorder %s31, 2
      %p185 = por %p183, %p184
      %p187 = scmp.ne.s32.totalorder %s172, %s186
      %p188 = scmp.eq.s32.totalorder %s31, 0
      %p189 = por %p187, %p188
      %s191 = sadd.s32 %s190, 1
      %p194 = scmp.eq.s32.totalorder %s25, 2
      %p195 = scmp.ne.s32.totalorder %s190, %s192
      %p196 = scmp.eq.s32.totalorder %s25, 0
      %p197 = por %p195, %p196
      %p198 = scmp.ne.s32.totalorder %s190, %s192
      %p199 = scmp.eq.s32.totalorder %s30, 2
      %p200 = por %p198, %p199
      %p201 = scmp.ne.s32.totalorder %s192, %s193
      %p202 = scmp.eq.s32.totalorder %s30, 0
      %p203 = por %p201, %p202
      %p204 = scmp.ne.s32.totalorder %s192, %s193
      %p205 = scmp.eq.s32.totalorder %s31, 2
      %p206 = por %p204, %p205
      %p208 = scmp.ne.s32.totalorder %s193, %s207
      %p209 = scmp.eq.s32.totalorder %s31, 0
      %p210 = por %p208, %p209
      %s212 = sadd.s32 %s211, 1
      %p215 = scmp.eq.s32.totalorder %s25, 2
      %p216 = scmp.ne.s32.totalorder %s211, %s213
      %p217 = scmp.eq.s32.totalorder %s25, 0
      %p218 = por %p216, %p217
      %p219 = scmp.ne.s32.totalorder %s211, %s213
      %p220 = scmp.eq.s32.totalorder %s30, 2
      %p221 = por %p219, %p220
      %p222 = scmp.ne.s32.totalorder %s213, %s214
      %p223 = scmp.eq.s32.totalorder %s30, 0
      %p224 = por %p222, %p223
      %p225 = scmp.ne.s32.totalorder %s213, %s214
      %p226 = scmp.eq.s32.totalorder %s31, 2
      %p227 = por %p225, %p226
      %p229 = scmp.ne.s32.totalorder %s214, %s228
      %p230 = scmp.eq.s32.totalorder %s31, 0
      %p231 = por %p229, %p230
      %s233 = sadd.s32 %s232, 1
      %p236 = scmp.eq.s32.totalorder %s25, 2
      %p237 = scmp.ne.s32.totalorder %s232, %s234
      %p238 = scmp.eq.s32.totalorder %s25, 0
      %p239 = por %p237, %p238
      %p240 = scmp.ne.s32.totalorder %s232, %s234
      %p241 = scmp.eq.s32.totalorder %s30, 2
      %p242 = por %p240, %p241
      %p243 = scmp.ne.s32.totalorder %s234, %s235
      %p244 = scmp.eq.s32.totalorder %s30, 0
      %p245 = por %p243, %p244
      %p246 = scmp.ne.s32.totalorder %s234, %s235
      %p247 = scmp.eq.s32.totalorder %s31, 2
      %p248 = por %p246, %p247
      %p250 = scmp.ne.s32.totalorder %s235, %s249
      %p251 = scmp.eq.s32.totalorder %s31, 0
      %p252 = por %p250, %p251
      %s254 = sadd.s32 %s253, 1
      %p257 = scmp.eq.s32.totalorder %s25, 2
      %p258 = scmp.ne.s32.totalorder %s253, %s255
      %p259 = scmp.eq.s32.totalorder %s25, 0
      %p260 = por %p258, %p259
      %p261 = scmp.ne.s32.totalorder %s253, %s255
      %p262 = scmp.eq.s32.totalorder %s30, 2
      %p263 = por %p261, %p262
      %p264 = scmp.ne.s32.totalorder %s255, %s256
      %p265 = scmp.eq.s32.totalorder %s30, 0
      %p266 = por %p264, %p265
      %p267 = scmp.ne.s32.totalorder %s255, %s256
      %p268 = scmp.eq.s32.totalorder %s31, 2
      %p269 = por %p267, %p268
      %p271 = scmp.ne.s32.totalorder %s256, %s270
      %p272 = scmp.eq.s32.totalorder %s31, 0
      %p273 = por %p271, %p272
      %s275 = sadd.s32 %s274, 1
      %p278 = scmp.eq.s32.totalorder %s25, 2
      %p279 = scmp.ne.s32.totalorder %s274, %s276
      %p280 = scmp.eq.s32.totalorder %s25, 0
      %p281 = por %p279, %p280
      %p282 = scmp.ne.s32.totalorder %s274, %s276
      %p283 = scmp.eq.s32.totalorder %s30, 2
      %p284 = por %p282, %p283
      %p285 = scmp.ne.s32.totalorder %s276, %s277
      %p286 = scmp.eq.s32.totalorder %s30, 0
      %p287 = por %p285, %p286
      %p288 = scmp.ne.s32.totalorder %s276, %s277
      %p289 = scmp.eq.s32.totalorder %s31, 2
      %p290 = por %p288, %p289
      %p292 = scmp.ne.s32.totalorder %s277, %s291
      %p293 = scmp.eq.s32.totalorder %s31, 0
      %p294 = por %p292, %p293
      %p295 = scmp.le.s32.totalorder 1, %s25
      %p296 = scmp.lt.s32.totalorder %s25, 4
      %p297 = pnand %p295, %p296
      %p298 = pneg %p297
      // Predicated region
      $region9: #{markdown_two_stage_forward.1} parent=5 // pred_check
        _
      $region10: #{markdown_two_stage_forward.1} parent=5 // pred_check_branch
        %300 = sbr.rel (%p297) target = $region12
      $region11: #{markdown_two_stage_forward.1} parent=5 // pred_region
        %s301 = ssub.s32 %s25, 1
        // Predicated region
        $region13: #{markdown_two_stage_forward.1} parent=11 // pred_check
          %p302 = pneg %p46
        $region14: #{markdown_two_stage_forward.1} parent=11 // pred_check_branch
          %304 = sbr.rel (%p302) target = $region16
        $region15: #{markdown_two_stage_forward.1} parent=11 // pred_region
          _
        $region16: #{markdown_two_stage_forward.1} parent=11 // pred_fallthru
          _
        // Predicated region
        $region17: #{markdown_two_stage_forward.1} parent=11 // pred_check
          %p305 = pneg %p67
        $region18: #{markdown_two_stage_forward.1} parent=11 // pred_check_branch
          %307 = sbr.rel (%p305) target = $region20
        $region19: #{markdown_two_stage_forward.1} parent=11 // pred_region
          _
        $region20: #{markdown_two_stage_forward.1} parent=11 // pred_fallthru
          _
        // Predicated region
        $region21: #{markdown_two_stage_forward.1} parent=11 // pred_check
          %p308 = pneg %p88
        $region22: #{markdown_two_stage_forward.1} parent=11 // pred_check_branch
          %310 = sbr.rel (%p308) target = $region24
        $region23: #{markdown_two_stage_forward.1} parent=11 // pred_region
          _
        $region24: #{markdown_two_stage_forward.1} parent=11 // pred_fallthru
          _
        // Predicated region
        $region25: #{markdown_two_stage_forward.1} parent=11 // pred_check
          %p311 = pneg %p109
        $region26: #{markdown_two_stage_forward.1} parent=11 // pred_check_branch
          %313 = sbr.rel (%p311) target = $region28
        $region27: #{markdown_two_stage_forward.1} parent=11 // pred_region
          _
        $region28: #{markdown_two_stage_forward.1} parent=11 // pred_fallthru
          _
        // Predicated region
        $region29: #{markdown_two_stage_forward.1} parent=11 // pred_check
          %p314 = pneg %p182
        $region30: #{markdown_two_stage_forward.1} parent=11 // pred_check_branch
          %316 = sbr.rel (%p314) target = $region32
        $region31: #{markdown_two_stage_forward.1} parent=11 // pred_region
          %s318 = ssub.s32 18432, 18432
          %319 = vsyncadd [#allocation7], %s318
          %s320 = sshll.u32 [#allocation8], 4
          %s321 = int_to_ptr.vmem [resolvable:$true] %s320
          %326 = dma.hbm_to_vmem [thread:$0]  %s6, 18432, %s321, [#allocation7], 768, 768, 48
        $region32: #{markdown_two_stage_forward.1} parent=11 // pred_fallthru
          _
        // Predicated region
        $region33: #{markdown_two_stage_forward.1} parent=11 // pred_check
          %p327 = pneg %p203
        $region34: #{markdown_two_stage_forward.1} parent=11 // pred_check_branch
          %329 = sbr.rel (%p327) target = $region36
        $region35: #{markdown_two_stage_forward.1} parent=11 // pred_region
          %s331 = ssub.s32 96, 96
          %332 = vsyncadd [#allocation10], %s331
          %s334 = sshll.u32 [#allocation9], 4
          %s335 = int_to_ptr.vmem [resolvable:$true] %s334
          %337 = dma.hbm_to_vmem [thread:$0]  %s7, 96, %s335, [#allocation10]
        $region36: #{markdown_two_stage_forward.1} parent=11 // pred_fallthru
          _
        // Predicated region
        $region37: #{markdown_two_stage_forward.1} parent=11 // pred_check
          %p338 = pneg %p224
        $region38: #{markdown_two_stage_forward.1} parent=11 // pred_check_branch
          %340 = sbr.rel (%p338) target = $region40
        $region39: #{markdown_two_stage_forward.1} parent=11 // pred_region
          %s342 = ssub.s32 192, 192
          %343 = vsyncadd [#allocation10], %s342
          %s345 = sshll.u32 [#allocation11], 4
          %s346 = int_to_ptr.vmem [resolvable:$true] %s345
          %348 = dma.hbm_to_vmem [thread:$0]  %s8, 192, %s346, [#allocation10]
        $region40: #{markdown_two_stage_forward.1} parent=11 // pred_fallthru
          _
        // Predicated region
        $region41: #{markdown_two_stage_forward.1} parent=11 // pred_check
          %p349 = pneg %p245
        $region42: #{markdown_two_stage_forward.1} parent=11 // pred_check_branch
          %351 = sbr.rel (%p349) target = $region44
        $region43: #{markdown_two_stage_forward.1} parent=11 // pred_region
          _
        $region44: #{markdown_two_stage_forward.1} parent=11 // pred_fallthru
          _
        // Predicated region
        $region45: #{markdown_two_stage_forward.1} parent=11 // pred_check
          %p352 = pneg %p266
        $region46: #{markdown_two_stage_forward.1} parent=11 // pred_check_branch
          %354 = sbr.rel (%p352) target = $region48
        $region47: #{markdown_two_stage_forward.1} parent=11 // pred_region
          %s356 = ssub.s32 64, 64
          %357 = vsyncadd [#allocation13], %s356
          %s359 = sshll.u32 [#allocation12], 4
          %s360 = int_to_ptr.vmem [resolvable:$true] %s359
          %362 = dma.hbm_to_vmem [thread:$0]  %s10, 64, %s360, [#allocation13]
        $region48: #{markdown_two_stage_forward.1} parent=11 // pred_fallthru
          _
      $region12: #{markdown_two_stage_forward.1} parent=5 // pred_fallthru
        _
      %p363 = scmp.lt.s32.totalorder %s25, 3
      // Predicated region
      $region49: #{markdown_two_stage_forward.1} parent=5 // pred_check
        %p364 = pneg %p363
      $region50: #{markdown_two_stage_forward.1} parent=5 // pred_check_branch
        %366 = sbr.rel (%p364) target = $region52
      $region51: #{markdown_two_stage_forward.1} parent=5 // pred_region
        // Predicated region
        $region53: #{markdown_two_stage_forward.1} parent=51 // pred_check
          %p367 = pneg %p129
        $region54: #{markdown_two_stage_forward.1} parent=51 // pred_check_branch
          %369 = sbr.rel (%p367) target = $region56
        $region55: #{markdown_two_stage_forward.1} parent=51 // pred_region
          %s370 = sand.u32 %s119, 1
          %s371 = scalar_lea.sflag [#allocation5], %s370
          %s372 = sand.u32 %s119, 1
          %s373 = smul.addr %s372, 1152
          %s374 = scalar_lea.vmem [#allocation4], %s373
          %s375 = smul.u32 6, %s25
          %s377 = ssub.s32 18432, 18432
          %378 = vsyncadd %s371, %s377
          %s379 = smul.addr %s375, 128
          %s380 = scalar_lea.hbm %s4, %s379
          %s381 = sshll.u32 %s374, 4
          %s382 = int_to_ptr.vmem [resolvable:$true] %s381
          %387 = dma.hbm_to_vmem [thread:$0]  %s380, 18432, %s382, %s371, 2304, 768, 48
        $region56: #{markdown_two_stage_forward.1} parent=51 // pred_fallthru
          _
        // Predicated region
        $region57: #{markdown_two_stage_forward.1} parent=51 // pred_check
          %p388 = pneg %p155
        $region58: #{markdown_two_stage_forward.1} parent=51 // pred_check_branch
          %390 = sbr.rel (%p388) target = $region60
        $region59: #{markdown_two_stage_forward.1} parent=51 // pred_region
          %s391 = sand.u32 %s25, 1
          %s392 = scalar_lea.sflag [#allocation7], %s391
          %s393 = sand.u32 %s145, 1
          %s394 = smul.addr %s393, 6
          %s395 = scalar_lea.vmem [#allocation6], %s394
          %s396 = smul.u32 6, %s25
          %s398 = ssub.s32 96, 96
          %399 = vsyncadd %s392, %s398
          %s400 = smul.addr %s396, 16
          %s401 = scalar_lea.hbm %s5, %s400
          %s403 = sshll.u32 %s395, 4
          %s404 = int_to_ptr.vmem [resolvable:$true] %s403
          %406 = dma.hbm_to_vmem [thread:$0]  %s401, 96, %s404, %s392
        $region60: #{markdown_two_stage_forward.1} parent=51 // pred_fallthru
          _
      $region52: #{markdown_two_stage_forward.1} parent=5 // pred_fallthru
        _
      %p407 = scmp.le.s32.totalorder 1, %s25
      %p408 = scmp.lt.s32.totalorder %s25, 4
      %p409 = pnand %p407, %p408
      %p410 = pneg %p409
      // Predicated region
      $region61: #{markdown_two_stage_forward.1} parent=5 // pred_check
        _
      $region62: #{markdown_two_stage_forward.1} parent=5 // pred_check_branch
        %412 = sbr.rel (%p409) target = $region64
      $region63: #{markdown_two_stage_forward.1} parent=5 // pred_region
        %s413 = ssub.s32 %s25, 1
        %s414 = sand.u32 %s122, 1
        %s415 = scalar_lea.sflag [#allocation5], %s414
        %s416 = sand.u32 %s122, 1
        %s417 = smul.addr %s416, 1152
        %s418 = scalar_lea.vmem [#allocation4], %s417
        // Predicated region
        $region65: #{markdown_two_stage_forward.1} parent=63 // pred_check
          %p419 = pneg %p135
        $region66: #{markdown_two_stage_forward.1} parent=63 // pred_check_branch
          %421 = sbr.rel (%p419) target = $region68
        $region67: #{markdown_two_stage_forward.1} parent=63 // pred_region
          %422 = dma.done %s415, 18432
        $region68: #{markdown_two_stage_forward.1} parent=63 // pred_fallthru
          _
        %s423 = sand.u32 %s30, 1
        %s424 = scalar_lea.sflag [#allocation7], %s423
        %s425 = sand.u32 %s148, 1
        %s426 = smul.addr %s425, 6
        %s427 = scalar_lea.vmem [#allocation6], %s426
        // Predicated region
        $region69: #{markdown_two_stage_forward.1} parent=63 // pred_check
          %p428 = pneg %p161
        $region70: #{markdown_two_stage_forward.1} parent=63 // pred_check_branch
          %430 = sbr.rel (%p428) target = $region72
        $region71: #{markdown_two_stage_forward.1} parent=63 // pred_region
          %431 = dma.done %s424, 96
        $region72: #{markdown_two_stage_forward.1} parent=63 // pred_fallthru
          _
        // Predicated region
        $region73: #{markdown_two_stage_forward.1} parent=63 // pred_check
          %p432 = pneg %p182
        $region74: #{markdown_two_stage_forward.1} parent=63 // pred_check_branch
          %434 = sbr.rel (%p432) target = $region76
        $region75: #{markdown_two_stage_forward.1} parent=63 // pred_region
          %435 = dma.done [#allocation7], 18432
        $region76: #{markdown_two_stage_forward.1} parent=63 // pred_fallthru
          _
        // Predicated region
        $region77: #{markdown_two_stage_forward.1} parent=63 // pred_check
          %p436 = pneg %p203
        $region78: #{markdown_two_stage_forward.1} parent=63 // pred_check_branch
          %438 = sbr.rel (%p436) target = $region80
        $region79: #{markdown_two_stage_forward.1} parent=63 // pred_region
          %439 = dma.done [#allocation10], 96
        $region80: #{markdown_two_stage_forward.1} parent=63 // pred_fallthru
          _
        // Predicated region
        $region81: #{markdown_two_stage_forward.1} parent=63 // pred_check
          %p440 = pneg %p224
        $region82: #{markdown_two_stage_forward.1} parent=63 // pred_check_branch
          %442 = sbr.rel (%p440) target = $region84
        $region83: #{markdown_two_stage_forward.1} parent=63 // pred_region
          %443 = dma.done [#allocation10], 192
        $region84: #{markdown_two_stage_forward.1} parent=63 // pred_fallthru
          _
        // Predicated region
        $region85: #{markdown_two_stage_forward.1} parent=63 // pred_check
          %p444 = pneg %p266
        $region86: #{markdown_two_stage_forward.1} parent=63 // pred_check_branch
          %446 = sbr.rel (%p444) target = $region88
        $region87: #{markdown_two_stage_forward.1} parent=63 // pred_region
          %447 = dma.done [#allocation13], 64
        $region88: #{markdown_two_stage_forward.1} parent=63 // pred_fallthru
          _
        %p448 = pneg %p46
        %p449 = pneg %p43
        %p450 = pneg %p67
        %p451 = pneg %p64
        %p452 = pneg %p88
        %p453 = pneg %p85
        %p454 = pneg %p109
        %p455 = pneg %p106
        %s456 = sand.u32 %s122, 1
        %s457 = scalar_lea.sflag [#allocation5], %s456
        %s458 = sand.u32 %s122, 1
        %s459 = smul.addr %s458, 1152
        %s460 = scalar_lea.vmem [#allocation4], %s459
        %p461 = pneg %p135
        %p462 = pneg %p132
        %s463 = sand.u32 %s30, 1
        %s464 = scalar_lea.sflag [#allocation7], %s463
        %s465 = sand.u32 %s148, 1
        %s466 = smul.addr %s465, 6
        %s467 = scalar_lea.vmem [#allocation6], %s466
        %p468 = pneg %p161
        %p469 = pneg %p158
        %p470 = pneg %p182
        %p471 = pneg %p179
        %p472 = pneg %p203
        %p473 = pneg %p200
        %p474 = pneg %p224
        %p475 = pneg %p221
        %p476 = pneg %p245
        %p477 = pneg %p242
        %p478 = pneg %p266
        %p479 = pneg %p263
        %p480 = pneg %p287
        %p481 = pneg %p284
        %s482 = smul.u32 6, %s30
        %s483 = smul.u32 6, %s30
        %v485 = vld [vmem:[%s418] sm:$0xff]
        %v486 = vld [vmem:[%s418 + $0x8] sm:$0xff]
        %v487 = vld [vmem:[%s418 + $0x10] sm:$0xff]
        %v488 = vld [vmem:[%s418 + $0x18] sm:$0xff]
        %v489 = vld [vmem:[%s418 + $0x20] sm:$0xff]
        %v490 = vld [vmem:[%s418 + $0x28] sm:$0xff]
        %v491 = vld [vmem:[%s418 + $0x30] sm:$0xff]
        %v492 = vld [vmem:[%s418 + $0x38] sm:$0xff]
        %v493 = vld [vmem:[%s418 + $0x40] sm:$0xff]
        %v494 = vld [vmem:[%s418 + $0x48] sm:$0xff]
        %v495 = vld [vmem:[%s418 + $0x50] sm:$0xff]
        %v496 = vld [vmem:[%s418 + $0x58] sm:$0xff]
        %v497 = vld [vmem:[%s418 + $0x60] sm:$0xff]
        %v498 = vld [vmem:[%s418 + $0x68] sm:$0xff]
        %v499 = vld [vmem:[%s418 + $0x70] sm:$0xff]
        %v500 = vld [vmem:[%s418 + $0x78] sm:$0xff]
        %v501 = vld [vmem:[%s418 + $0x80] sm:$0xff]
        %v502 = vld [vmem:[%s418 + $0x88] sm:$0xff]
        %v503 = vld [vmem:[%s418 + $0x90] sm:$0xff]
        %v504 = vld [vmem:[%s418 + $0x98] sm:$0xff]
        %v505 = vld [vmem:[%s418 + $0xa0] sm:$0xff]
        %v506 = vld [vmem:[%s418 + $0xa8] sm:$0xff]
        %v507 = vld [vmem:[%s418 + $0xb0] sm:$0xff]
        %v508 = vld [vmem:[%s418 + $0xb8] sm:$0xff]
        %v509 = vld [vmem:[%s418 + $0xc0] sm:$0xff]
        %v510 = vld [vmem:[%s418 + $0xc8] sm:$0xff]
        %v511 = vld [vmem:[%s418 + $0xd0] sm:$0xff]
        %v512 = vld [vmem:[%s418 + $0xd8] sm:$0xff]
        %v513 = vld [vmem:[%s418 + $0xe0] sm:$0xff]
        %v514 = vld [vmem:[%s418 + $0xe8] sm:$0xff]
        %v515 = vld [vmem:[%s418 + $0xf0] sm:$0xff]
        %v516 = vld [vmem:[%s418 + $0xf8] sm:$0xff]
        %v517 = vld [vmem:[%s418 + $0x100] sm:$0xff]
        %v518 = vld [vmem:[%s418 + $0x108] sm:$0xff]
        %v519 = vld [vmem:[%s418 + $0x110] sm:$0xff]
        %v520 = vld [vmem:[%s418 + $0x118] sm:$0xff]
        %v521 = vld [vmem:[%s418 + $0x120] sm:$0xff]
        %v522 = vld [vmem:[%s418 + $0x128] sm:$0xff]
        %v523 = vld [vmem:[%s418 + $0x130] sm:$0xff]
        %v524 = vld [vmem:[%s418 + $0x138] sm:$0xff]
        %v525 = vld [vmem:[%s418 + $0x140] sm:$0xff]
        %v526 = vld [vmem:[%s418 + $0x148] sm:$0xff]
        %v527 = vld [vmem:[%s418 + $0x150] sm:$0xff]
        %v528 = vld [vmem:[%s418 + $0x158] sm:$0xff]
        %v529 = vld [vmem:[%s418 + $0x160] sm:$0xff]
        %v530 = vld [vmem:[%s418 + $0x168] sm:$0xff]
        %v531 = vld [vmem:[%s418 + $0x170] sm:$0xff]
        %v532 = vld [vmem:[%s418 + $0x178] sm:$0xff]
        %v533 = vld [vmem:[%s418 + $0x180] sm:$0xff]
        %v534 = vld [vmem:[%s418 + $0x188] sm:$0xff]
        %v535 = vld [vmem:[%s418 + $0x190] sm:$0xff]
        %v536 = vld [vmem:[%s418 + $0x198] sm:$0xff]
        %v537 = vld [vmem:[%s418 + $0x1a0] sm:$0xff]
        %v538 = vld [vmem:[%s418 + $0x1a8] sm:$0xff]
        %v539 = vld [vmem:[%s418 + $0x1b0] sm:$0xff]
        %v540 = vld [vmem:[%s418 + $0x1b8] sm:$0xff]
        %v541 = vld [vmem:[%s418 + $0x1c0] sm:$0xff]
        %v542 = vld [vmem:[%s418 + $0x1c8] sm:$0xff]
        %v543 = vld [vmem:[%s418 + $0x1d0] sm:$0xff]
        %v544 = vld [vmem:[%s418 + $0x1d8] sm:$0xff]
        %v545 = vld [vmem:[%s418 + $0x1e0] sm:$0xff]
        %v546 = vld [vmem:[%s418 + $0x1e8] sm:$0xff]
        %v547 = vld [vmem:[%s418 + $0x1f0] sm:$0xff]
        %v548 = vld [vmem:[%s418 + $0x1f8] sm:$0xff]
        %v549 = vld [vmem:[%s418 + $0x200] sm:$0xff]
        %v550 = vld [vmem:[%s418 + $0x208] sm:$0xff]
        %v551 = vld [vmem:[%s418 + $0x210] sm:$0xff]
        %v552 = vld [vmem:[%s418 + $0x218] sm:$0xff]
        %v553 = vld [vmem:[%s418 + $0x220] sm:$0xff]
        %v554 = vld [vmem:[%s418 + $0x228] sm:$0xff]
        %v555 = vld [vmem:[%s418 + $0x230] sm:$0xff]
        %v556 = vld [vmem:[%s418 + $0x238] sm:$0xff]
        %v557 = vld [vmem:[%s418 + $0x240] sm:$0xff]
        %v558 = vld [vmem:[%s418 + $0x248] sm:$0xff]
        %v559 = vld [vmem:[%s418 + $0x250] sm:$0xff]
        %v560 = vld [vmem:[%s418 + $0x258] sm:$0xff]
        %v561 = vld [vmem:[%s418 + $0x260] sm:$0xff]
        %v562 = vld [vmem:[%s418 + $0x268] sm:$0xff]
        %v563 = vld [vmem:[%s418 + $0x270] sm:$0xff]
        %v564 = vld [vmem:[%s418 + $0x278] sm:$0xff]
        %v565 = vld [vmem:[%s418 + $0x280] sm:$0xff]
        %v566 = vld [vmem:[%s418 + $0x288] sm:$0xff]
        %v567 = vld [vmem:[%s418 + $0x290] sm:$0xff]
        %v568 = vld [vmem:[%s418 + $0x298] sm:$0xff]
        %v569 = vld [vmem:[%s418 + $0x2a0] sm:$0xff]
        %v570 = vld [vmem:[%s418 + $0x2a8] sm:$0xff]
        %v571 = vld [vmem:[%s418 + $0x2b0] sm:$0xff]
        %v572 = vld [vmem:[%s418 + $0x2b8] sm:$0xff]
        %v573 = vld [vmem:[%s418 + $0x2c0] sm:$0xff]
        %v574 = vld [vmem:[%s418 + $0x2c8] sm:$0xff]
        %v575 = vld [vmem:[%s418 + $0x2d0] sm:$0xff]
        %v576 = vld [vmem:[%s418 + $0x2d8] sm:$0xff]
        %v577 = vld [vmem:[%s418 + $0x2e0] sm:$0xff]
        %v578 = vld [vmem:[%s418 + $0x2e8] sm:$0xff]
        %v579 = vld [vmem:[%s418 + $0x2f0] sm:$0xff]
        %v580 = vld [vmem:[%s418 + $0x2f8] sm:$0xff]
        %v581 = vld [vmem:[%s418 + $0x300] sm:$0xff]
        %v582 = vld [vmem:[%s418 + $0x308] sm:$0xff]
        %v583 = vld [vmem:[%s418 + $0x310] sm:$0xff]
        %v584 = vld [vmem:[%s418 + $0x318] sm:$0xff]
        %v585 = vld [vmem:[%s418 + $0x320] sm:$0xff]
        %v586 = vld [vmem:[%s418 + $0x328] sm:$0xff]
        %v587 = vld [vmem:[%s418 + $0x330] sm:$0xff]
        %v588 = vld [vmem:[%s418 + $0x338] sm:$0xff]
        %v589 = vld [vmem:[%s418 + $0x340] sm:$0xff]
        %v590 = vld [vmem:[%s418 + $0x348] sm:$0xff]
        %v591 = vld [vmem:[%s418 + $0x350] sm:$0xff]
        %v592 = vld [vmem:[%s418 + $0x358] sm:$0xff]
        %v593 = vld [vmem:[%s418 + $0x360] sm:$0xff]
        %v594 = vld [vmem:[%s418 + $0x368] sm:$0xff]
        %v595 = vld [vmem:[%s418 + $0x370] sm:$0xff]
        %v596 = vld [vmem:[%s418 + $0x378] sm:$0xff]
        %v597 = vld [vmem:[%s418 + $0x380] sm:$0xff]
        %v598 = vld [vmem:[%s418 + $0x388] sm:$0xff]
        %v599 = vld [vmem:[%s418 + $0x390] sm:$0xff]
        %v600 = vld [vmem:[%s418 + $0x398] sm:$0xff]
        %v601 = vld [vmem:[%s418 + $0x3a0] sm:$0xff]
        %v602 = vld [vmem:[%s418 + $0x3a8] sm:$0xff]
        %v603 = vld [vmem:[%s418 + $0x3b0] sm:$0xff]
        %v604 = vld [vmem:[%s418 + $0x3b8] sm:$0xff]
        %v605 = vld [vmem:[%s418 + $0x3c0] sm:$0xff]
        %v606 = vld [vmem:[%s418 + $0x3c8] sm:$0xff]
        %v607 = vld [vmem:[%s418 + $0x3d0] sm:$0xff]
        %v608 = vld [vmem:[%s418 + $0x3d8] sm:$0xff]
        %v609 = vld [vmem:[%s418 + $0x3e0] sm:$0xff]
        %v610 = vld [vmem:[%s418 + $0x3e8] sm:$0xff]
        %v611 = vld [vmem:[%s418 + $0x3f0] sm:$0xff]
        %v612 = vld [vmem:[%s418 + $0x3f8] sm:$0xff]
        %v613 = vld [vmem:[%s418 + $0x400] sm:$0xff]
        %v614 = vld [vmem:[%s418 + $0x408] sm:$0xff]
        %v615 = vld [vmem:[%s418 + $0x410] sm:$0xff]
        %v616 = vld [vmem:[%s418 + $0x418] sm:$0xff]
        %v617 = vld [vmem:[%s418 + $0x420] sm:$0xff]
        %v618 = vld [vmem:[%s418 + $0x428] sm:$0xff]
        %v619 = vld [vmem:[%s418 + $0x430] sm:$0xff]
        %v620 = vld [vmem:[%s418 + $0x438] sm:$0xff]
        %v621 = vld [vmem:[%s418 + $0x440] sm:$0xff]
        %v622 = vld [vmem:[%s418 + $0x448] sm:$0xff]
        %v623 = vld [vmem:[%s418 + $0x450] sm:$0xff]
        %v624 = vld [vmem:[%s418 + $0x458] sm:$0xff]
        %v625 = vld [vmem:[%s418 + $0x460] sm:$0xff]
        %v626 = vld [vmem:[%s418 + $0x468] sm:$0xff]
        %v627 = vld [vmem:[%s418 + $0x470] sm:$0xff]
        %v628 = vld [vmem:[%s418 + $0x478] sm:$0xff]
        %v629 = vunpack.c.l.s8.bf16 %v485
        %v630 = vunpack.c.l.s8.bf16 %v486
        %v631 = vunpack.c.l.s8.bf16 %v487
        %v632 = vunpack.c.l.s8.bf16 %v488
        %v633 = vunpack.c.l.s8.bf16 %v489
        %v634 = vunpack.c.l.s8.bf16 %v490
        %v635 = vunpack.c.h.s8.bf16 %v485
        %v636 = vunpack.c.h.s8.bf16 %v486
        %v637 = vunpack.c.h.s8.bf16 %v487
        %v638 = vunpack.c.h.s8.bf16 %v488
        %v639 = vunpack.c.h.s8.bf16 %v489
        %v640 = vunpack.c.h.s8.bf16 %v490
        %v641 = vunpack.c.l.s8.bf16 %v491
        %v642 = vunpack.c.l.s8.bf16 %v492
        %v643 = vunpack.c.l.s8.bf16 %v493
        %v644 = vunpack.c.l.s8.bf16 %v494
        %v645 = vunpack.c.l.s8.bf16 %v495
        %v646 = vunpack.c.l.s8.bf16 %v496
        %v647 = vunpack.c.h.s8.bf16 %v491
        %v648 = vunpack.c.h.s8.bf16 %v492
        %v649 = vunpack.c.h.s8.bf16 %v493
        %v650 = vunpack.c.h.s8.bf16 %v494
        %v651 = vunpack.c.h.s8.bf16 %v495
        %v652 = vunpack.c.h.s8.bf16 %v496
        %v653 = vunpack.c.l.s8.bf16 %v497
        %v654 = vunpack.c.l.s8.bf16 %v498
        %v655 = vunpack.c.l.s8.bf16 %v499
        %v656 = vunpack.c.l.s8.bf16 %v500
        %v657 = vunpack.c.l.s8.bf16 %v501
        %v658 = vunpack.c.l.s8.bf16 %v502
        %v659 = vunpack.c.h.s8.bf16 %v497
        %v660 = vunpack.c.h.s8.bf16 %v498
        %v661 = vunpack.c.h.s8.bf16 %v499
        %v662 = vunpack.c.h.s8.bf16 %v500
        %v663 = vunpack.c.h.s8.bf16 %v501
        %v664 = vunpack.c.h.s8.bf16 %v502
        %v665 = vunpack.c.l.s8.bf16 %v503
        %v666 = vunpack.c.l.s8.bf16 %v504
        %v667 = vunpack.c.l.s8.bf16 %v505
        %v668 = vunpack.c.l.s8.bf16 %v506
        %v669 = vunpack.c.l.s8.bf16 %v507
        %v670 = vunpack.c.l.s8.bf16 %v508
        %v671 = vunpack.c.h.s8.bf16 %v503
        %v672 = vunpack.c.h.s8.bf16 %v504
        %v673 = vunpack.c.h.s8.bf16 %v505
        %v674 = vunpack.c.h.s8.bf16 %v506
        %v675 = vunpack.c.h.s8.bf16 %v507
        %v676 = vunpack.c.h.s8.bf16 %v508
        %v677 = vunpack.c.l.s8.bf16 %v509
        %v678 = vunpack.c.l.s8.bf16 %v510
        %v679 = vunpack.c.l.s8.bf16 %v511
        %v680 = vunpack.c.l.s8.bf16 %v512
        %v681 = vunpack.c.l.s8.bf16 %v513
        %v682 = vunpack.c.l.s8.bf16 %v514
        %v683 = vunpack.c.h.s8.bf16 %v509
        %v684 = vunpack.c.h.s8.bf16 %v510
        %v685 = vunpack.c.h.s8.bf16 %v511
        %v686 = vunpack.c.h.s8.bf16 %v512
        %v687 = vunpack.c.h.s8.bf16 %v513
        %v688 = vunpack.c.h.s8.bf16 %v514
        %v689 = vunpack.c.l.s8.bf16 %v515
        %v690 = vunpack.c.l.s8.bf16 %v516
        %v691 = vunpack.c.l.s8.bf16 %v517
        %v692 = vunpack.c.l.s8.bf16 %v518
        %v693 = vunpack.c.l.s8.bf16 %v519
        %v694 = vunpack.c.l.s8.bf16 %v520
        %v695 = vunpack.c.h.s8.bf16 %v515
        %v696 = vunpack.c.h.s8.bf16 %v516
        %v697 = vunpack.c.h.s8.bf16 %v517
        %v698 = vunpack.c.h.s8.bf16 %v518
        %v699 = vunpack.c.h.s8.bf16 %v519
        %v700 = vunpack.c.h.s8.bf16 %v520
        %v701 = vunpack.c.l.s8.bf16 %v521
        %v702 = vunpack.c.l.s8.bf16 %v522
        %v703 = vunpack.c.l.s8.bf16 %v523
        %v704 = vunpack.c.l.s8.bf16 %v524
        %v705 = vunpack.c.l.s8.bf16 %v525
        %v706 = vunpack.c.l.s8.bf16 %v526
        %v707 = vunpack.c.h.s8.bf16 %v521
        %v708 = vunpack.c.h.s8.bf16 %v522
        %v709 = vunpack.c.h.s8.bf16 %v523
        %v710 = vunpack.c.h.s8.bf16 %v524
        %v711 = vunpack.c.h.s8.bf16 %v525
        %v712 = vunpack.c.h.s8.bf16 %v526
        %v713 = vunpack.c.l.s8.bf16 %v527
        %v714 = vunpack.c.l.s8.bf16 %v528
        %v715 = vunpack.c.l.s8.bf16 %v529
        %v716 = vunpack.c.l.s8.bf16 %v530
        %v717 = vunpack.c.l.s8.bf16 %v531
        %v718 = vunpack.c.l.s8.bf16 %v532
        %v719 = vunpack.c.h.s8.bf16 %v527
        %v720 = vunpack.c.h.s8.bf16 %v528
        %v721 = vunpack.c.h.s8.bf16 %v529
        %v722 = vunpack.c.h.s8.bf16 %v530
        %v723 = vunpack.c.h.s8.bf16 %v531
        %v724 = vunpack.c.h.s8.bf16 %v532
        %v725 = vunpack.c.l.s8.bf16 %v533
        %v726 = vunpack.c.l.s8.bf16 %v534
        %v727 = vunpack.c.l.s8.bf16 %v535
        %v728 = vunpack.c.l.s8.bf16 %v536
        %v729 = vunpack.c.l.s8.bf16 %v537
        %v730 = vunpack.c.l.s8.bf16 %v538
        %v731 = vunpack.c.h.s8.bf16 %v533
        %v732 = vunpack.c.h.s8.bf16 %v534
        %v733 = vunpack.c.h.s8.bf16 %v535
        %v734 = vunpack.c.h.s8.bf16 %v536
        %v735 = vunpack.c.h.s8.bf16 %v537
        %v736 = vunpack.c.h.s8.bf16 %v538
        %v737 = vunpack.c.l.s8.bf16 %v539
        %v738 = vunpack.c.l.s8.bf16 %v540
        %v739 = vunpack.c.l.s8.bf16 %v541
        %v740 = vunpack.c.l.s8.bf16 %v542
        %v741 = vunpack.c.l.s8.bf16 %v543
        %v742 = vunpack.c.l.s8.bf16 %v544
        %v743 = vunpack.c.h.s8.bf16 %v539
        %v744 = vunpack.c.h.s8.bf16 %v540
        %v745 = vunpack.c.h.s8.bf16 %v541
        %v746 = vunpack.c.h.s8.bf16 %v542
        %v747 = vunpack.c.h.s8.bf16 %v543
        %v748 = vunpack.c.h.s8.bf16 %v544
        %v749 = vunpack.c.l.s8.bf16 %v545
        %v750 = vunpack.c.l.s8.bf16 %v546
        %v751 = vunpack.c.l.s8.bf16 %v547
        %v752 = vunpack.c.l.s8.bf16 %v548
        %v753 = vunpack.c.l.s8.bf16 %v549
        %v754 = vunpack.c.l.s8.bf16 %v550
        %v755 = vunpack.c.h.s8.bf16 %v545
        %v756 = vunpack.c.h.s8.bf16 %v546
        %v757 = vunpack.c.h.s8.bf16 %v547
        %v758 = vunpack.c.h.s8.bf16 %v548
        %v759 = vunpack.c.h.s8.bf16 %v549
        %v760 = vunpack.c.h.s8.bf16 %v550
        %v761 = vunpack.c.l.s8.bf16 %v551
        %v762 = vunpack.c.l.s8.bf16 %v552
        %v763 = vunpack.c.l.s8.bf16 %v553
        %v764 = vunpack.c.l.s8.bf16 %v554
        %v765 = vunpack.c.l.s8.bf16 %v555
        %v766 = vunpack.c.l.s8.bf16 %v556
        %v767 = vunpack.c.h.s8.bf16 %v551
        %v768 = vunpack.c.h.s8.bf16 %v552
        %v769 = vunpack.c.h.s8.bf16 %v553
        %v770 = vunpack.c.h.s8.bf16 %v554
        %v771 = vunpack.c.h.s8.bf16 %v555
        %v772 = vunpack.c.h.s8.bf16 %v556
        %v773 = vunpack.c.l.s8.bf16 %v557
        %v774 = vunpack.c.l.s8.bf16 %v558
        %v775 = vunpack.c.l.s8.bf16 %v559
        %v776 = vunpack.c.l.s8.bf16 %v560
        %v777 = vunpack.c.l.s8.bf16 %v561
        %v778 = vunpack.c.l.s8.bf16 %v562
        %v779 = vunpack.c.h.s8.bf16 %v557
        %v780 = vunpack.c.h.s8.bf16 %v558
        %v781 = vunpack.c.h.s8.bf16 %v559
        %v782 = vunpack.c.h.s8.bf16 %v560
        %v783 = vunpack.c.h.s8.bf16 %v561
        %v784 = vunpack.c.h.s8.bf16 %v562
        %v785 = vunpack.c.l.s8.bf16 %v563
        %v786 = vunpack.c.l.s8.bf16 %v564
        %v787 = vunpack.c.l.s8.bf16 %v565
        %v788 = vunpack.c.l.s8.bf16 %v566
        %v789 = vunpack.c.l.s8.bf16 %v567
        %v790 = vunpack.c.l.s8.bf16 %v568
        %v791 = vunpack.c.h.s8.bf16 %v563
        %v792 = vunpack.c.h.s8.bf16 %v564
        %v793 = vunpack.c.h.s8.bf16 %v565
        %v794 = vunpack.c.h.s8.bf16 %v566
        %v795 = vunpack.c.h.s8.bf16 %v567
        %v796 = vunpack.c.h.s8.bf16 %v568
        %v797 = vunpack.c.l.s8.bf16 %v569
        %v798 = vunpack.c.l.s8.bf16 %v570
        %v799 = vunpack.c.l.s8.bf16 %v571
        %v800 = vunpack.c.l.s8.bf16 %v572
        %v801 = vunpack.c.l.s8.bf16 %v573
        %v802 = vunpack.c.l.s8.bf16 %v574
        %v803 = vunpack.c.h.s8.bf16 %v569
        %v804 = vunpack.c.h.s8.bf16 %v570
        %v805 = vunpack.c.h.s8.bf16 %v571
        %v806 = vunpack.c.h.s8.bf16 %v572
        %v807 = vunpack.c.h.s8.bf16 %v573
        %v808 = vunpack.c.h.s8.bf16 %v574
        %v809 = vunpack.c.l.s8.bf16 %v575
        %v810 = vunpack.c.l.s8.bf16 %v576
        %v811 = vunpack.c.l.s8.bf16 %v577
        %v812 = vunpack.c.l.s8.bf16 %v578
        %v813 = vunpack.c.l.s8.bf16 %v579
        %v814 = vunpack.c.l.s8.bf16 %v580
        %v815 = vunpack.c.h.s8.bf16 %v575
        %v816 = vunpack.c.h.s8.bf16 %v576
        %v817 = vunpack.c.h.s8.bf16 %v577
        %v818 = vunpack.c.h.s8.bf16 %v578
        %v819 = vunpack.c.h.s8.bf16 %v579
        %v820 = vunpack.c.h.s8.bf16 %v580
        %v821 = vunpack.c.l.s8.bf16 %v581
        %v822 = vunpack.c.l.s8.bf16 %v582
        %v823 = vunpack.c.l.s8.bf16 %v583
        %v824 = vunpack.c.l.s8.bf16 %v584
        %v825 = vunpack.c.l.s8.bf16 %v585
        %v826 = vunpack.c.l.s8.bf16 %v586
        %v827 = vunpack.c.h.s8.bf16 %v581
        %v828 = vunpack.c.h.s8.bf16 %v582
        %v829 = vunpack.c.h.s8.bf16 %v583
        %v830 = vunpack.c.h.s8.bf16 %v584
        %v831 = vunpack.c.h.s8.bf16 %v585
        %v832 = vunpack.c.h.s8.bf16 %v586
        %v833 = vunpack.c.l.s8.bf16 %v587
        %v834 = vunpack.c.l.s8.bf16 %v588
        %v835 = vunpack.c.l.s8.bf16 %v589
        %v836 = vunpack.c.l.s8.bf16 %v590
        %v837 = vunpack.c.l.s8.bf16 %v591
        %v838 = vunpack.c.l.s8.bf16 %v592
        %v839 = vunpack.c.h.s8.bf16 %v587
        %v840 = vunpack.c.h.s8.bf16 %v588
        %v841 = vunpack.c.h.s8.bf16 %v589
        %v842 = vunpack.c.h.s8.bf16 %v590
        %v843 = vunpack.c.h.s8.bf16 %v591
        %v844 = vunpack.c.h.s8.bf16 %v592
        %v845 = vunpack.c.l.s8.bf16 %v593
        %v846 = vunpack.c.l.s8.bf16 %v594
        %v847 = vunpack.c.l.s8.bf16 %v595
        %v848 = vunpack.c.l.s8.bf16 %v596
        %v849 = vunpack.c.l.s8.bf16 %v597
        %v850 = vunpack.c.l.s8.bf16 %v598
        %v851 = vunpack.c.h.s8.bf16 %v593
        %v852 = vunpack.c.h.s8.bf16 %v594
        %v853 = vunpack.c.h.s8.bf16 %v595
        %v854 = vunpack.c.h.s8.bf16 %v596
        %v855 = vunpack.c.h.s8.bf16 %v597
        %v856 = vunpack.c.h.s8.bf16 %v598
        %v857 = vunpack.c.l.s8.bf16 %v599
        %v858 = vunpack.c.l.s8.bf16 %v600
        %v859 = vunpack.c.l.s8.bf16 %v601
        %v860 = vunpack.c.l.s8.bf16 %v602
        %v861 = vunpack.c.l.s8.bf16 %v603
        %v862 = vunpack.c.l.s8.bf16 %v604
        %v863 = vunpack.c.h.s8.bf16 %v599
        %v864 = vunpack.c.h.s8.bf16 %v600
        %v865 = vunpack.c.h.s8.bf16 %v601
        %v866 = vunpack.c.h.s8.bf16 %v602
        %v867 = vunpack.c.h.s8.bf16 %v603
        %v868 = vunpack.c.h.s8.bf16 %v604
        %v869 = vunpack.c.l.s8.bf16 %v605
        %v870 = vunpack.c.l.s8.bf16 %v606
        %v871 = vunpack.c.l.s8.bf16 %v607
        %v872 = vunpack.c.l.s8.bf16 %v608
        %v873 = vunpack.c.l.s8.bf16 %v609
        %v874 = vunpack.c.l.s8.bf16 %v610
        %v875 = vunpack.c.h.s8.bf16 %v605
        %v876 = vunpack.c.h.s8.bf16 %v606
        %v877 = vunpack.c.h.s8.bf16 %v607
        %v878 = vunpack.c.h.s8.bf16 %v608
        %v879 = vunpack.c.h.s8.bf16 %v609
        %v880 = vunpack.c.h.s8.bf16 %v610
        %v881 = vunpack.c.l.s8.bf16 %v611
        %v882 = vunpack.c.l.s8.bf16 %v612
        %v883 = vunpack.c.l.s8.bf16 %v613
        %v884 = vunpack.c.l.s8.bf16 %v614
        %v885 = vunpack.c.l.s8.bf16 %v615
        %v886 = vunpack.c.l.s8.bf16 %v616
        %v887 = vunpack.c.h.s8.bf16 %v611
        %v888 = vunpack.c.h.s8.bf16 %v612
        %v889 = vunpack.c.h.s8.bf16 %v613
        %v890 = vunpack.c.h.s8.bf16 %v614
        %v891 = vunpack.c.h.s8.bf16 %v615
        %v892 = vunpack.c.h.s8.bf16 %v616
        %v893 = vunpack.c.l.s8.bf16 %v617
        %v894 = vunpack.c.l.s8.bf16 %v618
        %v895 = vunpack.c.l.s8.bf16 %v619
        %v896 = vunpack.c.l.s8.bf16 %v620
        %v897 = vunpack.c.l.s8.bf16 %v621
        %v898 = vunpack.c.l.s8.bf16 %v622
        %v899 = vunpack.c.h.s8.bf16 %v617
        %v900 = vunpack.c.h.s8.bf16 %v618
        %v901 = vunpack.c.h.s8.bf16 %v619
        %v902 = vunpack.c.h.s8.bf16 %v620
        %v903 = vunpack.c.h.s8.bf16 %v621
        %v904 = vunpack.c.h.s8.bf16 %v622
        %v905 = vunpack.c.l.s8.bf16 %v623
        %v906 = vunpack.c.l.s8.bf16 %v624
        %v907 = vunpack.c.l.s8.bf16 %v625
        %v908 = vunpack.c.l.s8.bf16 %v626
        %v909 = vunpack.c.l.s8.bf16 %v627
        %v910 = vunpack.c.l.s8.bf16 %v628
        %v911 = vunpack.c.h.s8.bf16 %v623
        %v912 = vunpack.c.h.s8.bf16 %v624
        %v913 = vunpack.c.h.s8.bf16 %v625
        %v914 = vunpack.c.h.s8.bf16 %v626
        %v915 = vunpack.c.h.s8.bf16 %v627
        %v916 = vunpack.c.h.s8.bf16 %v628
        %v917 = vld [vmem:[%s427] sm:$0x3f]
        %p918 = scmp.eq.s32.totalorder %s30, 0
        // Predicated region
        $region89: #{markdown_two_stage_forward.1} parent=63 // pred_check
          %p919 = pneg %p918
        $region90: #{markdown_two_stage_forward.1} parent=63 // pred_check_branch
          %921 = sbr.rel (%p919) target = $region92
        $region91: #{markdown_two_stage_forward.1} parent=63 // pred_region
          %v922 = vld [vmem:[%s1] sm:$0xff]
          %v923 = vld [vmem:[%s1 + $0x8] sm:$0xf]
          %v926 = vcombine.high %v922, %v922
          %v928 = vunpack.c.l.s4 1983009808
          %v929 = vunpack.c.0.s8 %v928
          %v930 = vlaneseq
          %v931 = vshrl.u32 %v930, 7
          %v932 = vsub.s32 %v929, %v931
          %v933 = vrot.slane %v922, %v932
          %v935 = vunpack.c.l.s4 1983009808
          %v936 = vunpack.c.0.s8 %v935
          %v937 = vlaneseq
          %v938 = vshrl.u32 %v937, 7
          %v939 = vsub.s32 %v936, %v938
          %v940 = vrot.slane %v926, %v939
          %v941 = vcombine.high %v933, %v933
          %v942 = vcombine.high %v940, %v940
          %v944 = vunpack.c.l.s4 1983009808
          %v945 = vunpack.c.0.s8 %v944
          %v946 = vlaneseq
          %v947 = vshrl.u32 %v946, 7
          %v948 = vsub.s32 %v945, %v947
          %v949 = vrot.slane %v923, %v948
          %v950 = vcombine.high %v949, %v949
          %v957 = vpack.c.bf16 %v933, %v933
          %v958 = vpack.c.bf16 %v941, %v941
          %v959 = vpack.c.bf16 %v940, %v940
          %v960 = vpack.c.bf16 %v942, %v942
          %v961 = vpack.c.bf16 %v949, %v949
          %v962 = vpack.c.bf16 %v950, %v950
          %963 = vmatprep.subr.bf16.mxu0 %v630
          %964 = vmatpush1.bf16.msra.mxu0 %v629
          %965 = vmatprep.subr.bf16.mxu0 %v636
          %966 = vmatpush1.bf16.msra.mxu0 %v635
          %967 = vmatprep.subr.bf16.mxu0 %v642
          %968 = vmatpush1.bf16.msra.mxu0 %v641
          %969 = vmatprep.subr.bf16.mxu0 %v648
          %970 = vmatpush1.bf16.msra.mxu0 %v647
          %971 = vmatprep.subr.bf16.mxu0 %v654
          %972 = vmatpush1.bf16.msra.mxu0 %v653
          %973 = vmatprep.subr.bf16.mxu0 %v660
          %974 = vmatpush1.bf16.msra.mxu0 %v659
          %975 = vmatprep.subr.bf16.mxu0 %v666
          %976 = vmatpush1.bf16.msra.mxu0 %v665
          %977 = vmatprep.subr.bf16.mxu0 %v672
          %978 = vmatpush1.bf16.msra.mxu0 %v671
          %979 = vmatprep.subr.bf16.mxu0 %v678
          %980 = vmatpush1.bf16.msra.mxu0 %v677
          %981 = vmatprep.subr.bf16.mxu0 %v684
          %982 = vmatpush1.bf16.msra.mxu0 %v683
          %983 = vmatprep.subr.bf16.mxu0 %v690
          %984 = vmatpush1.bf16.msra.mxu0 %v689
          %985 = vmatprep.subr.bf16.mxu0 %v696
          %986 = vmatpush1.bf16.msra.mxu0 %v695
          %987 = vmatprep.subr.bf16.mxu0 %v702
          %988 = vmatpush1.bf16.msra.mxu0 %v701
          %989 = vmatprep.subr.bf16.mxu0 %v708
          %990 = vmatpush1.bf16.msra.mxu0 %v707
          %991 = vmatprep.subr.bf16.mxu0 %v714
          %992 = vmatpush1.bf16.msra.mxu0 %v713
          %993 = vmatprep.subr.bf16.mxu0 %v720
          %994 = vmatpush1.bf16.msra.mxu0 %v719
          %995 = vmatprep.mubr.bf16.mxu0 %v958
          %996 = vmatmul.mubr.bf16.gmra.mrb[0].mxu0 %v957
          %v997 = vpop.f32.mrb[0].mxu0
          %v998 = vadd.f32 0.0, %v997
          %v999 = vpop.f32.mrb[0].mxu0
          %v1000 = vadd.f32 0.0, %v999
          %v1001 = vpop.f32.mrb[0].mxu0
          %v1002 = vpop.f32.mrb[0].mxu0
          %1003 = vdwg.mxu0
          %1004 = vmatprep.subr.bf16.mxu0 %v726
          %1005 = vmatpush1.bf16.msra.mxu0 %v725
          %1006 = vmatprep.subr.bf16.mxu0 %v732
          %1007 = vmatpush1.bf16.msra.mxu0 %v731
          %1008 = vmatprep.subr.bf16.mxu0 %v738
          %1009 = vmatpush1.bf16.msra.mxu0 %v737
          %1010 = vmatprep.subr.bf16.mxu0 %v744
          %1011 = vmatpush1.bf16.msra.mxu0 %v743
          %1012 = vmatprep.subr.bf16.mxu0 %v750
          %1013 = vmatpush1.bf16.msra.mxu0 %v749
          %1014 = vmatprep.subr.bf16.mxu0 %v756
          %1015 = vmatpush1.bf16.msra.mxu0 %v755
          %1016 = vmatprep.subr.bf16.mxu0 %v762
          %1017 = vmatpush1.bf16.msra.mxu0 %v761
          %1018 = vmatprep.subr.bf16.mxu0 %v768
          %1019 = vmatpush1.bf16.msra.mxu0 %v767
          %1020 = vmatprep.subr.bf16.mxu0 %v774
          %1021 = vmatpush1.bf16.msra.mxu0 %v773
          %1022 = vmatprep.subr.bf16.mxu0 %v780
          %1023 = vmatpush1.bf16.msra.mxu0 %v779
          %1024 = vmatprep.subr.bf16.mxu0 %v786
          %1025 = vmatpush1.bf16.msra.mxu0 %v785
          %1026 = vmatprep.subr.bf16.mxu0 %v792
          %1027 = vmatpush1.bf16.msra.mxu0 %v791
          %1028 = vmatprep.subr.bf16.mxu0 %v798
          %1029 = vmatpush1.bf16.msra.mxu0 %v797
          %1030 = vmatprep.subr.bf16.mxu0 %v804
          %1031 = vmatpush1.bf16.msra.mxu0 %v803
          %1032 = vmatprep.subr.bf16.mxu0 %v810
          %1033 = vmatpush1.bf16.msra.mxu0 %v809
          %1034 = vmatprep.subr.bf16.mxu0 %v816
          %1035 = vmatpush1.bf16.msra.mxu0 %v815
          %1036 = vmatprep.mubr.bf16.mxu0 %v960
          %1037 = vmatmul.mubr.bf16.gmra.mrb[0].mxu0 %v959
          %v1038 = vpop.f32.mrb[0].mxu0
          %v1039 = vadd.f32 %v998, %v1038
          %v1040 = vpop.f32.mrb[0].mxu0
          %v1041 = vadd.f32 %v1000, %v1040
          %v1042 = vpop.f32.mrb[0].mxu0
          %v1043 = vpop.f32.mrb[0].mxu0
          %1044 = vdwg.mxu0
          %1045 = vmatprep.subr.bf16.mxu0 %v822
          %1046 = vmatpush1.bf16.msra.mxu0 %v821
          %1047 = vmatprep.subr.bf16.mxu0 %v828
          %1048 = vmatpush1.bf16.msra.mxu0 %v827
          %1049 = vmatprep.subr.bf16.mxu0 %v834
          %1050 = vmatpush1.bf16.msra.mxu0 %v833
          %1051 = vmatprep.subr.bf16.mxu0 %v840
          %1052 = vmatpush1.bf16.msra.mxu0 %v839
          %1053 = vmatprep.subr.bf16.mxu0 %v846
          %1054 = vmatpush1.bf16.msra.mxu0 %v845
          %1055 = vmatprep.subr.bf16.mxu0 %v852
          %1056 = vmatpush1.bf16.msra.mxu0 %v851
          %1057 = vmatprep.subr.bf16.mxu0 %v858
          %1058 = vmatpush1.bf16.msra.mxu0 %v857
          %1059 = vmatprep.subr.bf16.mxu0 %v864
          %1060 = vmatpush1.bf16.msra.mxu0 %v863
          %1061 = vmatprep.subr.bf16.mxu0 %v870
          %1062 = vmatpush1.bf16.msra.mxu0 %v869
          %1063 = vmatprep.subr.bf16.mxu0 %v876
          %1064 = vmatpush1.bf16.msra.mxu0 %v875
          %1065 = vmatprep.subr.bf16.mxu0 %v882
          %1066 = vmatpush1.bf16.msra.mxu0 %v881
          %1067 = vmatprep.subr.bf16.mxu0 %v888
          %1068 = vmatpush1.bf16.msra.mxu0 %v887
          %1069 = vmatprep.subr.bf16.mxu0 %v894
          %1070 = vmatpush1.bf16.msra.mxu0 %v893
          %1071 = vmatprep.subr.bf16.mxu0 %v900
          %1072 = vmatpush1.bf16.msra.mxu0 %v899
          %1073 = vmatprep.subr.bf16.mxu0 %v906
          %1074 = vmatpush1.bf16.msra.mxu0 %v905
          %1075 = vmatprep.subr.bf16.mxu0 %v912
          %1076 = vmatpush1.bf16.msra.mxu0 %v911
          %1077 = vmatprep.mubr.bf16.mxu0 %v962
          %1078 = vmatmul.mubr.bf16.gmra.mrb[0].mxu0 %v961
          %v1079 = vpop.f32.mrb[0].mxu0
          %v1080 = vadd.f32 %v1039, %v1079
          %v1081 = vpop.f32.mrb[0].mxu0
          %v1082 = vadd.f32 %v1041, %v1081
          %v1083 = vpop.f32.mrb[0].mxu0
          %v1084 = vpop.f32.mrb[0].mxu0
          %1085 = vdwg.mxu0
          %1086 = vmatprep.subr.bf16.mxu0 %v632
          %1087 = vmatpush1.bf16.msra.mxu0 %v631
          %1088 = vmatprep.subr.bf16.mxu0 %v638
          %1089 = vmatpush1.bf16.msra.mxu0 %v637
          %1090 = vmatprep.subr.bf16.mxu0 %v644
          %1091 = vmatpush1.bf16.msra.mxu0 %v643
          %1092 = vmatprep.subr.bf16.mxu0 %v650
          %1093 = vmatpush1.bf16.msra.mxu0 %v649
          %1094 = vmatprep.subr.bf16.mxu0 %v656
          %1095 = vmatpush1.bf16.msra.mxu0 %v655
          %1096 = vmatprep.subr.bf16.mxu0 %v662
          %1097 = vmatpush1.bf16.msra.mxu0 %v661
          %1098 = vmatprep.subr.bf16.mxu0 %v668
          %1099 = vmatpush1.bf16.msra.mxu0 %v667
          %1100 = vmatprep.subr.bf16.mxu0 %v674
          %1101 = vmatpush1.bf16.msra.mxu0 %v673
          %1102 = vmatprep.subr.bf16.mxu0 %v680
          %1103 = vmatpush1.bf16.msra.mxu0 %v679
          %1104 = vmatprep.subr.bf16.mxu0 %v686
          %1105 = vmatpush1.bf16.msra.mxu0 %v685
          %1106 = vmatprep.subr.bf16.mxu0 %v692
          %1107 = vmatpush1.bf16.msra.mxu0 %v691
          %1108 = vmatprep.subr.bf16.mxu0 %v698
          %1109 = vmatpush1.bf16.msra.mxu0 %v697
          %1110 = vmatprep.subr.bf16.mxu0 %v704
          %1111 = vmatpush1.bf16.msra.mxu0 %v703
          %1112 = vmatprep.subr.bf16.mxu0 %v710
          %1113 = vmatpush1.bf16.msra.mxu0 %v709
          %1114 = vmatprep.subr.bf16.mxu0 %v716
          %1115 = vmatpush1.bf16.msra.mxu0 %v715
          %1116 = vmatprep.subr.bf16.mxu0 %v722
          %1117 = vmatpush1.bf16.msra.mxu0 %v721
          %1118 = vmatprep.mubr.bf16.mxu0 %v958
          %1119 = vmatmul.mubr.bf16.gmra.mrb[0].mxu0 %v957
          %v1120 = vpop.f32.mrb[0].mxu0
          %v1121 = vadd.f32 0.0, %v1120
          %v1122 = vpop.f32.mrb[0].mxu0
          %v1123 = vadd.f32 0.0, %v1122
          %v1124 = vpop.f32.mrb[0].mxu0
          %v1125 = vpop.f32.mrb[0].mxu0
          %1126 = vdwg.mxu0
          %1127 = vmatprep.subr.bf16.mxu0 %v728
          %1128 = vmatpush1.bf16.msra.mxu0 %v727
          %1129 = vmatprep.subr.bf16.mxu0 %v734
          %1130 = vmatpush1.bf16.msra.mxu0 %v733
          %1131 = vmatprep.subr.bf16.mxu0 %v740
          %1132 = vmatpush1.bf16.msra.mxu0 %v739
          %1133 = vmatprep.subr.bf16.mxu0 %v746
          %1134 = vmatpush1.bf16.msra.mxu0 %v745
          %1135 = vmatprep.subr.bf16.mxu0 %v752
          %1136 = vmatpush1.bf16.msra.mxu0 %v751
          %1137 = vmatprep.subr.bf16.mxu0 %v758
          %1138 = vmatpush1.bf16.msra.mxu0 %v757
          %1139 = vmatprep.subr.bf16.mxu0 %v764
          %1140 = vmatpush1.bf16.msra.mxu0 %v763
          %1141 = vmatprep.subr.bf16.mxu0 %v770
          %1142 = vmatpush1.bf16.msra.mxu0 %v769
          %1143 = vmatprep.subr.bf16.mxu0 %v776
          %1144 = vmatpush1.bf16.msra.mxu0 %v775
          %1145 = vmatprep.subr.bf16.mxu0 %v782
          %1146 = vmatpush1.bf16.msra.mxu0 %v781
          %1147 = vmatprep.subr.bf16.mxu0 %v788
          %1148 = vmatpush1.bf16.msra.mxu0 %v787
          %1149 = vmatprep.subr.bf16.mxu0 %v794
          %1150 = vmatpush1.bf16.msra.mxu0 %v793
          %1151 = vmatprep.subr.bf16.mxu0 %v800
          %1152 = vmatpush1.bf16.msra.mxu0 %v799
          %1153 = vmatprep.subr.bf16.mxu0 %v806
          %1154 = vmatpush1.bf16.msra.mxu0 %v805
          %1155 = vmatprep.subr.bf16.mxu0 %v812
          %1156 = vmatpush1.bf16.msra.mxu0 %v811
          %1157 = vmatprep.subr.bf16.mxu0 %v818
          %1158 = vmatpush1.bf16.msra.mxu0 %v817
          %1159 = vmatprep.mubr.bf16.mxu0 %v960
          %1160 = vmatmul.mubr.bf16.gmra.mrb[0].mxu0 %v959
          %v1161 = vpop.f32.mrb[0].mxu0
          %v1162 = vadd.f32 %v1121, %v1161
          %v1163 = vpop.f32.mrb[0].mxu0
          %v1164 = vadd.f32 %v1123, %v1163
          %v1165 = vpop.f32.mrb[0].mxu0
          %v1166 = vpop.f32.mrb[0].mxu0
          %1167 = vdwg.mxu0
          %1168 = vmatprep.subr.bf16.mxu0 %v824
          %1169 = vmatpush1.bf16.msra.mxu0 %v823
          %1170 = vmatprep.subr.bf16.mxu0 %v830
          %1171 = vmatpush1.bf16.msra.mxu0 %v829
          %1172 = vmatprep.subr.bf16.mxu0 %v836
          %1173 = vmatpush1.bf16.msra.mxu0 %v835
          %1174 = vmatprep.subr.bf16.mxu0 %v842
          %1175 = vmatpush1.bf16.msra.mxu0 %v841
          %1176 = vmatprep.subr.bf16.mxu0 %v848
          %1177 = vmatpush1.bf16.msra.mxu0 %v847
          %1178 = vmatprep.subr.bf16.mxu0 %v854
          %1179 = vmatpush1.bf16.msra.mxu0 %v853
          %1180 = vmatprep.subr.bf16.mxu0 %v860
          %1181 = vmatpush1.bf16.msra.mxu0 %v859
          %1182 = vmatprep.subr.bf16.mxu0 %v866
          %1183 = vmatpush1.bf16.msra.mxu0 %v865
          %1184 = vmatprep.subr.bf16.mxu0 %v872
          %1185 = vmatpush1.bf16.msra.mxu0 %v871
          %1186 = vmatprep.subr.bf16.mxu0 %v878
          %1187 = vmatpush1.bf16.msra.mxu0 %v877
          %1188 = vmatprep.subr.bf16.mxu0 %v884
          %1189 = vmatpush1.bf16.msra.mxu0 %v883
          %1190 = vmatprep.subr.bf16.mxu0 %v890
          %1191 = vmatpush1.bf16.msra.mxu0 %v889
          %1192 = vmatprep.subr.bf16.mxu0 %v896
          %1193 = vmatpush1.bf16.msra.mxu0 %v895
          %1194 = vmatprep.subr.bf16.mxu0 %v902
          %1195 = vmatpush1.bf16.msra.mxu0 %v901
          %1196 = vmatprep.subr.bf16.mxu0 %v908
          %1197 = vmatpush1.bf16.msra.mxu0 %v907
          %1198 = vmatprep.subr.bf16.mxu0 %v914
          %1199 = vmatpush1.bf16.msra.mxu0 %v913
          %1200 = vmatprep.mubr.bf16.mxu0 %v962
          %1201 = vmatmul.mubr.bf16.gmra.mrb[0].mxu0 %v961
          %v1202 = vpop.f32.mrb[0].mxu0
          %v1203 = vadd.f32 %v1162, %v1202
          %v1204 = vpop.f32.mrb[0].mxu0
          %v1205 = vadd.f32 %v1164, %v1204
          %v1206 = vpop.f32.mrb[0].mxu0
          %v1207 = vpop.f32.mrb[0].mxu0
          %1208 = vdwg.mxu0
          %1209 = vmatprep.subr.bf16.mxu0 %v634
          %1210 = vmatpush1.bf16.msra.mxu0 %v633
          %1211 = vmatprep.subr.bf16.mxu0 %v640
          %1212 = vmatpush1.bf16.msra.mxu0 %v639
          %1213 = vmatprep.subr.bf16.mxu0 %v646
          %1214 = vmatpush1.bf16.msra.mxu0 %v645
          %1215 = vmatprep.subr.bf16.mxu0 %v652
          %1216 = vmatpush1.bf16.msra.mxu0 %v651
          %1217 = vmatprep.subr.bf16.mxu0 %v658
          %1218 = vmatpush1.bf16.msra.mxu0 %v657
          %1219 = vmatprep.subr.bf16.mxu0 %v664
          %1220 = vmatpush1.bf16.msra.mxu0 %v663
          %1221 = vmatprep.subr.bf16.mxu0 %v670
          %1222 = vmatpush1.bf16.msra.mxu0 %v669
          %1223 = vmatprep.subr.bf16.mxu0 %v676
          %1224 = vmatpush1.bf16.msra.mxu0 %v675
          %1225 = vmatprep.subr.bf16.mxu0 %v682
          %1226 = vmatpush1.bf16.msra.mxu0 %v681
          %1227 = vmatprep.subr.bf16.mxu0 %v688
          %1228 = vmatpush1.bf16.msra.mxu0 %v687
          %1229 = vmatprep.subr.bf16.mxu0 %v694
          %1230 = vmatpush1.bf16.msra.mxu0 %v693
          %1231 = vmatprep.subr.bf16.mxu0 %v700
          %1232 = vmatpush1.bf16.msra.mxu0 %v699
          %1233 = vmatprep.subr.bf16.mxu0 %v706
          %1234 = vmatpush1.bf16.msra.mxu0 %v705
          %1235 = vmatprep.subr.bf16.mxu0 %v712
          %1236 = vmatpush1.bf16.msra.mxu0 %v711
          %1237 = vmatprep.subr.bf16.mxu0 %v718
          %1238 = vmatpush1.bf16.msra.mxu0 %v717
          %1239 = vmatprep.subr.bf16.mxu0 %v724
          %1240 = vmatpush1.bf16.msra.mxu0 %v723
          %1241 = vmatprep.mubr.bf16.mxu0 %v958
          %1242 = vmatmul.mubr.bf16.gmra.mrb[0].mxu0 %v957
          %v1243 = vpop.f32.mrb[0].mxu0
          %v1244 = vadd.f32 0.0, %v1243
          %v1245 = vpop.f32.mrb[0].mxu0
          %v1246 = vadd.f32 0.0, %v1245
          %v1247 = vpop.f32.mrb[0].mxu0
          %v1248 = vpop.f32.mrb[0].mxu0
          %1249 = vdwg.mxu0
          %1250 = vmatprep.subr.bf16.mxu0 %v730
          %1251 = vmatpush1.bf16.msra.mxu0 %v729
          %1252 = vmatprep.subr.bf16.mxu0 %v736
          %1253 = vmatpush1.bf16.msra.mxu0 %v735
          %1254 = vmatprep.subr.bf16.mxu0 %v742
          %1255 = vmatpush1.bf16.msra.mxu0 %v741
          %1256 = vmatprep.subr.bf16.mxu0 %v748
          %1257 = vmatpush1.bf16.msra.mxu0 %v747
          %1258 = vmatprep.subr.bf16.mxu0 %v754
          %1259 = vmatpush1.bf16.msra.mxu0 %v753
          %1260 = vmatprep.subr.bf16.mxu0 %v760
          %1261 = vmatpush1.bf16.msra.mxu0 %v759
          %1262 = vmatprep.subr.bf16.mxu0 %v766
          %1263 = vmatpush1.bf16.msra.mxu0 %v765
          %1264 = vmatprep.subr.bf16.mxu0 %v772
          %1265 = vmatpush1.bf16.msra.mxu0 %v771
          %1266 = vmatprep.subr.bf16.mxu0 %v778
          %1267 = vmatpush1.bf16.msra.mxu0 %v777
          %1268 = vmatprep.subr.bf16.mxu0 %v784
          %1269 = vmatpush1.bf16.msra.mxu0 %v783
          %1270 = vmatprep.subr.bf16.mxu0 %v790
          %1271 = vmatpush1.bf16.msra.mxu0 %v789
          %1272 = vmatprep.subr.bf16.mxu0 %v796
          %1273 = vmatpush1.bf16.msra.mxu0 %v795
          %1274 = vmatprep.subr.bf16.mxu0 %v802
          %1275 = vmatpush1.bf16.msra.mxu0 %v801
          %1276 = vmatprep.subr.bf16.mxu0 %v808
          %1277 = vmatpush1.bf16.msra.mxu0 %v807
          %1278 = vmatprep.subr.bf16.mxu0 %v814
          %1279 = vmatpush1.bf16.msra.mxu0 %v813
          %1280 = vmatprep.subr.bf16.mxu0 %v820
          %1281 = vmatpush1.bf16.msra.mxu0 %v819
          %1282 = vmatprep.mubr.bf16.mxu0 %v960
          %1283 = vmatmul.mubr.bf16.gmra.mrb[0].mxu0 %v959
          %v1284 = vpop.f32.mrb[0].mxu0
          %v1285 = vadd.f32 %v1244, %v1284
          %v1286 = vpop.f32.mrb[0].mxu0
          %v1287 = vadd.f32 %v1246, %v1286
          %v1288 = vpop.f32.mrb[0].mxu0
          %v1289 = vpop.f32.mrb[0].mxu0
          %1290 = vdwg.mxu0
          %1291 = vmatprep.subr.bf16.mxu0 %v826
          %1292 = vmatpush1.bf16.msra.mxu0 %v825
          %1293 = vmatprep.subr.bf16.mxu0 %v832
          %1294 = vmatpush1.bf16.msra.mxu0 %v831
          %1295 = vmatprep.subr.bf16.mxu0 %v838
          %1296 = vmatpush1.bf16.msra.mxu0 %v837
          %1297 = vmatprep.subr.bf16.mxu0 %v844
          %1298 = vmatpush1.bf16.msra.mxu0 %v843
          %1299 = vmatprep.subr.bf16.mxu0 %v850
          %1300 = vmatpush1.bf16.msra.mxu0 %v849
          %1301 = vmatprep.subr.bf16.mxu0 %v856
          %1302 = vmatpush1.bf16.msra.mxu0 %v855
          %1303 = vmatprep.subr.bf16.mxu0 %v862
          %1304 = vmatpush1.bf16.msra.mxu0 %v861
          %1305 = vmatprep.subr.bf16.mxu0 %v868
          %1306 = vmatpush1.bf16.msra.mxu0 %v867
          %1307 = vmatprep.subr.bf16.mxu0 %v874
          %1308 = vmatpush1.bf16.msra.mxu0 %v873
          %1309 = vmatprep.subr.bf16.mxu0 %v880
          %1310 = vmatpush1.bf16.msra.mxu0 %v879
          %1311 = vmatprep.subr.bf16.mxu0 %v886
          %1312 = vmatpush1.bf16.msra.mxu0 %v885
          %1313 = vmatprep.subr.bf16.mxu0 %v892
          %1314 = vmatpush1.bf16.msra.mxu0 %v891
          %1315 = vmatprep.subr.bf16.mxu0 %v898
          %1316 = vmatpush1.bf16.msra.mxu0 %v897
          %1317 = vmatprep.subr.bf16.mxu0 %v904
          %1318 = vmatpush1.bf16.msra.mxu0 %v903
          %1319 = vmatprep.subr.bf16.mxu0 %v910
          %1320 = vmatpush1.bf16.msra.mxu0 %v909
          %1321 = vmatprep.subr.bf16.mxu0 %v916
          %1322 = vmatpush1.bf16.msra.mxu0 %v915
          %1323 = vmatprep.mubr.bf16.mxu0 %v962
          %1324 = vmatmul.mubr.bf16.gmra.mrb[0].mxu0 %v961
          %v1325 = vpop.f32.mrb[0].mxu0
          %v1326 = vadd.f32 %v1285, %v1325
          %v1327 = vpop.f32.mrb[0].mxu0
          %v1328 = vadd.f32 %v1287, %v1327
          %v1329 = vpop.f32.mrb[0].mxu0
          %v1330 = vpop.f32.mrb[0].mxu0
          %1331 = vdwg.mxu0
          %v1333 = vlaneseq
          %v1334 = vshrl.u32 %v1333, 7
          %v1335 = vsub.s32 0, %v1334
          %v1336 = vrot.slane %v917, %v1335
          %v1337 = vlaneseq
          %v1338 = vshrl.u32 %v1337, 7
          %v1339 = vsub.s32 1, %v1338
          %v1340 = vrot.slane %v917, %v1339
          %v1341 = vlaneseq
          %v1342 = vshrl.u32 %v1341, 7
          %v1343 = vsub.s32 2, %v1342
          %v1344 = vrot.slane %v917, %v1343
          %v1345 = vlaneseq
          %v1346 = vshrl.u32 %v1345, 7
          %v1347 = vsub.s32 3, %v1346
          %v1348 = vrot.slane %v917, %v1347
          %v1349 = vlaneseq
          %v1350 = vshrl.u32 %v1349, 7
          %v1351 = vsub.s32 4, %v1350
          %v1352 = vrot.slane %v917, %v1351
          %v1353 = vlaneseq
          %v1354 = vshrl.u32 %v1353, 7
          %v1355 = vsub.s32 5, %v1354
          %v1356 = vrot.slane %v917, %v1355
          %v1363 = vmul.f32 %v1080, %v1336
          %v1364 = vmul.f32 %v1082, %v1340
          %v1365 = vmul.f32 %v1203, %v1344
          %v1366 = vmul.f32 %v1205, %v1348
          %v1367 = vmul.f32 %v1326, %v1352
          %v1368 = vmul.f32 %v1328, %v1356
          %v1375 = vcombine.low %v1363, %v1364
          %v1376 = vcombine.low %v1365, %v1366
          %v1378 = vunpack.c.l.s4 1983009808
          %v1379 = vunpack.c.0.s8 %v1378
          %v1380 = vlaneseq
          %v1381 = vshrl.u32 %v1380, 7
          %v1382 = vsub.s32 %v1379, %v1381
          %v1383 = vrot.slane %v1375, %v1382
          %v1385 = vunpack.c.l.s4 1983009808
          %v1386 = vunpack.c.0.s8 %v1385
          %v1387 = vlaneseq
          %v1388 = vshrl.u32 %v1387, 7
          %v1389 = vsub.s32 %v1386, %v1388
          %v1390 = vrot.slane %v1376, %v1389
          %v1391 = vcombine.low %v1383, %v1390
          %v1392 = vcombine.low %v1367, %v1368
          %v1394 = vunpack.c.l.s4 1983009808
          %v1395 = vunpack.c.0.s8 %v1394
          %v1396 = vlaneseq
          %v1397 = vshrl.u32 %v1396, 7
          %v1398 = vsub.s32 %v1395, %v1397
          %v1399 = vrot.slane %v1392, %v1398
          %1402 = vst [vmem:[#allocation2] sm:$0xff] %v1391
          %1403 = vst [vmem:[#allocation2 + $0x8] sm:$0xf] %v1399
        $region92: #{markdown_two_stage_forward.1} parent=63 // pred_fallthru
          _
        %p1404 = scmp.eq.s32.totalorder %s30, 1
        // Predicated region
        $region93: #{markdown_two_stage_forward.1} parent=63 // pred_check
          %p1405 = pneg %p1404
        $region94: #{markdown_two_stage_forward.1} parent=63 // pred_check_branch
          %1407 = sbr.rel (%p1405) target = $region96
        $region95: #{markdown_two_stage_forward.1} parent=63 // pred_region
          %v1408 = vld [vmem:[%s0] sm:$0xff]
          %v1409 = vld [vmem:[%s0 + $0x8] sm:$0xff]
          %v1410 = vld [vmem:[%s0 + $0x10] sm:$0xff]
          %v1411 = vld [vmem:[%s0 + $0x18] sm:$0xff]
          %v1412 = vld [vmem:[%s0 + $0x20] sm:$0xff]
          %v1413 = vld [vmem:[%s0 + $0x28] sm:$0xff]
          %v1414 = vld [vmem:[%s0 + $0x30] sm:$0xff]
          %v1415 = vld [vmem:[%s0 + $0x38] sm:$0xff]
          %v1416 = vld [vmem:[%s0 + $0x40] sm:$0xff]
          %v1417 = vld [vmem:[%s0 + $0x48] sm:$0xff]
          %v1418 = vld [vmem:[%s0 + $0x50] sm:$0xff]
          %v1419 = vld [vmem:[%s0 + $0x58] sm:$0xff]
          %v1420 = vpack.c.bf16 %v1414, %v1408
          %v1421 = vpack.c.bf16 %v1415, %v1409
          %v1422 = vpack.c.bf16 %v1416, %v1410
          %v1423 = vpack.c.bf16 %v1417, %v1411
          %v1424 = vpack.c.bf16 %v1418, %v1412
          %v1425 = vpack.c.bf16 %v1419, %v1413
          %1426 = vmatprep.subr.bf16.mxu0 %v630
          %1427 = vmatpush1.bf16.msra.mxu0 %v629
          %1428 = vmatprep.subr.bf16.mxu0 %v636
          %1429 = vmatpush1.bf16.msra.mxu0 %v635
          %1430 = vmatprep.subr.bf16.mxu0 %v642
          %1431 = vmatpush1.bf16.msra.mxu0 %v641
          %1432 = vmatprep.subr.bf16.mxu0 %v648
          %1433 = vmatpush1.bf16.msra.mxu0 %v647
          %1434 = vmatprep.subr.bf16.mxu0 %v654
          %1435 = vmatpush1.bf16.msra.mxu0 %v653
          %1436 = vmatprep.subr.bf16.mxu0 %v660
          %1437 = vmatpush1.bf16.msra.mxu0 %v659
          %1438 = vmatprep.subr.bf16.mxu0 %v666
          %1439 = vmatpush1.bf16.msra.mxu0 %v665
          %1440 = vmatprep.subr.bf16.mxu0 %v672
          %1441 = vmatpush1.bf16.msra.mxu0 %v671
          %1442 = vmatprep.subr.bf16.mxu0 %v678
          %1443 = vmatpush1.bf16.msra.mxu0 %v677
          %1444 = vmatprep.subr.bf16.mxu0 %v684
          %1445 = vmatpush1.bf16.msra.mxu0 %v683
          %1446 = vmatprep.subr.bf16.mxu0 %v690
          %1447 = vmatpush1.bf16.msra.mxu0 %v689
          %1448 = vmatprep.subr.bf16.mxu0 %v696
          %1449 = vmatpush1.bf16.msra.mxu0 %v695
          %1450 = vmatprep.subr.bf16.mxu0 %v702
          %1451 = vmatpush1.bf16.msra.mxu0 %v701
          %1452 = vmatprep.subr.bf16.mxu0 %v708
          %1453 = vmatpush1.bf16.msra.mxu0 %v707
          %1454 = vmatprep.subr.bf16.mxu0 %v714
          %1455 = vmatpush1.bf16.msra.mxu0 %v713
          %1456 = vmatprep.subr.bf16.mxu0 %v720
          %1457 = vmatpush1.bf16.msra.mxu0 %v719
          %1458 = vmatprep.mubr.bf16.mxu0 %v1421
          %1459 = vmatmul.mubr.bf16.gmra.mrb[0].mxu0 %v1420
          %v1460 = vpop.f32.mrb[0].mxu0
          %v1461 = vadd.f32 0.0, %v1460
          %v1462 = vpop.f32.mrb[0].mxu0
          %v1463 = vadd.f32 0.0, %v1462
          %v1464 = vpop.f32.mrb[0].mxu0
          %v1465 = vadd.f32 0.0, %v1464
          %v1466 = vpop.f32.mrb[0].mxu0
          %v1467 = vadd.f32 0.0, %v1466
          %1468 = vdwg.mxu0
          %1469 = vmatprep.subr.bf16.mxu0 %v726
          %1470 = vmatpush1.bf16.msra.mxu0 %v725
          %1471 = vmatprep.subr.bf16.mxu0 %v732
          %1472 = vmatpush1.bf16.msra.mxu0 %v731
          %1473 = vmatprep.subr.bf16.mxu0 %v738
          %1474 = vmatpush1.bf16.msra.mxu0 %v737
          %1475 = vmatprep.subr.bf16.mxu0 %v744
          %1476 = vmatpush1.bf16.msra.mxu0 %v743
          %1477 = vmatprep.subr.bf16.mxu0 %v750
          %1478 = vmatpush1.bf16.msra.mxu0 %v749
          %1479 = vmatprep.subr.bf16.mxu0 %v756
          %1480 = vmatpush1.bf16.msra.mxu0 %v755
          %1481 = vmatprep.subr.bf16.mxu0 %v762
          %1482 = vmatpush1.bf16.msra.mxu0 %v761
          %1483 = vmatprep.subr.bf16.mxu0 %v768
          %1484 = vmatpush1.bf16.msra.mxu0 %v767
          %1485 = vmatprep.subr.bf16.mxu0 %v774
          %1486 = vmatpush1.bf16.msra.mxu0 %v773
          %1487 = vmatprep.subr.bf16.mxu0 %v780
          %1488 = vmatpush1.bf16.msra.mxu0 %v779
          %1489 = vmatprep.subr.bf16.mxu0 %v786
          %1490 = vmatpush1.bf16.msra.mxu0 %v785
          %1491 = vmatprep.subr.bf16.mxu0 %v792
          %1492 = vmatpush1.bf16.msra.mxu0 %v791
          %1493 = vmatprep.subr.bf16.mxu0 %v798
          %1494 = vmatpush1.bf16.msra.mxu0 %v797
          %1495 = vmatprep.subr.bf16.mxu0 %v804
          %1496 = vmatpush1.bf16.msra.mxu0 %v803
          %1497 = vmatprep.subr.bf16.mxu0 %v810
          %1498 = vmatpush1.bf16.msra.mxu0 %v809
          %1499 = vmatprep.subr.bf16.mxu0 %v816
          %1500 = vmatpush1.bf16.msra.mxu0 %v815
          %1501 = vmatprep.mubr.bf16.mxu0 %v1423
          %1502 = vmatmul.mubr.bf16.gmra.mrb[0].mxu0 %v1422
          %v1503 = vpop.f32.mrb[0].mxu0
          %v1504 = vadd.f32 %v1461, %v1503
          %v1505 = vpop.f32.mrb[0].mxu0
          %v1506 = vadd.f32 %v1463, %v1505
          %v1507 = vpop.f32.mrb[0].mxu0
          %v1508 = vadd.f32 %v1465, %v1507
          %v1509 = vpop.f32.mrb[0].mxu0
          %v1510 = vadd.f32 %v1467, %v1509
          %1511 = vdwg.mxu0
          %1512 = vmatprep.subr.bf16.mxu0 %v822
          %1513 = vmatpush1.bf16.msra.mxu0 %v821
          %1514 = vmatprep.subr.bf16.mxu0 %v828
          %1515 = vmatpush1.bf16.msra.mxu0 %v827
          %1516 = vmatprep.subr.bf16.mxu0 %v834
          %1517 = vmatpush1.bf16.msra.mxu0 %v833
          %1518 = vmatprep.subr.bf16.mxu0 %v840
          %1519 = vmatpush1.bf16.msra.mxu0 %v839
          %1520 = vmatprep.subr.bf16.mxu0 %v846
          %1521 = vmatpush1.bf16.msra.mxu0 %v845
          %1522 = vmatprep.subr.bf16.mxu0 %v852
          %1523 = vmatpush1.bf16.msra.mxu0 %v851
          %1524 = vmatprep.subr.bf16.mxu0 %v858
          %1525 = vmatpush1.bf16.msra.mxu0 %v857
          %1526 = vmatprep.subr.bf16.mxu0 %v864
          %1527 = vmatpush1.bf16.msra.mxu0 %v863
          %1528 = vmatprep.subr.bf16.mxu0 %v870
          %1529 = vmatpush1.bf16.msra.mxu0 %v869
          %1530 = vmatprep.subr.bf16.mxu0 %v876
          %1531 = vmatpush1.bf16.msra.mxu0 %v875
          %1532 = vmatprep.subr.bf16.mxu0 %v882
          %1533 = vmatpush1.bf16.msra.mxu0 %v881
          %1534 = vmatprep.subr.bf16.mxu0 %v888
          %1535 = vmatpush1.bf16.msra.mxu0 %v887
          %1536 = vmatprep.subr.bf16.mxu0 %v894
          %1537 = vmatpush1.bf16.msra.mxu0 %v893
          %1538 = vmatprep.subr.bf16.mxu0 %v900
          %1539 = vmatpush1.bf16.msra.mxu0 %v899
          %1540 = vmatprep.subr.bf16.mxu0 %v906
          %1541 = vmatpush1.bf16.msra.mxu0 %v905
          %1542 = vmatprep.subr.bf16.mxu0 %v912
          %1543 = vmatpush1.bf16.msra.mxu0 %v911
          %1544 = vmatprep.mubr.bf16.mxu0 %v1425
          %1545 = vmatmul.mubr.bf16.gmra.mrb[0].mxu0 %v1424
          %v1546 = vpop.f32.mrb[0].mxu0
          %v1547 = vadd.f32 %v1504, %v1546
          %v1548 = vpop.f32.mrb[0].mxu0
          %v1549 = vadd.f32 %v1506, %v1548
          %v1550 = vpop.f32.mrb[0].mxu0
          %v1551 = vadd.f32 %v1508, %v1550
          %v1552 = vpop.f32.mrb[0].mxu0
          %v1553 = vadd.f32 %v1510, %v1552
          %1554 = vdwg.mxu0
          %1555 = vmatprep.subr.bf16.mxu0 %v632
          %1556 = vmatpush1.bf16.msra.mxu0 %v631
          %1557 = vmatprep.subr.bf16.mxu0 %v638
          %1558 = vmatpush1.bf16.msra.mxu0 %v637
          %1559 = vmatprep.subr.bf16.mxu0 %v644
          %1560 = vmatpush1.bf16.msra.mxu0 %v643
          %1561 = vmatprep.subr.bf16.mxu0 %v650
          %1562 = vmatpush1.bf16.msra.mxu0 %v649
          %1563 = vmatprep.subr.bf16.mxu0 %v656
          %1564 = vmatpush1.bf16.msra.mxu0 %v655
          %1565 = vmatprep.subr.bf16.mxu0 %v662
          %1566 = vmatpush1.bf16.msra.mxu0 %v661
          %1567 = vmatprep.subr.bf16.mxu0 %v668
          %1568 = vmatpush1.bf16.msra.mxu0 %v667
          %1569 = vmatprep.subr.bf16.mxu0 %v674
          %1570 = vmatpush1.bf16.msra.mxu0 %v673
          %1571 = vmatprep.subr.bf16.mxu0 %v680
          %1572 = vmatpush1.bf16.msra.mxu0 %v679
          %1573 = vmatprep.subr.bf16.mxu0 %v686
          %1574 = vmatpush1.bf16.msra.mxu0 %v685
          %1575 = vmatprep.subr.bf16.mxu0 %v692
          %1576 = vmatpush1.bf16.msra.mxu0 %v691
          %1577 = vmatprep.subr.bf16.mxu0 %v698
          %1578 = vmatpush1.bf16.msra.mxu0 %v697
          %1579 = vmatprep.subr.bf16.mxu0 %v704
          %1580 = vmatpush1.bf16.msra.mxu0 %v703
          %1581 = vmatprep.subr.bf16.mxu0 %v710
          %1582 = vmatpush1.bf16.msra.mxu0 %v709
          %1583 = vmatprep.subr.bf16.mxu0 %v716
          %1584 = vmatpush1.bf16.msra.mxu0 %v715
          %1585 = vmatprep.subr.bf16.mxu0 %v722
          %1586 = vmatpush1.bf16.msra.mxu0 %v721
          %1587 = vmatprep.mubr.bf16.mxu0 %v1421
          %1588 = vmatmul.mubr.bf16.gmra.mrb[0].mxu0 %v1420
          %v1589 = vpop.f32.mrb[0].mxu0
          %v1590 = vadd.f32 0.0, %v1589
          %v1591 = vpop.f32.mrb[0].mxu0
          %v1592 = vadd.f32 0.0, %v1591
          %v1593 = vpop.f32.mrb[0].mxu0
          %v1594 = vadd.f32 0.0, %v1593
          %v1595 = vpop.f32.mrb[0].mxu0
          %v1596 = vadd.f32 0.0, %v1595
          %1597 = vdwg.mxu0
          %1598 = vmatprep.subr.bf16.mxu0 %v728
          %1599 = vmatpush1.bf16.msra.mxu0 %v727
          %1600 = vmatprep.subr.bf16.mxu0 %v734
          %1601 = vmatpush1.bf16.msra.mxu0 %v733
          %1602 = vmatprep.subr.bf16.mxu0 %v740
          %1603 = vmatpush1.bf16.msra.mxu0 %v739
          %1604 = vmatprep.subr.bf16.mxu0 %v746
          %1605 = vmatpush1.bf16.msra.mxu0 %v745
          %1606 = vmatprep.subr.bf16.mxu0 %v752
          %1607 = vmatpush1.bf16.msra.mxu0 %v751
          %1608 = vmatprep.subr.bf16.mxu0 %v758
          %1609 = vmatpush1.bf16.msra.mxu0 %v757
          %1610 = vmatprep.subr.bf16.mxu0 %v764
          %1611 = vmatpush1.bf16.msra.mxu0 %v763
          %1612 = vmatprep.subr.bf16.mxu0 %v770
          %1613 = vmatpush1.bf16.msra.mxu0 %v769
          %1614 = vmatprep.subr.bf16.mxu0 %v776
          %1615 = vmatpush1.bf16.msra.mxu0 %v775
          %1616 = vmatprep.subr.bf16.mxu0 %v782
          %1617 = vmatpush1.bf16.msra.mxu0 %v781
          %1618 = vmatprep.subr.bf16.mxu0 %v788
          %1619 = vmatpush1.bf16.msra.mxu0 %v787
          %1620 = vmatprep.subr.bf16.mxu0 %v794
          %1621 = vmatpush1.bf16.msra.mxu0 %v793
          %1622 = vmatprep.subr.bf16.mxu0 %v800
          %1623 = vmatpush1.bf16.msra.mxu0 %v799
          %1624 = vmatprep.subr.bf16.mxu0 %v806
          %1625 = vmatpush1.bf16.msra.mxu0 %v805
          %1626 = vmatprep.subr.bf16.mxu0 %v812
          %1627 = vmatpush1.bf16.msra.mxu0 %v811
          %1628 = vmatprep.subr.bf16.mxu0 %v818
          %1629 = vmatpush1.bf16.msra.mxu0 %v817
          %1630 = vmatprep.mubr.bf16.mxu0 %v1423
          %1631 = vmatmul.mubr.bf16.gmra.mrb[0].mxu0 %v1422
          %v1632 = vpop.f32.mrb[0].mxu0
          %v1633 = vadd.f32 %v1590, %v1632
          %v1634 = vpop.f32.mrb[0].mxu0
          %v1635 = vadd.f32 %v1592, %v1634
          %v1636 = vpop.f32.mrb[0].mxu0
          %v1637 = vadd.f32 %v1594, %v1636
          %v1638 = vpop.f32.mrb[0].mxu0
          %v1639 = vadd.f32 %v1596, %v1638
          %1640 = vdwg.mxu0
          %1641 = vmatprep.subr.bf16.mxu0 %v824
          %1642 = vmatpush1.bf16.msra.mxu0 %v823
          %1643 = vmatprep.subr.bf16.mxu0 %v830
          %1644 = vmatpush1.bf16.msra.mxu0 %v829
          %1645 = vmatprep.subr.bf16.mxu0 %v836
          %1646 = vmatpush1.bf16.msra.mxu0 %v835
          %1647 = vmatprep.subr.bf16.mxu0 %v842
          %1648 = vmatpush1.bf16.msra.mxu0 %v841
          %1649 = vmatprep.subr.bf16.mxu0 %v848
          %1650 = vmatpush1.bf16.msra.mxu0 %v847
          %1651 = vmatprep.subr.bf16.mxu0 %v854
          %1652 = vmatpush1.bf16.msra.mxu0 %v853
          %1653 = vmatprep.subr.bf16.mxu0 %v860
          %1654 = vmatpush1.bf16.msra.mxu0 %v859
          %1655 = vmatprep.subr.bf16.mxu0 %v866
          %1656 = vmatpush1.bf16.msra.mxu0 %v865
          %1657 = vmatprep.subr.bf16.mxu0 %v872
          %1658 = vmatpush1.bf16.msra.mxu0 %v871
          %1659 = vmatprep.subr.bf16.mxu0 %v878
          %1660 = vmatpush1.bf16.msra.mxu0 %v877
          %1661 = vmatprep.subr.bf16.mxu0 %v884
          %1662 = vmatpush1.bf16.msra.mxu0 %v883
          %1663 = vmatprep.subr.bf16.mxu0 %v890
          %1664 = vmatpush1.bf16.msra.mxu0 %v889
          %1665 = vmatprep.subr.bf16.mxu0 %v896
          %1666 = vmatpush1.bf16.msra.mxu0 %v895
          %1667 = vmatprep.subr.bf16.mxu0 %v902
          %1668 = vmatpush1.bf16.msra.mxu0 %v901
          %1669 = vmatprep.subr.bf16.mxu0 %v908
          %1670 = vmatpush1.bf16.msra.mxu0 %v907
          %1671 = vmatprep.subr.bf16.mxu0 %v914
          %1672 = vmatpush1.bf16.msra.mxu0 %v913
          %1673 = vmatprep.mubr.bf16.mxu0 %v1425
          %1674 = vmatmul.mubr.bf16.gmra.mrb[0].mxu0 %v1424
          %v1675 = vpop.f32.mrb[0].mxu0
          %v1676 = vadd.f32 %v1633, %v1675
          %v1677 = vpop.f32.mrb[0].mxu0
          %v1678 = vadd.f32 %v1635, %v1677
          %v1679 = vpop.f32.mrb[0].mxu0
          %v1680 = vadd.f32 %v1637, %v1679
          %v1681 = vpop.f32.mrb[0].mxu0
          %v1682 = vadd.f32 %v1639, %v1681
          %1683 = vdwg.mxu0
          %1684 = vmatprep.subr.bf16.mxu0 %v634
          %1685 = vmatpush1.bf16.msra.mxu0 %v633
          %1686 = vmatprep.subr.bf16.mxu0 %v640
          %1687 = vmatpush1.bf16.msra.mxu0 %v639
          %1688 = vmatprep.subr.bf16.mxu0 %v646
          %1689 = vmatpush1.bf16.msra.mxu0 %v645
          %1690 = vmatprep.subr.bf16.mxu0 %v652
          %1691 = vmatpush1.bf16.msra.mxu0 %v651
          %1692 = vmatprep.subr.bf16.mxu0 %v658
          %1693 = vmatpush1.bf16.msra.mxu0 %v657
          %1694 = vmatprep.subr.bf16.mxu0 %v664
          %1695 = vmatpush1.bf16.msra.mxu0 %v663
          %1696 = vmatprep.subr.bf16.mxu0 %v670
          %1697 = vmatpush1.bf16.msra.mxu0 %v669
          %1698 = vmatprep.subr.bf16.mxu0 %v676
          %1699 = vmatpush1.bf16.msra.mxu0 %v675
          %1700 = vmatprep.subr.bf16.mxu0 %v682
          %1701 = vmatpush1.bf16.msra.mxu0 %v681
          %1702 = vmatprep.subr.bf16.mxu0 %v688
          %1703 = vmatpush1.bf16.msra.mxu0 %v687
          %1704 = vmatprep.subr.bf16.mxu0 %v694
          %1705 = vmatpush1.bf16.msra.mxu0 %v693
          %1706 = vmatprep.subr.bf16.mxu0 %v700
          %1707 = vmatpush1.bf16.msra.mxu0 %v699
          %1708 = vmatprep.subr.bf16.mxu0 %v706
          %1709 = vmatpush1.bf16.msra.mxu0 %v705
          %1710 = vmatprep.subr.bf16.mxu0 %v712
          %1711 = vmatpush1.bf16.msra.mxu0 %v711
          %1712 = vmatprep.subr.bf16.mxu0 %v718
          %1713 = vmatpush1.bf16.msra.mxu0 %v717
          %1714 = vmatprep.subr.bf16.mxu0 %v724
          %1715 = vmatpush1.bf16.msra.mxu0 %v723
          %1716 = vmatprep.mubr.bf16.mxu0 %v1421
          %1717 = vmatmul.mubr.bf16.gmra.mrb[0].mxu0 %v1420
          %v1718 = vpop.f32.mrb[0].mxu0
          %v1719 = vadd.f32 0.0, %v1718
          %v1720 = vpop.f32.mrb[0].mxu0
          %v1721 = vadd.f32 0.0, %v1720
          %v1722 = vpop.f32.mrb[0].mxu0
          %v1723 = vadd.f32 0.0, %v1722
          %v1724 = vpop.f32.mrb[0].mxu0
          %v1725 = vadd.f32 0.0, %v1724
          %1726 = vdwg.mxu0
          %1727 = vmatprep.subr.bf16.mxu0 %v730
          %1728 = vmatpush1.bf16.msra.mxu0 %v729
          %1729 = vmatprep.subr.bf16.mxu0 %v736
          %1730 = vmatpush1.bf16.msra.mxu0 %v735
          %1731 = vmatprep.subr.bf16.mxu0 %v742
          %1732 = vmatpush1.bf16.msra.mxu0 %v741
          %1733 = vmatprep.subr.bf16.mxu0 %v748
          %1734 = vmatpush1.bf16.msra.mxu0 %v747
          %1735 = vmatprep.subr.bf16.mxu0 %v754
          %1736 = vmatpush1.bf16.msra.mxu0 %v753
          %1737 = vmatprep.subr.bf16.mxu0 %v760
          %1738 = vmatpush1.bf16.msra.mxu0 %v759
          %1739 = vmatprep.subr.bf16.mxu0 %v766
          %1740 = vmatpush1.bf16.msra.mxu0 %v765
          %1741 = vmatprep.subr.bf16.mxu0 %v772
          %1742 = vmatpush1.bf16.msra.mxu0 %v771
          %1743 = vmatprep.subr.bf16.mxu0 %v778
          %1744 = vmatpush1.bf16.msra.mxu0 %v777
          %1745 = vmatprep.subr.bf16.mxu0 %v784
          %1746 = vmatpush1.bf16.msra.mxu0 %v783
          %1747 = vmatprep.subr.bf16.mxu0 %v790
          %1748 = vmatpush1.bf16.msra.mxu0 %v789
          %1749 = vmatprep.subr.bf16.mxu0 %v796
          %1750 = vmatpush1.bf16.msra.mxu0 %v795
          %1751 = vmatprep.subr.bf16.mxu0 %v802
          %1752 = vmatpush1.bf16.msra.mxu0 %v801
          %1753 = vmatprep.subr.bf16.mxu0 %v808
          %1754 = vmatpush1.bf16.msra.mxu0 %v807
          %1755 = vmatprep.subr.bf16.mxu0 %v814
          %1756 = vmatpush1.bf16.msra.mxu0 %v813
          %1757 = vmatprep.subr.bf16.mxu0 %v820
          %1758 = vmatpush1.bf16.msra.mxu0 %v819
          %1759 = vmatprep.mubr.bf16.mxu0 %v1423
          %1760 = vmatmul.mubr.bf16.gmra.mrb[0].mxu0 %v1422
          %v1761 = vpop.f32.mrb[0].mxu0
          %v1762 = vadd.f32 %v1719, %v1761
          %v1763 = vpop.f32.mrb[0].mxu0
          %v1764 = vadd.f32 %v1721, %v1763
          %v1765 = vpop.f32.mrb[0].mxu0
          %v1766 = vadd.f32 %v1723, %v1765
          %v1767 = vpop.f32.mrb[0].mxu0
          %v1768 = vadd.f32 %v1725, %v1767
          %1769 = vdwg.mxu0
          %1770 = vmatprep.subr.bf16.mxu0 %v826
          %1771 = vmatpush1.bf16.msra.mxu0 %v825
          %1772 = vmatprep.subr.bf16.mxu0 %v832
          %1773 = vmatpush1.bf16.msra.mxu0 %v831
          %1774 = vmatprep.subr.bf16.mxu0 %v838
          %1775 = vmatpush1.bf16.msra.mxu0 %v837
          %1776 = vmatprep.subr.bf16.mxu0 %v844
          %1777 = vmatpush1.bf16.msra.mxu0 %v843
          %1778 = vmatprep.subr.bf16.mxu0 %v850
          %1779 = vmatpush1.bf16.msra.mxu0 %v849
          %1780 = vmatprep.subr.bf16.mxu0 %v856
          %1781 = vmatpush1.bf16.msra.mxu0 %v855
          %1782 = vmatprep.subr.bf16.mxu0 %v862
          %1783 = vmatpush1.bf16.msra.mxu0 %v861
          %1784 = vmatprep.subr.bf16.mxu0 %v868
          %1785 = vmatpush1.bf16.msra.mxu0 %v867
          %1786 = vmatprep.subr.bf16.mxu0 %v874
          %1787 = vmatpush1.bf16.msra.mxu0 %v873
          %1788 = vmatprep.subr.bf16.mxu0 %v880
          %1789 = vmatpush1.bf16.msra.mxu0 %v879
          %1790 = vmatprep.subr.bf16.mxu0 %v886
          %1791 = vmatpush1.bf16.msra.mxu0 %v885
          %1792 = vmatprep.subr.bf16.mxu0 %v892
          %1793 = vmatpush1.bf16.msra.mxu0 %v891
          %1794 = vmatprep.subr.bf16.mxu0 %v898
          %1795 = vmatpush1.bf16.msra.mxu0 %v897
          %1796 = vmatprep.subr.bf16.mxu0 %v904
          %1797 = vmatpush1.bf16.msra.mxu0 %v903
          %1798 = vmatprep.subr.bf16.mxu0 %v910
          %1799 = vmatpush1.bf16.msra.mxu0 %v909
          %1800 = vmatprep.subr.bf16.mxu0 %v916
          %1801 = vmatpush1.bf16.msra.mxu0 %v915
          %1802 = vmatprep.mubr.bf16.mxu0 %v1425
          %1803 = vmatmul.mubr.bf16.gmra.mrb[0].mxu0 %v1424
          %v1804 = vpop.f32.mrb[0].mxu0
          %v1805 = vadd.f32 %v1762, %v1804
          %v1806 = vpop.f32.mrb[0].mxu0
          %v1807 = vadd.f32 %v1764, %v1806
          %v1808 = vpop.f32.mrb[0].mxu0
          %v1809 = vadd.f32 %v1766, %v1808
          %v1810 = vpop.f32.mrb[0].mxu0
          %v1811 = vadd.f32 %v1768, %v1810
          %1812 = vdwg.mxu0
          %v1814 = vlaneseq
          %v1815 = vshrl.u32 %v1814, 7
          %v1816 = vsub.s32 0, %v1815
          %v1817 = vrot.slane %v917, %v1816
          %v1818 = vlaneseq
          %v1819 = vshrl.u32 %v1818, 7
          %v1820 = vsub.s32 1, %v1819
          %v1821 = vrot.slane %v917, %v1820
          %v1822 = vlaneseq
          %v1823 = vshrl.u32 %v1822, 7
          %v1824 = vsub.s32 2, %v1823
          %v1825 = vrot.slane %v917, %v1824
          %v1826 = vlaneseq
          %v1827 = vshrl.u32 %v1826, 7
          %v1828 = vsub.s32 3, %v1827
          %v1829 = vrot.slane %v917, %v1828
          %v1830 = vlaneseq
          %v1831 = vshrl.u32 %v1830, 7
          %v1832 = vsub.s32 4, %v1831
          %v1833 = vrot.slane %v917, %v1832
          %v1834 = vlaneseq
          %v1835 = vshrl.u32 %v1834, 7
          %v1836 = vsub.s32 5, %v1835
          %v1837 = vrot.slane %v917, %v1836
          %v1844 = vmul.f32 %v1547, %v1817
          %v1845 = vmul.f32 %v1549, %v1821
          %v1846 = vmul.f32 %v1676, %v1825
          %v1847 = vmul.f32 %v1678, %v1829
          %v1848 = vmul.f32 %v1805, %v1833
          %v1849 = vmul.f32 %v1807, %v1837
          %v1850 = vmul.f32 %v1551, %v1817
          %v1851 = vmul.f32 %v1553, %v1821
          %v1852 = vmul.f32 %v1680, %v1825
          %v1853 = vmul.f32 %v1682, %v1829
          %v1854 = vmul.f32 %v1809, %v1833
          %v1855 = vmul.f32 %v1811, %v1837
          %1856 = vst [vmem:[#allocation3] sm:$0xff] %v1844
          %1857 = vst [vmem:[#allocation3 + $0x8] sm:$0xff] %v1845
          %1858 = vst [vmem:[#allocation3 + $0x10] sm:$0xff] %v1846
          %1859 = vst [vmem:[#allocation3 + $0x18] sm:$0xff] %v1847
          %1860 = vst [vmem:[#allocation3 + $0x20] sm:$0xff] %v1848
          %1861 = vst [vmem:[#allocation3 + $0x28] sm:$0xff] %v1849
          %1862 = vst [vmem:[#allocation3 + $0x30] sm:$0xff] %v1850
          %1863 = vst [vmem:[#allocation3 + $0x38] sm:$0xff] %v1851
          %1864 = vst [vmem:[#allocation3 + $0x40] sm:$0xff] %v1852
          %1865 = vst [vmem:[#allocation3 + $0x48] sm:$0xff] %v1853
          %1866 = vst [vmem:[#allocation3 + $0x50] sm:$0xff] %v1854
          %1867 = vst [vmem:[#allocation3 + $0x58] sm:$0xff] %v1855
        $region96: #{markdown_two_stage_forward.1} parent=63 // pred_fallthru
          _
        %p1868 = scmp.eq.s32.totalorder %s30, 2
        // Predicated region
        $region97: #{markdown_two_stage_forward.1} parent=63 // pred_check
          %p1869 = pneg %p1868
        $region98: #{markdown_two_stage_forward.1} parent=63 // pred_check_branch
          %1871 = sbr.rel (%p1869) target = $region100
        $region99: #{markdown_two_stage_forward.1} parent=63 // pred_region
          %v1872 = vld [vmem:[%s0] sm:$0xff]
          %v1873 = vld [vmem:[%s0 + $0x8] sm:$0xff]
          %v1874 = vld [vmem:[%s0 + $0x10] sm:$0xff]
          %v1875 = vld [vmem:[%s0 + $0x18] sm:$0xff]
          %v1876 = vld [vmem:[%s0 + $0x20] sm:$0xff]
          %v1877 = vld [vmem:[%s0 + $0x28] sm:$0xff]
          %v1878 = vld [vmem:[%s0 + $0x30] sm:$0xff]
          %v1879 = vld [vmem:[%s0 + $0x38] sm:$0xff]
          %v1880 = vld [vmem:[%s0 + $0x40] sm:$0xff]
          %v1881 = vld [vmem:[%s0 + $0x48] sm:$0xff]
          %v1882 = vld [vmem:[%s0 + $0x50] sm:$0xff]
          %v1883 = vld [vmem:[%s0 + $0x58] sm:$0xff]
          %v1884 = vpack.c.bf16 %v1878, %v1872
          %v1885 = vpack.c.bf16 %v1879, %v1873
          %v1886 = vpack.c.bf16 %v1880, %v1874
          %v1887 = vpack.c.bf16 %v1881, %v1875
          %v1888 = vpack.c.bf16 %v1882, %v1876
          %v1889 = vpack.c.bf16 %v1883, %v1877
          %1890 = vmatprep.subr.bf16.mxu0 %v630
          %1891 = vmatpush1.bf16.msra.mxu0 %v629
          %1892 = vmatprep.subr.bf16.mxu0 %v636
          %1893 = vmatpush1.bf16.msra.mxu0 %v635
          %1894 = vmatprep.subr.bf16.mxu0 %v642
          %1895 = vmatpush1.bf16.msra.mxu0 %v641
          %1896 = vmatprep.subr.bf16.mxu0 %v648
          %1897 = vmatpush1.bf16.msra.mxu0 %v647
          %1898 = vmatprep.subr.bf16.mxu0 %v654
          %1899 = vmatpush1.bf16.msra.mxu0 %v653
          %1900 = vmatprep.subr.bf16.mxu0 %v660
          %1901 = vmatpush1.bf16.msra.mxu0 %v659
          %1902 = vmatprep.subr.bf16.mxu0 %v666
          %1903 = vmatpush1.bf16.msra.mxu0 %v665
          %1904 = vmatprep.subr.bf16.mxu0 %v672
          %1905 = vmatpush1.bf16.msra.mxu0 %v671
          %1906 = vmatprep.subr.bf16.mxu0 %v678
          %1907 = vmatpush1.bf16.msra.mxu0 %v677
          %1908 = vmatprep.subr.bf16.mxu0 %v684
          %1909 = vmatpush1.bf16.msra.mxu0 %v683
          %1910 = vmatprep.subr.bf16.mxu0 %v690
          %1911 = vmatpush1.bf16.msra.mxu0 %v689
          %1912 = vmatprep.subr.bf16.mxu0 %v696
          %1913 = vmatpush1.bf16.msra.mxu0 %v695
          %1914 = vmatprep.subr.bf16.mxu0 %v702
          %1915 = vmatpush1.bf16.msra.mxu0 %v701
          %1916 = vmatprep.subr.bf16.mxu0 %v708
          %1917 = vmatpush1.bf16.msra.mxu0 %v707
          %1918 = vmatprep.subr.bf16.mxu0 %v714
          %1919 = vmatpush1.bf16.msra.mxu0 %v713
          %1920 = vmatprep.subr.bf16.mxu0 %v720
          %1921 = vmatpush1.bf16.msra.mxu0 %v719
          %1922 = vmatprep.mubr.bf16.mxu0 %v1885
          %1923 = vmatmul.mubr.bf16.gmra.mrb[0].mxu0 %v1884
          %v1924 = vpop.f32.mrb[0].mxu0
          %v1925 = vadd.f32 0.0, %v1924
          %v1926 = vpop.f32.mrb[0].mxu0
          %v1927 = vadd.f32 0.0, %v1926
          %v1928 = vpop.f32.mrb[0].mxu0
          %v1929 = vadd.f32 0.0, %v1928
          %v1930 = vpop.f32.mrb[0].mxu0
          %v1931 = vadd.f32 0.0, %v1930
          %1932 = vdwg.mxu0
          %1933 = vmatprep.subr.bf16.mxu0 %v726
          %1934 = vmatpush1.bf16.msra.mxu0 %v725
          %1935 = vmatprep.subr.bf16.mxu0 %v732
          %1936 = vmatpush1.bf16.msra.mxu0 %v731
          %1937 = vmatprep.subr.bf16.mxu0 %v738
          %1938 = vmatpush1.bf16.msra.mxu0 %v737
          %1939 = vmatprep.subr.bf16.mxu0 %v744
          %1940 = vmatpush1.bf16.msra.mxu0 %v743
          %1941 = vmatprep.subr.bf16.mxu0 %v750
          %1942 = vmatpush1.bf16.msra.mxu0 %v749
          %1943 = vmatprep.subr.bf16.mxu0 %v756
          %1944 = vmatpush1.bf16.msra.mxu0 %v755
          %1945 = vmatprep.subr.bf16.mxu0 %v762
          %1946 = vmatpush1.bf16.msra.mxu0 %v761
          %1947 = vmatprep.subr.bf16.mxu0 %v768
          %1948 = vmatpush1.bf16.msra.mxu0 %v767
          %1949 = vmatprep.subr.bf16.mxu0 %v774
          %1950 = vmatpush1.bf16.msra.mxu0 %v773
          %1951 = vmatprep.subr.bf16.mxu0 %v780
          %1952 = vmatpush1.bf16.msra.mxu0 %v779
          %1953 = vmatprep.subr.bf16.mxu0 %v786
          %1954 = vmatpush1.bf16.msra.mxu0 %v785
          %1955 = vmatprep.subr.bf16.mxu0 %v792
          %1956 = vmatpush1.bf16.msra.mxu0 %v791
          %1957 = vmatprep.subr.bf16.mxu0 %v798
          %1958 = vmatpush1.bf16.msra.mxu0 %v797
          %1959 = vmatprep.subr.bf16.mxu0 %v804
          %1960 = vmatpush1.bf16.msra.mxu0 %v803
          %1961 = vmatprep.subr.bf16.mxu0 %v810
          %1962 = vmatpush1.bf16.msra.mxu0 %v809
          %1963 = vmatprep.subr.bf16.mxu0 %v816
          %1964 = vmatpush1.bf16.msra.mxu0 %v815
          %1965 = vmatprep.mubr.bf16.mxu0 %v1887
          %1966 = vmatmul.mubr.bf16.gmra.mrb[0].mxu0 %v1886
          %v1967 = vpop.f32.mrb[0].mxu0
          %v1968 = vadd.f32 %v1925, %v1967
          %v1969 = vpop.f32.mrb[0].mxu0
          %v1970 = vadd.f32 %v1927, %v1969
          %v1971 = vpop.f32.mrb[0].mxu0
          %v1972 = vadd.f32 %v1929, %v1971
          %v1973 = vpop.f32.mrb[0].mxu0
          %v1974 = vadd.f32 %v1931, %v1973
          %1975 = vdwg.mxu0
          %1976 = vmatprep.subr.bf16.mxu0 %v822
          %1977 = vmatpush1.bf16.msra.mxu0 %v821
          %1978 = vmatprep.subr.bf16.mxu0 %v828
          %1979 = vmatpush1.bf16.msra.mxu0 %v827
          %1980 = vmatprep.subr.bf16.mxu0 %v834
          %1981 = vmatpush1.bf16.msra.mxu0 %v833
          %1982 = vmatprep.subr.bf16.mxu0 %v840
          %1983 = vmatpush1.bf16.msra.mxu0 %v839
          %1984 = vmatprep.subr.bf16.mxu0 %v846
          %1985 = vmatpush1.bf16.msra.mxu0 %v845
          %1986 = vmatprep.subr.bf16.mxu0 %v852
          %1987 = vmatpush1.bf16.msra.mxu0 %v851
          %1988 = vmatprep.subr.bf16.mxu0 %v858
          %1989 = vmatpush1.bf16.msra.mxu0 %v857
          %1990 = vmatprep.subr.bf16.mxu0 %v864
          %1991 = vmatpush1.bf16.msra.mxu0 %v863
          %1992 = vmatprep.subr.bf16.mxu0 %v870
          %1993 = vmatpush1.bf16.msra.mxu0 %v869
          %1994 = vmatprep.subr.bf16.mxu0 %v876
          %1995 = vmatpush1.bf16.msra.mxu0 %v875
          %1996 = vmatprep.subr.bf16.mxu0 %v882
          %1997 = vmatpush1.bf16.msra.mxu0 %v881
          %1998 = vmatprep.subr.bf16.mxu0 %v888
          %1999 = vmatpush1.bf16.msra.mxu0 %v887
          %2000 = vmatprep.subr.bf16.mxu0 %v894
          %2001 = vmatpush1.bf16.msra.mxu0 %v893
          %2002 = vmatprep.subr.bf16.mxu0 %v900
          %2003 = vmatpush1.bf16.msra.mxu0 %v899
          %2004 = vmatprep.subr.bf16.mxu0 %v906
          %2005 = vmatpush1.bf16.msra.mxu0 %v905
          %2006 = vmatprep.subr.bf16.mxu0 %v912
          %2007 = vmatpush1.bf16.msra.mxu0 %v911
          %2008 = vmatprep.mubr.bf16.mxu0 %v1889
          %2009 = vmatmul.mubr.bf16.gmra.mrb[0].mxu0 %v1888
          %v2010 = vpop.f32.mrb[0].mxu0
          %v2011 = vadd.f32 %v1968, %v2010
          %v2012 = vpop.f32.mrb[0].mxu0
          %v2013 = vadd.f32 %v1970, %v2012
          %v2014 = vpop.f32.mrb[0].mxu0
          %v2015 = vadd.f32 %v1972, %v2014
          %v2016 = vpop.f32.mrb[0].mxu0
          %v2017 = vadd.f32 %v1974, %v2016
          %2018 = vdwg.mxu0
          %2019 = vmatprep.subr.bf16.mxu0 %v632
          %2020 = vmatpush1.bf16.msra.mxu0 %v631
          %2021 = vmatprep.subr.bf16.mxu0 %v638
          %2022 = vmatpush1.bf16.msra.mxu0 %v637
          %2023 = vmatprep.subr.bf16.mxu0 %v644
          %2024 = vmatpush1.bf16.msra.mxu0 %v643
          %2025 = vmatprep.subr.bf16.mxu0 %v650
          %2026 = vmatpush1.bf16.msra.mxu0 %v649
          %2027 = vmatprep.subr.bf16.mxu0 %v656
          %2028 = vmatpush1.bf16.msra.mxu0 %v655
          %2029 = vmatprep.subr.bf16.mxu0 %v662
          %2030 = vmatpush1.bf16.msra.mxu0 %v661
          %2031 = vmatprep.subr.bf16.mxu0 %v668
          %2032 = vmatpush1.bf16.msra.mxu0 %v667
          %2033 = vmatprep.subr.bf16.mxu0 %v674
          %2034 = vmatpush1.bf16.msra.mxu0 %v673
          %2035 = vmatprep.subr.bf16.mxu0 %v680
          %2036 = vmatpush1.bf16.msra.mxu0 %v679
          %2037 = vmatprep.subr.bf16.mxu0 %v686
          %2038 = vmatpush1.bf16.msra.mxu0 %v685
          %2039 = vmatprep.subr.bf16.mxu0 %v692
          %2040 = vmatpush1.bf16.msra.mxu0 %v691
          %2041 = vmatprep.subr.bf16.mxu0 %v698
          %2042 = vmatpush1.bf16.msra.mxu0 %v697
          %2043 = vmatprep.subr.bf16.mxu0 %v704
          %2044 = vmatpush1.bf16.msra.mxu0 %v703
          %2045 = vmatprep.subr.bf16.mxu0 %v710
          %2046 = vmatpush1.bf16.msra.mxu0 %v709
          %2047 = vmatprep.subr.bf16.mxu0 %v716
          %2048 = vmatpush1.bf16.msra.mxu0 %v715
          %2049 = vmatprep.subr.bf16.mxu0 %v722
          %2050 = vmatpush1.bf16.msra.mxu0 %v721
          %2051 = vmatprep.mubr.bf16.mxu0 %v1885
          %2052 = vmatmul.mubr.bf16.gmra.mrb[0].mxu0 %v1884
          %v2053 = vpop.f32.mrb[0].mxu0
          %v2054 = vadd.f32 0.0, %v2053
          %v2055 = vpop.f32.mrb[0].mxu0
          %v2056 = vadd.f32 0.0, %v2055
          %v2057 = vpop.f32.mrb[0].mxu0
          %v2058 = vadd.f32 0.0, %v2057
          %v2059 = vpop.f32.mrb[0].mxu0
          %v2060 = vadd.f32 0.0, %v2059
          %2061 = vdwg.mxu0
          %2062 = vmatprep.subr.bf16.mxu0 %v728
          %2063 = vmatpush1.bf16.msra.mxu0 %v727
          %2064 = vmatprep.subr.bf16.mxu0 %v734
          %2065 = vmatpush1.bf16.msra.mxu0 %v733
          %2066 = vmatprep.subr.bf16.mxu0 %v740
          %2067 = vmatpush1.bf16.msra.mxu0 %v739
          %2068 = vmatprep.subr.bf16.mxu0 %v746
          %2069 = vmatpush1.bf16.msra.mxu0 %v745
          %2070 = vmatprep.subr.bf16.mxu0 %v752
          %2071 = vmatpush1.bf16.msra.mxu0 %v751
          %2072 = vmatprep.subr.bf16.mxu0 %v758
          %2073 = vmatpush1.bf16.msra.mxu0 %v757
          %2074 = vmatprep.subr.bf16.mxu0 %v764
          %2075 = vmatpush1.bf16.msra.mxu0 %v763
          %2076 = vmatprep.subr.bf16.mxu0 %v770
          %2077 = vmatpush1.bf16.msra.mxu0 %v769
          %2078 = vmatprep.subr.bf16.mxu0 %v776
          %2079 = vmatpush1.bf16.msra.mxu0 %v775
          %2080 = vmatprep.subr.bf16.mxu0 %v782
          %2081 = vmatpush1.bf16.msra.mxu0 %v781
          %2082 = vmatprep.subr.bf16.mxu0 %v788
          %2083 = vmatpush1.bf16.msra.mxu0 %v787
          %2084 = vmatprep.subr.bf16.mxu0 %v794
          %2085 = vmatpush1.bf16.msra.mxu0 %v793
          %2086 = vmatprep.subr.bf16.mxu0 %v800
          %2087 = vmatpush1.bf16.msra.mxu0 %v799
          %2088 = vmatprep.subr.bf16.mxu0 %v806
          %2089 = vmatpush1.bf16.msra.mxu0 %v805
          %2090 = vmatprep.subr.bf16.mxu0 %v812
          %2091 = vmatpush1.bf16.msra.mxu0 %v811
          %2092 = vmatprep.subr.bf16.mxu0 %v818
          %2093 = vmatpush1.bf16.msra.mxu0 %v817
          %2094 = vmatprep.mubr.bf16.mxu0 %v1887
          %2095 = vmatmul.mubr.bf16.gmra.mrb[0].mxu0 %v1886
          %v2096 = vpop.f32.mrb[0].mxu0
          %v2097 = vadd.f32 %v2054, %v2096
          %v2098 = vpop.f32.mrb[0].mxu0
          %v2099 = vadd.f32 %v2056, %v2098
          %v2100 = vpop.f32.mrb[0].mxu0
          %v2101 = vadd.f32 %v2058, %v2100
          %v2102 = vpop.f32.mrb[0].mxu0
          %v2103 = vadd.f32 %v2060, %v2102
          %2104 = vdwg.mxu0
          %2105 = vmatprep.subr.bf16.mxu0 %v824
          %2106 = vmatpush1.bf16.msra.mxu0 %v823
          %2107 = vmatprep.subr.bf16.mxu0 %v830
          %2108 = vmatpush1.bf16.msra.mxu0 %v829
          %2109 = vmatprep.subr.bf16.mxu0 %v836
          %2110 = vmatpush1.bf16.msra.mxu0 %v835
          %2111 = vmatprep.subr.bf16.mxu0 %v842
          %2112 = vmatpush1.bf16.msra.mxu0 %v841
          %2113 = vmatprep.subr.bf16.mxu0 %v848
          %2114 = vmatpush1.bf16.msra.mxu0 %v847
          %2115 = vmatprep.subr.bf16.mxu0 %v854
          %2116 = vmatpush1.bf16.msra.mxu0 %v853
          %2117 = vmatprep.subr.bf16.mxu0 %v860
          %2118 = vmatpush1.bf16.msra.mxu0 %v859
          %2119 = vmatprep.subr.bf16.mxu0 %v866
          %2120 = vmatpush1.bf16.msra.mxu0 %v865
          %2121 = vmatprep.subr.bf16.mxu0 %v872
          %2122 = vmatpush1.bf16.msra.mxu0 %v871
          %2123 = vmatprep.subr.bf16.mxu0 %v878
          %2124 = vmatpush1.bf16.msra.mxu0 %v877
          %2125 = vmatprep.subr.bf16.mxu0 %v884
          %2126 = vmatpush1.bf16.msra.mxu0 %v883
          %2127 = vmatprep.subr.bf16.mxu0 %v890
          %2128 = vmatpush1.bf16.msra.mxu0 %v889
          %2129 = vmatprep.subr.bf16.mxu0 %v896
          %2130 = vmatpush1.bf16.msra.mxu0 %v895
          %2131 = vmatprep.subr.bf16.mxu0 %v902
          %2132 = vmatpush1.bf16.msra.mxu0 %v901
          %2133 = vmatprep.subr.bf16.mxu0 %v908
          %2134 = vmatpush1.bf16.msra.mxu0 %v907
          %2135 = vmatprep.subr.bf16.mxu0 %v914
          %2136 = vmatpush1.bf16.msra.mxu0 %v913
          %2137 = vmatprep.mubr.bf16.mxu0 %v1889
          %2138 = vmatmul.mubr.bf16.gmra.mrb[0].mxu0 %v1888
          %v2139 = vpop.f32.mrb[0].mxu0
          %v2140 = vadd.f32 %v2097, %v2139
          %v2141 = vpop.f32.mrb[0].mxu0
          %v2142 = vadd.f32 %v2099, %v2141
          %v2143 = vpop.f32.mrb[0].mxu0
          %v2144 = vadd.f32 %v2101, %v2143
          %v2145 = vpop.f32.mrb[0].mxu0
          %v2146 = vadd.f32 %v2103, %v2145
          %2147 = vdwg.mxu0
          %2148 = vmatprep.subr.bf16.mxu0 %v634
          %2149 = vmatpush1.bf16.msra.mxu0 %v633
          %2150 = vmatprep.subr.bf16.mxu0 %v640
          %2151 = vmatpush1.bf16.msra.mxu0 %v639
          %2152 = vmatprep.subr.bf16.mxu0 %v646
          %2153 = vmatpush1.bf16.msra.mxu0 %v645
          %2154 = vmatprep.subr.bf16.mxu0 %v652
          %2155 = vmatpush1.bf16.msra.mxu0 %v651
          %2156 = vmatprep.subr.bf16.mxu0 %v658
          %2157 = vmatpush1.bf16.msra.mxu0 %v657
          %2158 = vmatprep.subr.bf16.mxu0 %v664
          %2159 = vmatpush1.bf16.msra.mxu0 %v663
          %2160 = vmatprep.subr.bf16.mxu0 %v670
          %2161 = vmatpush1.bf16.msra.mxu0 %v669
          %2162 = vmatprep.subr.bf16.mxu0 %v676
          %2163 = vmatpush1.bf16.msra.mxu0 %v675
          %2164 = vmatprep.subr.bf16.mxu0 %v682
          %2165 = vmatpush1.bf16.msra.mxu0 %v681
          %2166 = vmatprep.subr.bf16.mxu0 %v688
          %2167 = vmatpush1.bf16.msra.mxu0 %v687
          %2168 = vmatprep.subr.bf16.mxu0 %v694
          %2169 = vmatpush1.bf16.msra.mxu0 %v693
          %2170 = vmatprep.subr.bf16.mxu0 %v700
          %2171 = vmatpush1.bf16.msra.mxu0 %v699
          %2172 = vmatprep.subr.bf16.mxu0 %v706
          %2173 = vmatpush1.bf16.msra.mxu0 %v705
          %2174 = vmatprep.subr.bf16.mxu0 %v712
          %2175 = vmatpush1.bf16.msra.mxu0 %v711
          %2176 = vmatprep.subr.bf16.mxu0 %v718
          %2177 = vmatpush1.bf16.msra.mxu0 %v717
          %2178 = vmatprep.subr.bf16.mxu0 %v724
          %2179 = vmatpush1.bf16.msra.mxu0 %v723
          %2180 = vmatprep.mubr.bf16.mxu0 %v1885
          %2181 = vmatmul.mubr.bf16.gmra.mrb[0].mxu0 %v1884
          %v2182 = vpop.f32.mrb[0].mxu0
          %v2183 = vadd.f32 0.0, %v2182
          %v2184 = vpop.f32.mrb[0].mxu0
          %v2185 = vadd.f32 0.0, %v2184
          %v2186 = vpop.f32.mrb[0].mxu0
          %v2187 = vadd.f32 0.0, %v2186
          %v2188 = vpop.f32.mrb[0].mxu0
          %v2189 = vadd.f32 0.0, %v2188
          %2190 = vdwg.mxu0
          %2191 = vmatprep.subr.bf16.mxu0 %v730
          %2192 = vmatpush1.bf16.msra.mxu0 %v729
          %2193 = vmatprep.subr.bf16.mxu0 %v736
          %2194 = vmatpush1.bf16.msra.mxu0 %v735
          %2195 = vmatprep.subr.bf16.mxu0 %v742
          %2196 = vmatpush1.bf16.msra.mxu0 %v741
          %2197 = vmatprep.subr.bf16.mxu0 %v748
          %2198 = vmatpush1.bf16.msra.mxu0 %v747
          %2199 = vmatprep.subr.bf16.mxu0 %v754
          %2200 = vmatpush1.bf16.msra.mxu0 %v753
          %2201 = vmatprep.subr.bf16.mxu0 %v760
          %2202 = vmatpush1.bf16.msra.mxu0 %v759
          %2203 = vmatprep.subr.bf16.mxu0 %v766
          %2204 = vmatpush1.bf16.msra.mxu0 %v765
          %2205 = vmatprep.subr.bf16.mxu0 %v772
          %2206 = vmatpush1.bf16.msra.mxu0 %v771
          %2207 = vmatprep.subr.bf16.mxu0 %v778
          %2208 = vmatpush1.bf16.msra.mxu0 %v777
          %2209 = vmatprep.subr.bf16.mxu0 %v784
          %2210 = vmatpush1.bf16.msra.mxu0 %v783
          %2211 = vmatprep.subr.bf16.mxu0 %v790
          %2212 = vmatpush1.bf16.msra.mxu0 %v789
          %2213 = vmatprep.subr.bf16.mxu0 %v796
          %2214 = vmatpush1.bf16.msra.mxu0 %v795
          %2215 = vmatprep.subr.bf16.mxu0 %v802
          %2216 = vmatpush1.bf16.msra.mxu0 %v801
          %2217 = vmatprep.subr.bf16.mxu0 %v808
          %2218 = vmatpush1.bf16.msra.mxu0 %v807
          %2219 = vmatprep.subr.bf16.mxu0 %v814
          %2220 = vmatpush1.bf16.msra.mxu0 %v813
          %2221 = vmatprep.subr.bf16.mxu0 %v820
          %2222 = vmatpush1.bf16.msra.mxu0 %v819
          %2223 = vmatprep.mubr.bf16.mxu0 %v1887
          %2224 = vmatmul.mubr.bf16.gmra.mrb[0].mxu0 %v1886
          %v2225 = vpop.f32.mrb[0].mxu0
          %v2226 = vadd.f32 %v2183, %v2225
          %v2227 = vpop.f32.mrb[0].mxu0
          %v2228 = vadd.f32 %v2185, %v2227
          %v2229 = vpop.f32.mrb[0].mxu0
          %v2230 = vadd.f32 %v2187, %v2229
          %v2231 = vpop.f32.mrb[0].mxu0
          %v2232 = vadd.f32 %v2189, %v2231
          %2233 = vdwg.mxu0
          %2234 = vmatprep.subr.bf16.mxu0 %v826
          %2235 = vmatpush1.bf16.msra.mxu0 %v825
          %2236 = vmatprep.subr.bf16.mxu0 %v832
          %2237 = vmatpush1.bf16.msra.mxu0 %v831
          %2238 = vmatprep.subr.bf16.mxu0 %v838
          %2239 = vmatpush1.bf16.msra.mxu0 %v837
          %2240 = vmatprep.subr.bf16.mxu0 %v844
          %2241 = vmatpush1.bf16.msra.mxu0 %v843
          %2242 = vmatprep.subr.bf16.mxu0 %v850
          %2243 = vmatpush1.bf16.msra.mxu0 %v849
          %2244 = vmatprep.subr.bf16.mxu0 %v856
          %2245 = vmatpush1.bf16.msra.mxu0 %v855
          %2246 = vmatprep.subr.bf16.mxu0 %v862
          %2247 = vmatpush1.bf16.msra.mxu0 %v861
          %2248 = vmatprep.subr.bf16.mxu0 %v868
          %2249 = vmatpush1.bf16.msra.mxu0 %v867
          %2250 = vmatprep.subr.bf16.mxu0 %v874
          %2251 = vmatpush1.bf16.msra.mxu0 %v873
          %2252 = vmatprep.subr.bf16.mxu0 %v880
          %2253 = vmatpush1.bf16.msra.mxu0 %v879
          %2254 = vmatprep.subr.bf16.mxu0 %v886
          %2255 = vmatpush1.bf16.msra.mxu0 %v885
          %2256 = vmatprep.subr.bf16.mxu0 %v892
          %2257 = vmatpush1.bf16.msra.mxu0 %v891
          %2258 = vmatprep.subr.bf16.mxu0 %v898
          %2259 = vmatpush1.bf16.msra.mxu0 %v897
          %2260 = vmatprep.subr.bf16.mxu0 %v904
          %2261 = vmatpush1.bf16.msra.mxu0 %v903
          %2262 = vmatprep.subr.bf16.mxu0 %v910
          %2263 = vmatpush1.bf16.msra.mxu0 %v909
          %2264 = vmatprep.subr.bf16.mxu0 %v916
          %2265 = vmatpush1.bf16.msra.mxu0 %v915
          %2266 = vmatprep.mubr.bf16.mxu0 %v1889
          %2267 = vmatmul.mubr.bf16.gmra.mrb[0].mxu0 %v1888
          %v2268 = vpop.f32.mrb[0].mxu0
          %v2269 = vadd.f32 %v2226, %v2268
          %v2270 = vpop.f32.mrb[0].mxu0
          %v2271 = vadd.f32 %v2228, %v2270
          %v2272 = vpop.f32.mrb[0].mxu0
          %v2273 = vadd.f32 %v2230, %v2272
          %v2274 = vpop.f32.mrb[0].mxu0
          %v2275 = vadd.f32 %v2232, %v2274
          %2276 = vdwg.mxu0
          %v2278 = vlaneseq
          %v2279 = vshrl.u32 %v2278, 7
          %v2280 = vsub.s32 0, %v2279
          %v2281 = vrot.slane %v917, %v2280
          %v2282 = vlaneseq
          %v2283 = vshrl.u32 %v2282, 7
          %v2284 = vsub.s32 1, %v2283
          %v2285 = vrot.slane %v917, %v2284
          %v2286 = vlaneseq
          %v2287 = vshrl.u32 %v2286, 7
          %v2288 = vsub.s32 2, %v2287
          %v2289 = vrot.slane %v917, %v2288
          %v2290 = vlaneseq
          %v2291 = vshrl.u32 %v2290, 7
          %v2292 = vsub.s32 3, %v2291
          %v2293 = vrot.slane %v917, %v2292
          %v2294 = vlaneseq
          %v2295 = vshrl.u32 %v2294, 7
          %v2296 = vsub.s32 4, %v2295
          %v2297 = vrot.slane %v917, %v2296
          %v2298 = vlaneseq
          %v2299 = vshrl.u32 %v2298, 7
          %v2300 = vsub.s32 5, %v2299
          %v2301 = vrot.slane %v917, %v2300
          %v2308 = vmul.f32 %v2011, %v2281
          %v2309 = vmul.f32 %v2013, %v2285
          %v2310 = vmul.f32 %v2140, %v2289
          %v2311 = vmul.f32 %v2142, %v2293
          %v2312 = vmul.f32 %v2269, %v2297
          %v2313 = vmul.f32 %v2271, %v2301
          %v2314 = vmul.f32 %v2015, %v2281
          %v2315 = vmul.f32 %v2017, %v2285
          %v2316 = vmul.f32 %v2144, %v2289
          %v2317 = vmul.f32 %v2146, %v2293
          %v2318 = vmul.f32 %v2273, %v2297
          %v2319 = vmul.f32 %v2275, %v2301
          %v2320 = vld [vmem:[#allocation2] sm:$0xff]
          %v2321 = vld [vmem:[#allocation2 + $0x8] sm:$0xf]
          %v2322 = vld [vmem:[#allocation3] sm:$0xff]
          %v2323 = vld [vmem:[#allocation3 + $0x8] sm:$0xff]
          %v2324 = vld [vmem:[#allocation3 + $0x10] sm:$0xff]
          %v2325 = vld [vmem:[#allocation3 + $0x18] sm:$0xff]
          %v2326 = vld [vmem:[#allocation3 + $0x20] sm:$0xff]
          %v2327 = vld [vmem:[#allocation3 + $0x28] sm:$0xff]
          %v2328 = vld [vmem:[#allocation3 + $0x30] sm:$0xff]
          %v2329 = vld [vmem:[#allocation3 + $0x38] sm:$0xff]
          %v2330 = vld [vmem:[#allocation3 + $0x40] sm:$0xff]
          %v2331 = vld [vmem:[#allocation3 + $0x48] sm:$0xff]
          %v2332 = vld [vmem:[#allocation3 + $0x50] sm:$0xff]
          %v2333 = vld [vmem:[#allocation3 + $0x58] sm:$0xff]
          %v2336 = vcombine.high %v2320, %v2320
          %v2338 = vunpack.c.l.s4 1983009808
          %v2339 = vunpack.c.0.s8 %v2338
          %v2340 = vlaneseq
          %v2341 = vshrl.u32 %v2340, 7
          %v2342 = vsub.s32 %v2339, %v2341
          %v2343 = vrot.slane %v2320, %v2342
          %v2345 = vunpack.c.l.s4 1983009808
          %v2346 = vunpack.c.0.s8 %v2345
          %v2347 = vlaneseq
          %v2348 = vshrl.u32 %v2347, 7
          %v2349 = vsub.s32 %v2346, %v2348
          %v2350 = vrot.slane %v2336, %v2349
          %v2351 = vcombine.high %v2343, %v2343
          %v2352 = vcombine.high %v2350, %v2350
          %v2354 = vunpack.c.l.s4 1983009808
          %v2355 = vunpack.c.0.s8 %v2354
          %v2356 = vlaneseq
          %v2357 = vshrl.u32 %v2356, 7
          %v2358 = vsub.s32 %v2355, %v2357
          %v2359 = vrot.slane %v2321, %v2358
          %v2360 = vcombine.high %v2359, %v2359
          %2367 = vmatprep.subr.mxu0 %v2323
          %2368 = vmatpush1.xpose.msra.mxu0 %v2322
          %2369 = vmatprep.subr.mxu0 %v2329
          %2370 = vmatpush1.xpose.msra.mxu0 %v2328
          %2371 = vmatprep.subr.mxu0 0.0
          %2372 = vmatpush1.xpose.msra.mxu0 0.0
          %2373 = vmatprep.subr.mxu0 0.0
          %2374 = vmatpush1.xpose.msra.mxu0 0.0
          %2375 = vmatprep.subr.mxu0 0.0
          %2376 = vmatpush1.xpose.msra.mxu0 0.0
          %2377 = vmatprep.subr.mxu0 0.0
          %2378 = vmatpush1.xpose.msra.mxu0 0.0
          %2379 = vmatprep.subr.mxu0 0.0
          %2380 = vmatpush1.xpose.msra.mxu0 0.0
          %2381 = vmatprep.subr.mxu0 0.0
          %2382 = vmatpush1.xpose.msra.mxu0 0.0
          %2383 = vmatprep.subr.mxu0 0.0
          %2384 = vmatpush1.xpose.msra.mxu0 0.0
          %2385 = vmatprep.subr.mxu0 0.0
          %2386 = vmatpush1.xpose.msra.mxu0 0.0
          %2387 = vmatprep.subr.mxu0 0.0
          %2388 = vmatpush1.xpose.msra.mxu0 0.0
          %2389 = vmatprep.subr.mxu0 0.0
          %2390 = vmatpush1.xpose.msra.mxu0 0.0
          %2391 = vmatprep.subr.mxu0 0.0
          %2392 = vmatpush1.xpose.msra.mxu0 0.0
          %2393 = vmatprep.subr.mxu0 0.0
          %2394 = vmatpush1.xpose.msra.mxu0 0.0
          %2395 = vmatprep.subr.mxu0 0.0
          %2396 = vmatpush1.xpose.msra.mxu0 0.0
          %2397 = vmatprep.subr.mxu0 0.0
          %2398 = vmatpush1.xpose.msra.mxu0 0.0
          %2399 = vmatprep.subr.mxu0 0.0
          %2400 = vmatpush1.xpose.msra.mxu0 0.0
          %2401 = vmatprep.subr.mxu0 0.0
          %2402 = vmatpush1.xpose.msra.mxu0 0.0
          %2403 = vmatprep.subr.mxu0 0.0
          %2404 = vmatpush1.xpose.msra.mxu0 0.0
          %2405 = vmatprep.subr.mxu0 0.0
          %2406 = vmatpush1.xpose.msra.mxu0 0.0
          %2407 = vmatprep.subr.mxu0 0.0
          %2408 = vmatpush1.xpose.msra.mxu0 0.0
          %2409 = vmatprep.subr.mxu0 0.0
          %2410 = vmatpush1.xpose.msra.mxu0 0.0
          %2411 = vmatprep.subr.mxu0 0.0
          %2412 = vmatpush1.xpose.msra.mxu0 0.0
          %2413 = vmatprep.subr.mxu0 0.0
          %2414 = vmatpush1.xpose.msra.mxu0 0.0
          %2415 = vmatprep.subr.mxu0 0.0
          %2416 = vmatpush1.xpose.msra.mxu0 0.0
          %2417 = vmatprep.subr.mxu0 0.0
          %2418 = vmatpush1.xpose.msra.mxu0 0.0
          %2419 = vmatprep.subr.mxu0 0.0
          %2420 = vmatpush1.xpose.msra.mxu0 0.0
          %2421 = vmatprep.subr.mxu0 0.0
          %2422 = vmatpush1.xpose.msra.mxu0 0.0
          %2423 = vmatprep.subr.mxu0 0.0
          %2424 = vmatpush1.xpose.msra.mxu0 0.0
          %2425 = vmatprep.subr.mxu0 0.0
          %2426 = vmatpush1.xpose.msra.mxu0 0.0
          %2427 = vmatprep.subr.mxu0 0.0
          %2428 = vmatpush1.xpose.msra.mxu0 0.0
          %2429 = vmatprep.subr.mxu0 0.0
          %2430 = vmatpush1.xpose.msra.mxu0 0.0
          %2431 = vmatprep.mubr.f32.mxu0 %v2351
          %2432 = vmatmul.mubr.f32.gmra.mrb[0].mxu0 %v2343
          %v2433 = vpop.f32.mrb[0].mxu0
          %v2434 = vadd.f32 0.0, %v2433
          %v2435 = vpop.f32.mrb[0].mxu0
          %2436 = vdwg.mxu0
          %2437 = vmatprep.subr.mxu0 %v2325
          %2438 = vmatpush1.xpose.msra.mxu0 %v2324
          %2439 = vmatprep.subr.mxu0 %v2331
          %2440 = vmatpush1.xpose.msra.mxu0 %v2330
          %2441 = vmatprep.subr.mxu0 0.0
          %2442 = vmatpush1.xpose.msra.mxu0 0.0
          %2443 = vmatprep.subr.mxu0 0.0
          %2444 = vmatpush1.xpose.msra.mxu0 0.0
          %2445 = vmatprep.subr.mxu0 0.0
          %2446 = vmatpush1.xpose.msra.mxu0 0.0
          %2447 = vmatprep.subr.mxu0 0.0
          %2448 = vmatpush1.xpose.msra.mxu0 0.0
          %2449 = vmatprep.subr.mxu0 0.0
          %2450 = vmatpush1.xpose.msra.mxu0 0.0
          %2451 = vmatprep.subr.mxu0 0.0
          %2452 = vmatpush1.xpose.msra.mxu0 0.0
          %2453 = vmatprep.subr.mxu0 0.0
          %2454 = vmatpush1.xpose.msra.mxu0 0.0
          %2455 = vmatprep.subr.mxu0 0.0
          %2456 = vmatpush1.xpose.msra.mxu0 0.0
          %2457 = vmatprep.subr.mxu0 0.0
          %2458 = vmatpush1.xpose.msra.mxu0 0.0
          %2459 = vmatprep.subr.mxu0 0.0
          %2460 = vmatpush1.xpose.msra.mxu0 0.0
          %2461 = vmatprep.subr.mxu0 0.0
          %2462 = vmatpush1.xpose.msra.mxu0 0.0
          %2463 = vmatprep.subr.mxu0 0.0
          %2464 = vmatpush1.xpose.msra.mxu0 0.0
          %2465 = vmatprep.subr.mxu0 0.0
          %2466 = vmatpush1.xpose.msra.mxu0 0.0
          %2467 = vmatprep.subr.mxu0 0.0
          %2468 = vmatpush1.xpose.msra.mxu0 0.0
          %2469 = vmatprep.subr.mxu0 0.0
          %2470 = vmatpush1.xpose.msra.mxu0 0.0
          %2471 = vmatprep.subr.mxu0 0.0
          %2472 = vmatpush1.xpose.msra.mxu0 0.0
          %2473 = vmatprep.subr.mxu0 0.0
          %2474 = vmatpush1.xpose.msra.mxu0 0.0
          %2475 = vmatprep.subr.mxu0 0.0
          %2476 = vmatpush1.xpose.msra.mxu0 0.0
          %2477 = vmatprep.subr.mxu0 0.0
          %2478 = vmatpush1.xpose.msra.mxu0 0.0
          %2479 = vmatprep.subr.mxu0 0.0
          %2480 = vmatpush1.xpose.msra.mxu0 0.0
          %2481 = vmatprep.subr.mxu0 0.0
          %2482 = vmatpush1.xpose.msra.mxu0 0.0
          %2483 = vmatprep.subr.mxu0 0.0
          %2484 = vmatpush1.xpose.msra.mxu0 0.0
          %2485 = vmatprep.subr.mxu0 0.0
          %2486 = vmatpush1.xpose.msra.mxu0 0.0
          %2487 = vmatprep.subr.mxu0 0.0
          %2488 = vmatpush1.xpose.msra.mxu0 0.0
          %2489 = vmatprep.subr.mxu0 0.0
          %2490 = vmatpush1.xpose.msra.mxu0 0.0
          %2491 = vmatprep.subr.mxu0 0.0
          %2492 = vmatpush1.xpose.msra.mxu0 0.0
          %2493 = vmatprep.subr.mxu0 0.0
          %2494 = vmatpush1.xpose.msra.mxu0 0.0
          %2495 = vmatprep.subr.mxu0 0.0
          %2496 = vmatpush1.xpose.msra.mxu0 0.0
          %2497 = vmatprep.subr.mxu0 0.0
          %2498 = vmatpush1.xpose.msra.mxu0 0.0
          %2499 = vmatprep.subr.mxu0 0.0
          %2500 = vmatpush1.xpose.msra.mxu0 0.0
          %2501 = vmatprep.mubr.f32.mxu0 %v2352
          %2502 = vmatmul.mubr.f32.gmra.mrb[0].mxu0 %v2350
          %v2503 = vpop.f32.mrb[0].mxu0
          %v2504 = vadd.f32 %v2434, %v2503
          %v2505 = vpop.f32.mrb[0].mxu0
          %2506 = vdwg.mxu0
          %2507 = vmatprep.subr.mxu0 %v2327
          %2508 = vmatpush1.xpose.msra.mxu0 %v2326
          %2509 = vmatprep.subr.mxu0 %v2333
          %2510 = vmatpush1.xpose.msra.mxu0 %v2332
          %2511 = vmatprep.subr.mxu0 0.0
          %2512 = vmatpush1.xpose.msra.mxu0 0.0
          %2513 = vmatprep.subr.mxu0 0.0
          %2514 = vmatpush1.xpose.msra.mxu0 0.0
          %2515 = vmatprep.subr.mxu0 0.0
          %2516 = vmatpush1.xpose.msra.mxu0 0.0
          %2517 = vmatprep.subr.mxu0 0.0
          %2518 = vmatpush1.xpose.msra.mxu0 0.0
          %2519 = vmatprep.subr.mxu0 0.0
          %2520 = vmatpush1.xpose.msra.mxu0 0.0
          %2521 = vmatprep.subr.mxu0 0.0
          %2522 = vmatpush1.xpose.msra.mxu0 0.0
          %2523 = vmatprep.subr.mxu0 0.0
          %2524 = vmatpush1.xpose.msra.mxu0 0.0
          %2525 = vmatprep.subr.mxu0 0.0
          %2526 = vmatpush1.xpose.msra.mxu0 0.0
          %2527 = vmatprep.subr.mxu0 0.0
          %2528 = vmatpush1.xpose.msra.mxu0 0.0
          %2529 = vmatprep.subr.mxu0 0.0
          %2530 = vmatpush1.xpose.msra.mxu0 0.0
          %2531 = vmatprep.subr.mxu0 0.0
          %2532 = vmatpush1.xpose.msra.mxu0 0.0
          %2533 = vmatprep.subr.mxu0 0.0
          %2534 = vmatpush1.xpose.msra.mxu0 0.0
          %2535 = vmatprep.subr.mxu0 0.0
          %2536 = vmatpush1.xpose.msra.mxu0 0.0
          %2537 = vmatprep.subr.mxu0 0.0
          %2538 = vmatpush1.xpose.msra.mxu0 0.0
          %2539 = vmatprep.subr.mxu0 0.0
          %2540 = vmatpush1.xpose.msra.mxu0 0.0
          %2541 = vmatprep.subr.mxu0 0.0
          %2542 = vmatpush1.xpose.msra.mxu0 0.0
          %2543 = vmatprep.subr.mxu0 0.0
          %2544 = vmatpush1.xpose.msra.mxu0 0.0
          %2545 = vmatprep.subr.mxu0 0.0
          %2546 = vmatpush1.xpose.msra.mxu0 0.0
          %2547 = vmatprep.subr.mxu0 0.0
          %2548 = vmatpush1.xpose.msra.mxu0 0.0
          %2549 = vmatprep.subr.mxu0 0.0
          %2550 = vmatpush1.xpose.msra.mxu0 0.0
          %2551 = vmatprep.subr.mxu0 0.0
          %2552 = vmatpush1.xpose.msra.mxu0 0.0
          %2553 = vmatprep.subr.mxu0 0.0
          %2554 = vmatpush1.xpose.msra.mxu0 0.0
          %2555 = vmatprep.subr.mxu0 0.0
          %2556 = vmatpush1.xpose.msra.mxu0 0.0
          %2557 = vmatprep.subr.mxu0 0.0
          %2558 = vmatpush1.xpose.msra.mxu0 0.0
          %2559 = vmatprep.subr.mxu0 0.0
          %2560 = vmatpush1.xpose.msra.mxu0 0.0
          %2561 = vmatprep.subr.mxu0 0.0
          %2562 = vmatpush1.xpose.msra.mxu0 0.0
          %2563 = vmatprep.subr.mxu0 0.0
          %2564 = vmatpush1.xpose.msra.mxu0 0.0
          %2565 = vmatprep.subr.mxu0 0.0
          %2566 = vmatpush1.xpose.msra.mxu0 0.0
          %2567 = vmatprep.subr.mxu0 0.0
          %2568 = vmatpush1.xpose.msra.mxu0 0.0
          %2569 = vmatprep.subr.mxu0 0.0
          %2570 = vmatpush1.xpose.msra.mxu0 0.0
          %2571 = vmatprep.mubr.f32.mxu0 %v2360
          %2572 = vmatmul.mubr.f32.gmra.mrb[0].mxu0 %v2359
          %v2573 = vpop.f32.mrb[0].mxu0
          %v2574 = vadd.f32 %v2504, %v2573
          %v2575 = vpop.f32.mrb[0].mxu0
          %2576 = vdwg.mxu0
          %v2577 = vmul.f32 %v2574, 0.03608439
          %v2578 = vld [vmem:[%s2] sm:$0x3]
          %v2579 = vadd.f32 %v2577, %v2578
          %vm2580 = vcmask 123904
          %v2581 = vsel %vm2580, %v2579, -inf
          %2582 = vmax.xlane.f32.xlu0 %v2581
          %v2583 = vpop.xlane.xlu0 %2582
          %v2584 = vsub.f32 %v2579, %v2583
          %v2585 = vmul.f32 %v2584, 1.442695
          %v2586 = vpow.pop %v2585
          %v2587 = vsel %vm2580, %v2586, 0.0
          %2588 = vadd.xlane.f32.xlu0 %v2587
          %v2589 = vpop.xlane.xlu0 %2588
          %v2590 = vrcp.pop %v2589
          %v2591 = vmul.f32 %v2586, %v2590
          %vm2592 = vcmask 130048
          %v2594 = vsel %vm2592, %v2591, 0
          %2596 = vmatprep.subr.mxu0 %v2309
          %2597 = vmatpush1.msra.mxu0 %v2308
          %2598 = vmatprep.subr.mxu0 %v2315
          %2599 = vmatpush1.msra.mxu0 %v2314
          %2600 = vmatprep.subr.mxu0 0.0
          %2601 = vmatpush1.msra.mxu0 0.0
          %2602 = vmatprep.subr.mxu0 0.0
          %2603 = vmatpush1.msra.mxu0 0.0
          %2604 = vmatprep.subr.mxu0 0.0
          %2605 = vmatpush1.msra.mxu0 0.0
          %2606 = vmatprep.subr.mxu0 0.0
          %2607 = vmatpush1.msra.mxu0 0.0
          %2608 = vmatprep.subr.mxu0 0.0
          %2609 = vmatpush1.msra.mxu0 0.0
          %2610 = vmatprep.subr.mxu0 0.0
          %2611 = vmatpush1.msra.mxu0 0.0
          %2612 = vmatprep.subr.mxu0 0.0
          %2613 = vmatpush1.msra.mxu0 0.0
          %2614 = vmatprep.subr.mxu0 0.0
          %2615 = vmatpush1.msra.mxu0 0.0
          %2616 = vmatprep.subr.mxu0 0.0
          %2617 = vmatpush1.msra.mxu0 0.0
          %2618 = vmatprep.subr.mxu0 0.0
          %2619 = vmatpush1.msra.mxu0 0.0
          %2620 = vmatprep.subr.mxu0 0.0
          %2621 = vmatpush1.msra.mxu0 0.0
          %2622 = vmatprep.subr.mxu0 0.0
          %2623 = vmatpush1.msra.mxu0 0.0
          %2624 = vmatprep.subr.mxu0 0.0
          %2625 = vmatpush1.msra.mxu0 0.0
          %2626 = vmatprep.subr.mxu0 0.0
          %2627 = vmatpush1.msra.mxu0 0.0
          %2628 = vmatprep.subr.mxu0 0.0
          %2629 = vmatpush1.msra.mxu0 0.0
          %2630 = vmatprep.subr.mxu0 0.0
          %2631 = vmatpush1.msra.mxu0 0.0
          %2632 = vmatprep.subr.mxu0 0.0
          %2633 = vmatpush1.msra.mxu0 0.0
          %2634 = vmatprep.subr.mxu0 0.0
          %2635 = vmatpush1.msra.mxu0 0.0
          %2636 = vmatprep.subr.mxu0 0.0
          %2637 = vmatpush1.msra.mxu0 0.0
          %2638 = vmatprep.subr.mxu0 0.0
          %2639 = vmatpush1.msra.mxu0 0.0
          %2640 = vmatprep.subr.mxu0 0.0
          %2641 = vmatpush1.msra.mxu0 0.0
          %2642 = vmatprep.subr.mxu0 0.0
          %2643 = vmatpush1.msra.mxu0 0.0
          %2644 = vmatprep.subr.mxu0 0.0
          %2645 = vmatpush1.msra.mxu0 0.0
          %2646 = vmatprep.subr.mxu0 0.0
          %2647 = vmatpush1.msra.mxu0 0.0
          %2648 = vmatprep.subr.mxu0 0.0
          %2649 = vmatpush1.msra.mxu0 0.0
          %2650 = vmatprep.subr.mxu0 0.0
          %2651 = vmatpush1.msra.mxu0 0.0
          %2652 = vmatprep.subr.mxu0 0.0
          %2653 = vmatpush1.msra.mxu0 0.0
          %2654 = vmatprep.subr.mxu0 0.0
          %2655 = vmatpush1.msra.mxu0 0.0
          %2656 = vmatprep.subr.mxu0 0.0
          %2657 = vmatpush1.msra.mxu0 0.0
          %2658 = vmatprep.subr.mxu0 0.0
          %2659 = vmatpush1.msra.mxu0 0.0
          %2660 = vmatprep.mubr.f32.mxu0 0.0
          %2661 = vmatmul.mubr.f32.gmra.mrb[0].mxu0 %v2594
          %v2662 = vpop.f32.mrb[0].mxu0
          %v2663 = vadd.f32 0.0, %v2662
          %v2664 = vpop.f32.mrb[0].mxu0
          %v2665 = vadd.f32 0.0, %v2664
          %2666 = vdwg.mxu0
          %2667 = vmatprep.subr.mxu0 %v2311
          %2668 = vmatpush1.msra.mxu0 %v2310
          %2669 = vmatprep.subr.mxu0 %v2317
          %2670 = vmatpush1.msra.mxu0 %v2316
          %2671 = vmatprep.subr.mxu0 0.0
          %2672 = vmatpush1.msra.mxu0 0.0
          %2673 = vmatprep.subr.mxu0 0.0
          %2674 = vmatpush1.msra.mxu0 0.0
          %2675 = vmatprep.subr.mxu0 0.0
          %2676 = vmatpush1.msra.mxu0 0.0
          %2677 = vmatprep.subr.mxu0 0.0
          %2678 = vmatpush1.msra.mxu0 0.0
          %2679 = vmatprep.subr.mxu0 0.0
          %2680 = vmatpush1.msra.mxu0 0.0
          %2681 = vmatprep.subr.mxu0 0.0
          %2682 = vmatpush1.msra.mxu0 0.0
          %2683 = vmatprep.subr.mxu0 0.0
          %2684 = vmatpush1.msra.mxu0 0.0
          %2685 = vmatprep.subr.mxu0 0.0
          %2686 = vmatpush1.msra.mxu0 0.0
          %2687 = vmatprep.subr.mxu0 0.0
          %2688 = vmatpush1.msra.mxu0 0.0
          %2689 = vmatprep.subr.mxu0 0.0
          %2690 = vmatpush1.msra.mxu0 0.0
          %2691 = vmatprep.subr.mxu0 0.0
          %2692 = vmatpush1.msra.mxu0 0.0
          %2693 = vmatprep.subr.mxu0 0.0
          %2694 = vmatpush1.msra.mxu0 0.0
          %2695 = vmatprep.subr.mxu0 0.0
          %2696 = vmatpush1.msra.mxu0 0.0
          %2697 = vmatprep.subr.mxu0 0.0
          %2698 = vmatpush1.msra.mxu0 0.0
          %2699 = vmatprep.subr.mxu0 0.0
          %2700 = vmatpush1.msra.mxu0 0.0
          %2701 = vmatprep.subr.mxu0 0.0
          %2702 = vmatpush1.msra.mxu0 0.0
          %2703 = vmatprep.subr.mxu0 0.0
          %2704 = vmatpush1.msra.mxu0 0.0
          %2705 = vmatprep.subr.mxu0 0.0
          %2706 = vmatpush1.msra.mxu0 0.0
          %2707 = vmatprep.subr.mxu0 0.0
          %2708 = vmatpush1.msra.mxu0 0.0
          %2709 = vmatprep.subr.mxu0 0.0
          %2710 = vmatpush1.msra.mxu0 0.0
          %2711 = vmatprep.subr.mxu0 0.0
          %2712 = vmatpush1.msra.mxu0 0.0
          %2713 = vmatprep.subr.mxu0 0.0
          %2714 = vmatpush1.msra.mxu0 0.0
          %2715 = vmatprep.subr.mxu0 0.0
          %2716 = vmatpush1.msra.mxu0 0.0
          %2717 = vmatprep.subr.mxu0 0.0
          %2718 = vmatpush1.msra.mxu0 0.0
          %2719 = vmatprep.subr.mxu0 0.0
          %2720 = vmatpush1.msra.mxu0 0.0
          %2721 = vmatprep.subr.mxu0 0.0
          %2722 = vmatpush1.msra.mxu0 0.0
          %2723 = vmatprep.subr.mxu0 0.0
          %2724 = vmatpush1.msra.mxu0 0.0
          %2725 = vmatprep.subr.mxu0 0.0
          %2726 = vmatpush1.msra.mxu0 0.0
          %2727 = vmatprep.subr.mxu0 0.0
          %2728 = vmatpush1.msra.mxu0 0.0
          %2729 = vmatprep.subr.mxu0 0.0
          %2730 = vmatpush1.msra.mxu0 0.0
          %2731 = vmatprep.mubr.f32.mxu0 0.0
          %2732 = vmatmul.mubr.f32.gmra.mrb[0].mxu0 %v2594
          %v2733 = vpop.f32.mrb[0].mxu0
          %v2734 = vadd.f32 0.0, %v2733
          %v2735 = vpop.f32.mrb[0].mxu0
          %v2736 = vadd.f32 0.0, %v2735
          %2737 = vdwg.mxu0
          %2738 = vmatprep.subr.mxu0 %v2313
          %2739 = vmatpush1.msra.mxu0 %v2312
          %2740 = vmatprep.subr.mxu0 %v2319
          %2741 = vmatpush1.msra.mxu0 %v2318
          %2742 = vmatprep.subr.mxu0 0.0
          %2743 = vmatpush1.msra.mxu0 0.0
          %2744 = vmatprep.subr.mxu0 0.0
          %2745 = vmatpush1.msra.mxu0 0.0
          %2746 = vmatprep.subr.mxu0 0.0
          %2747 = vmatpush1.msra.mxu0 0.0
          %2748 = vmatprep.subr.mxu0 0.0
          %2749 = vmatpush1.msra.mxu0 0.0
          %2750 = vmatprep.subr.mxu0 0.0
          %2751 = vmatpush1.msra.mxu0 0.0
          %2752 = vmatprep.subr.mxu0 0.0
          %2753 = vmatpush1.msra.mxu0 0.0
          %2754 = vmatprep.subr.mxu0 0.0
          %2755 = vmatpush1.msra.mxu0 0.0
          %2756 = vmatprep.subr.mxu0 0.0
          %2757 = vmatpush1.msra.mxu0 0.0
          %2758 = vmatprep.subr.mxu0 0.0
          %2759 = vmatpush1.msra.mxu0 0.0
          %2760 = vmatprep.subr.mxu0 0.0
          %2761 = vmatpush1.msra.mxu0 0.0
          %2762 = vmatprep.subr.mxu0 0.0
          %2763 = vmatpush1.msra.mxu0 0.0
          %2764 = vmatprep.subr.mxu0 0.0
          %2765 = vmatpush1.msra.mxu0 0.0
          %2766 = vmatprep.subr.mxu0 0.0
          %2767 = vmatpush1.msra.mxu0 0.0
          %2768 = vmatprep.subr.mxu0 0.0
          %2769 = vmatpush1.msra.mxu0 0.0
          %2770 = vmatprep.subr.mxu0 0.0
          %2771 = vmatpush1.msra.mxu0 0.0
          %2772 = vmatprep.subr.mxu0 0.0
          %2773 = vmatpush1.msra.mxu0 0.0
          %2774 = vmatprep.subr.mxu0 0.0
          %2775 = vmatpush1.msra.mxu0 0.0
          %2776 = vmatprep.subr.mxu0 0.0
          %2777 = vmatpush1.msra.mxu0 0.0
          %2778 = vmatprep.subr.mxu0 0.0
          %2779 = vmatpush1.msra.mxu0 0.0
          %2780 = vmatprep.subr.mxu0 0.0
          %2781 = vmatpush1.msra.mxu0 0.0
          %2782 = vmatprep.subr.mxu0 0.0
          %2783 = vmatpush1.msra.mxu0 0.0
          %2784 = vmatprep.subr.mxu0 0.0
          %2785 = vmatpush1.msra.mxu0 0.0
          %2786 = vmatprep.subr.mxu0 0.0
          %2787 = vmatpush1.msra.mxu0 0.0
          %2788 = vmatprep.subr.mxu0 0.0
          %2789 = vmatpush1.msra.mxu0 0.0
          %2790 = vmatprep.subr.mxu0 0.0
          %2791 = vmatpush1.msra.mxu0 0.0
          %2792 = vmatprep.subr.mxu0 0.0
          %2793 = vmatpush1.msra.mxu0 0.0
          %2794 = vmatprep.subr.mxu0 0.0
          %2795 = vmatpush1.msra.mxu0 0.0
          %2796 = vmatprep.subr.mxu0 0.0
          %2797 = vmatpush1.msra.mxu0 0.0
          %2798 = vmatprep.subr.mxu0 0.0
          %2799 = vmatpush1.msra.mxu0 0.0
          %2800 = vmatprep.subr.mxu0 0.0
          %2801 = vmatpush1.msra.mxu0 0.0
          %2802 = vmatprep.mubr.f32.mxu0 0.0
          %2803 = vmatmul.mubr.f32.gmra.mrb[0].mxu0 %v2594
          %v2804 = vpop.f32.mrb[0].mxu0
          %v2805 = vadd.f32 0.0, %v2804
          %v2806 = vpop.f32.mrb[0].mxu0
          %v2807 = vadd.f32 0.0, %v2806
          %2808 = vdwg.mxu0
          %v2809 = vld [vmem:[#allocation8] sm:$0xff]
          %v2810 = vld [vmem:[#allocation8 + $0x8] sm:$0xff]
          %v2811 = vld [vmem:[#allocation8 + $0x10] sm:$0xff]
          %v2812 = vld [vmem:[#allocation8 + $0x18] sm:$0xff]
          %v2813 = vld [vmem:[#allocation8 + $0x20] sm:$0xff]
          %v2814 = vld [vmem:[#allocation8 + $0x28] sm:$0xff]
          %v2815 = vld [vmem:[#allocation8 + $0x30] sm:$0xff]
          %v2816 = vld [vmem:[#allocation8 + $0x38] sm:$0xff]
          %v2817 = vld [vmem:[#allocation8 + $0x40] sm:$0xff]
          %v2818 = vld [vmem:[#allocation8 + $0x48] sm:$0xff]
          %v2819 = vld [vmem:[#allocation8 + $0x50] sm:$0xff]
          %v2820 = vld [vmem:[#allocation8 + $0x58] sm:$0xff]
          %v2821 = vld [vmem:[#allocation8 + $0x60] sm:$0xff]
          %v2822 = vld [vmem:[#allocation8 + $0x68] sm:$0xff]
          %v2823 = vld [vmem:[#allocation8 + $0x70] sm:$0xff]
          %v2824 = vld [vmem:[#allocation8 + $0x78] sm:$0xff]
          %v2825 = vld [vmem:[#allocation8 + $0x80] sm:$0xff]
          %v2826 = vld [vmem:[#allocation8 + $0x88] sm:$0xff]
          %v2827 = vld [vmem:[#allocation8 + $0x90] sm:$0xff]
          %v2828 = vld [vmem:[#allocation8 + $0x98] sm:$0xff]
          %v2829 = vld [vmem:[#allocation8 + $0xa0] sm:$0xff]
          %v2830 = vld [vmem:[#allocation8 + $0xa8] sm:$0xff]
          %v2831 = vld [vmem:[#allocation8 + $0xb0] sm:$0xff]
          %v2832 = vld [vmem:[#allocation8 + $0xb8] sm:$0xff]
          %v2833 = vld [vmem:[#allocation8 + $0xc0] sm:$0xff]
          %v2834 = vld [vmem:[#allocation8 + $0xc8] sm:$0xff]
          %v2835 = vld [vmem:[#allocation8 + $0xd0] sm:$0xff]
          %v2836 = vld [vmem:[#allocation8 + $0xd8] sm:$0xff]
          %v2837 = vld [vmem:[#allocation8 + $0xe0] sm:$0xff]
          %v2838 = vld [vmem:[#allocation8 + $0xe8] sm:$0xff]
          %v2839 = vld [vmem:[#allocation8 + $0xf0] sm:$0xff]
          %v2840 = vld [vmem:[#allocation8 + $0xf8] sm:$0xff]
          %v2841 = vld [vmem:[#allocation8 + $0x100] sm:$0xff]
          %v2842 = vld [vmem:[#allocation8 + $0x108] sm:$0xff]
          %v2843 = vld [vmem:[#allocation8 + $0x110] sm:$0xff]
          %v2844 = vld [vmem:[#allocation8 + $0x118] sm:$0xff]
          %v2845 = vld [vmem:[#allocation8 + $0x120] sm:$0xff]
          %v2846 = vld [vmem:[#allocation8 + $0x128] sm:$0xff]
          %v2847 = vld [vmem:[#allocation8 + $0x130] sm:$0xff]
          %v2848 = vld [vmem:[#allocation8 + $0x138] sm:$0xff]
          %v2849 = vld [vmem:[#allocation8 + $0x140] sm:$0xff]
          %v2850 = vld [vmem:[#allocation8 + $0x148] sm:$0xff]
          %v2851 = vld [vmem:[#allocation8 + $0x150] sm:$0xff]
          %v2852 = vld [vmem:[#allocation8 + $0x158] sm:$0xff]
          %v2853 = vld [vmem:[#allocation8 + $0x160] sm:$0xff]
          %v2854 = vld [vmem:[#allocation8 + $0x168] sm:$0xff]
          %v2855 = vld [vmem:[#allocation8 + $0x170] sm:$0xff]
          %v2856 = vld [vmem:[#allocation8 + $0x178] sm:$0xff]
          %v2857 = vld [vmem:[#allocation8 + $0x180] sm:$0xff]
          %v2858 = vld [vmem:[#allocation8 + $0x188] sm:$0xff]
          %v2859 = vld [vmem:[#allocation8 + $0x190] sm:$0xff]
          %v2860 = vld [vmem:[#allocation8 + $0x198] sm:$0xff]
          %v2861 = vld [vmem:[#allocation8 + $0x1a0] sm:$0xff]
          %v2862 = vld [vmem:[#allocation8 + $0x1a8] sm:$0xff]
          %v2863 = vld [vmem:[#allocation8 + $0x1b0] sm:$0xff]
          %v2864 = vld [vmem:[#allocation8 + $0x1b8] sm:$0xff]
          %v2865 = vld [vmem:[#allocation8 + $0x1c0] sm:$0xff]
          %v2866 = vld [vmem:[#allocation8 + $0x1c8] sm:$0xff]
          %v2867 = vld [vmem:[#allocation8 + $0x1d0] sm:$0xff]
          %v2868 = vld [vmem:[#allocation8 + $0x1d8] sm:$0xff]
          %v2869 = vld [vmem:[#allocation8 + $0x1e0] sm:$0xff]
          %v2870 = vld [vmem:[#allocation8 + $0x1e8] sm:$0xff]
          %v2871 = vld [vmem:[#allocation8 + $0x1f0] sm:$0xff]
          %v2872 = vld [vmem:[#allocation8 + $0x1f8] sm:$0xff]
          %v2873 = vld [vmem:[#allocation8 + $0x200] sm:$0xff]
          %v2874 = vld [vmem:[#allocation8 + $0x208] sm:$0xff]
          %v2875 = vld [vmem:[#allocation8 + $0x210] sm:$0xff]
          %v2876 = vld [vmem:[#allocation8 + $0x218] sm:$0xff]
          %v2877 = vld [vmem:[#allocation8 + $0x220] sm:$0xff]
          %v2878 = vld [vmem:[#allocation8 + $0x228] sm:$0xff]
          %v2879 = vld [vmem:[#allocation8 + $0x230] sm:$0xff]
          %v2880 = vld [vmem:[#allocation8 + $0x238] sm:$0xff]
          %v2881 = vld [vmem:[#allocation8 + $0x240] sm:$0xff]
          %v2882 = vld [vmem:[#allocation8 + $0x248] sm:$0xff]
          %v2883 = vld [vmem:[#allocation8 + $0x250] sm:$0xff]
          %v2884 = vld [vmem:[#allocation8 + $0x258] sm:$0xff]
          %v2885 = vld [vmem:[#allocation8 + $0x260] sm:$0xff]
          %v2886 = vld [vmem:[#allocation8 + $0x268] sm:$0xff]
          %v2887 = vld [vmem:[#allocation8 + $0x270] sm:$0xff]
          %v2888 = vld [vmem:[#allocation8 + $0x278] sm:$0xff]
          %v2889 = vld [vmem:[#allocation8 + $0x280] sm:$0xff]
          %v2890 = vld [vmem:[#allocation8 + $0x288] sm:$0xff]
          %v2891 = vld [vmem:[#allocation8 + $0x290] sm:$0xff]
          %v2892 = vld [vmem:[#allocation8 + $0x298] sm:$0xff]
          %v2893 = vld [vmem:[#allocation8 + $0x2a0] sm:$0xff]
          %v2894 = vld [vmem:[#allocation8 + $0x2a8] sm:$0xff]
          %v2895 = vld [vmem:[#allocation8 + $0x2b0] sm:$0xff]
          %v2896 = vld [vmem:[#allocation8 + $0x2b8] sm:$0xff]
          %v2897 = vld [vmem:[#allocation8 + $0x2c0] sm:$0xff]
          %v2898 = vld [vmem:[#allocation8 + $0x2c8] sm:$0xff]
          %v2899 = vld [vmem:[#allocation8 + $0x2d0] sm:$0xff]
          %v2900 = vld [vmem:[#allocation8 + $0x2d8] sm:$0xff]
          %v2901 = vld [vmem:[#allocation8 + $0x2e0] sm:$0xff]
          %v2902 = vld [vmem:[#allocation8 + $0x2e8] sm:$0xff]
          %v2903 = vld [vmem:[#allocation8 + $0x2f0] sm:$0xff]
          %v2904 = vld [vmem:[#allocation8 + $0x2f8] sm:$0xff]
          %v2905 = vld [vmem:[#allocation8 + $0x300] sm:$0xff]
          %v2906 = vld [vmem:[#allocation8 + $0x308] sm:$0xff]
          %v2907 = vld [vmem:[#allocation8 + $0x310] sm:$0xff]
          %v2908 = vld [vmem:[#allocation8 + $0x318] sm:$0xff]
          %v2909 = vld [vmem:[#allocation8 + $0x320] sm:$0xff]
          %v2910 = vld [vmem:[#allocation8 + $0x328] sm:$0xff]
          %v2911 = vld [vmem:[#allocation8 + $0x330] sm:$0xff]
          %v2912 = vld [vmem:[#allocation8 + $0x338] sm:$0xff]
          %v2913 = vld [vmem:[#allocation8 + $0x340] sm:$0xff]
          %v2914 = vld [vmem:[#allocation8 + $0x348] sm:$0xff]
          %v2915 = vld [vmem:[#allocation8 + $0x350] sm:$0xff]
          %v2916 = vld [vmem:[#allocation8 + $0x358] sm:$0xff]
          %v2917 = vld [vmem:[#allocation8 + $0x360] sm:$0xff]
          %v2918 = vld [vmem:[#allocation8 + $0x368] sm:$0xff]
          %v2919 = vld [vmem:[#allocation8 + $0x370] sm:$0xff]
          %v2920 = vld [vmem:[#allocation8 + $0x378] sm:$0xff]
          %v2921 = vld [vmem:[#allocation8 + $0x380] sm:$0xff]
          %v2922 = vld [vmem:[#allocation8 + $0x388] sm:$0xff]
          %v2923 = vld [vmem:[#allocation8 + $0x390] sm:$0xff]
          %v2924 = vld [vmem:[#allocation8 + $0x398] sm:$0xff]
          %v2925 = vld [vmem:[#allocation8 + $0x3a0] sm:$0xff]
          %v2926 = vld [vmem:[#allocation8 + $0x3a8] sm:$0xff]
          %v2927 = vld [vmem:[#allocation8 + $0x3b0] sm:$0xff]
          %v2928 = vld [vmem:[#allocation8 + $0x3b8] sm:$0xff]
          %v2929 = vld [vmem:[#allocation8 + $0x3c0] sm:$0xff]
          %v2930 = vld [vmem:[#allocation8 + $0x3c8] sm:$0xff]
          %v2931 = vld [vmem:[#allocation8 + $0x3d0] sm:$0xff]
          %v2932 = vld [vmem:[#allocation8 + $0x3d8] sm:$0xff]
          %v2933 = vld [vmem:[#allocation8 + $0x3e0] sm:$0xff]
          %v2934 = vld [vmem:[#allocation8 + $0x3e8] sm:$0xff]
          %v2935 = vld [vmem:[#allocation8 + $0x3f0] sm:$0xff]
          %v2936 = vld [vmem:[#allocation8 + $0x3f8] sm:$0xff]
          %v2937 = vld [vmem:[#allocation8 + $0x400] sm:$0xff]
          %v2938 = vld [vmem:[#allocation8 + $0x408] sm:$0xff]
          %v2939 = vld [vmem:[#allocation8 + $0x410] sm:$0xff]
          %v2940 = vld [vmem:[#allocation8 + $0x418] sm:$0xff]
          %v2941 = vld [vmem:[#allocation8 + $0x420] sm:$0xff]
          %v2942 = vld [vmem:[#allocation8 + $0x428] sm:$0xff]
          %v2943 = vld [vmem:[#allocation8 + $0x430] sm:$0xff]
          %v2944 = vld [vmem:[#allocation8 + $0x438] sm:$0xff]
          %v2945 = vld [vmem:[#allocation8 + $0x440] sm:$0xff]
          %v2946 = vld [vmem:[#allocation8 + $0x448] sm:$0xff]
          %v2947 = vld [vmem:[#allocation8 + $0x450] sm:$0xff]
          %v2948 = vld [vmem:[#allocation8 + $0x458] sm:$0xff]
          %v2949 = vld [vmem:[#allocation8 + $0x460] sm:$0xff]
          %v2950 = vld [vmem:[#allocation8 + $0x468] sm:$0xff]
          %v2951 = vld [vmem:[#allocation8 + $0x470] sm:$0xff]
          %v2952 = vld [vmem:[#allocation8 + $0x478] sm:$0xff]
          %v2953 = vunpack.c.l.s8.bf16 %v2809
          %v2954 = vunpack.c.l.s8.bf16 %v2810
          %v2955 = vunpack.c.l.s8.bf16 %v2811
          %v2956 = vunpack.c.l.s8.bf16 %v2812
          %v2957 = vunpack.c.l.s8.bf16 %v2813
          %v2958 = vunpack.c.l.s8.bf16 %v2814
          %v2959 = vunpack.c.h.s8.bf16 %v2809
          %v2960 = vunpack.c.h.s8.bf16 %v2810
          %v2961 = vunpack.c.h.s8.bf16 %v2811
          %v2962 = vunpack.c.h.s8.bf16 %v2812
          %v2963 = vunpack.c.h.s8.bf16 %v2813
          %v2964 = vunpack.c.h.s8.bf16 %v2814
          %v2965 = vunpack.c.l.s8.bf16 %v2815
          %v2966 = vunpack.c.l.s8.bf16 %v2816
          %v2967 = vunpack.c.l.s8.bf16 %v2817
          %v2968 = vunpack.c.l.s8.bf16 %v2818
          %v2969 = vunpack.c.l.s8.bf16 %v2819
          %v2970 = vunpack.c.l.s8.bf16 %v2820
          %v2971 = vunpack.c.h.s8.bf16 %v2815
          %v2972 = vunpack.c.h.s8.bf16 %v2816
          %v2973 = vunpack.c.h.s8.bf16 %v2817
          %v2974 = vunpack.c.h.s8.bf16 %v2818
          %v2975 = vunpack.c.h.s8.bf16 %v2819
          %v2976 = vunpack.c.h.s8.bf16 %v2820
          %v2977 = vunpack.c.l.s8.bf16 %v2821
          %v2978 = vunpack.c.l.s8.bf16 %v2822
          %v2979 = vunpack.c.l.s8.bf16 %v2823
          %v2980 = vunpack.c.l.s8.bf16 %v2824
          %v2981 = vunpack.c.l.s8.bf16 %v2825
          %v2982 = vunpack.c.l.s8.bf16 %v2826
          %v2983 = vunpack.c.h.s8.bf16 %v2821
          %v2984 = vunpack.c.h.s8.bf16 %v2822
          %v2985 = vunpack.c.h.s8.bf16 %v2823
          %v2986 = vunpack.c.h.s8.bf16 %v2824
          %v2987 = vunpack.c.h.s8.bf16 %v2825
          %v2988 = vunpack.c.h.s8.bf16 %v2826
          %v2989 = vunpack.c.l.s8.bf16 %v2827
          %v2990 = vunpack.c.l.s8.bf16 %v2828
          %v2991 = vunpack.c.l.s8.bf16 %v2829
          %v2992 = vunpack.c.l.s8.bf16 %v2830
          %v2993 = vunpack.c.l.s8.bf16 %v2831
          %v2994 = vunpack.c.l.s8.bf16 %v2832
          %v2995 = vunpack.c.h.s8.bf16 %v2827
          %v2996 = vunpack.c.h.s8.bf16 %v2828
          %v2997 = vunpack.c.h.s8.bf16 %v2829
          %v2998 = vunpack.c.h.s8.bf16 %v2830
          %v2999 = vunpack.c.h.s8.bf16 %v2831
          %v3000 = vunpack.c.h.s8.bf16 %v2832
          %v3001 = vunpack.c.l.s8.bf16 %v2833
          %v3002 = vunpack.c.l.s8.bf16 %v2834
          %v3003 = vunpack.c.l.s8.bf16 %v2835
          %v3004 = vunpack.c.l.s8.bf16 %v2836
          %v3005 = vunpack.c.l.s8.bf16 %v2837
          %v3006 = vunpack.c.l.s8.bf16 %v2838
          %v3007 = vunpack.c.h.s8.bf16 %v2833
          %v3008 = vunpack.c.h.s8.bf16 %v2834
          %v3009 = vunpack.c.h.s8.bf16 %v2835
          %v3010 = vunpack.c.h.s8.bf16 %v2836
          %v3011 = vunpack.c.h.s8.bf16 %v2837
          %v3012 = vunpack.c.h.s8.bf16 %v2838
          %v3013 = vunpack.c.l.s8.bf16 %v2839
          %v3014 = vunpack.c.l.s8.bf16 %v2840
          %v3015 = vunpack.c.l.s8.bf16 %v2841
          %v3016 = vunpack.c.l.s8.bf16 %v2842
          %v3017 = vunpack.c.l.s8.bf16 %v2843
          %v3018 = vunpack.c.l.s8.bf16 %v2844
          %v3019 = vunpack.c.h.s8.bf16 %v2839
          %v3020 = vunpack.c.h.s8.bf16 %v2840
          %v3021 = vunpack.c.h.s8.bf16 %v2841
          %v3022 = vunpack.c.h.s8.bf16 %v2842
          %v3023 = vunpack.c.h.s8.bf16 %v2843
          %v3024 = vunpack.c.h.s8.bf16 %v2844
          %v3025 = vunpack.c.l.s8.bf16 %v2845
          %v3026 = vunpack.c.l.s8.bf16 %v2846
          %v3027 = vunpack.c.l.s8.bf16 %v2847
          %v3028 = vunpack.c.l.s8.bf16 %v2848
          %v3029 = vunpack.c.l.s8.bf16 %v2849
          %v3030 = vunpack.c.l.s8.bf16 %v2850
          %v3031 = vunpack.c.h.s8.bf16 %v2845
          %v3032 = vunpack.c.h.s8.bf16 %v2846
          %v3033 = vunpack.c.h.s8.bf16 %v2847
          %v3034 = vunpack.c.h.s8.bf16 %v2848
          %v3035 = vunpack.c.h.s8.bf16 %v2849
          %v3036 = vunpack.c.h.s8.bf16 %v2850
          %v3037 = vunpack.c.l.s8.bf16 %v2851
          %v3038 = vunpack.c.l.s8.bf16 %v2852
          %v3039 = vunpack.c.l.s8.bf16 %v2853
          %v3040 = vunpack.c.l.s8.bf16 %v2854
          %v3041 = vunpack.c.l.s8.bf16 %v2855
          %v3042 = vunpack.c.l.s8.bf16 %v2856
          %v3043 = vunpack.c.h.s8.bf16 %v2851
          %v3044 = vunpack.c.h.s8.bf16 %v2852
          %v3045 = vunpack.c.h.s8.bf16 %v2853
          %v3046 = vunpack.c.h.s8.bf16 %v2854
          %v3047 = vunpack.c.h.s8.bf16 %v2855
          %v3048 = vunpack.c.h.s8.bf16 %v2856
          %v3049 = vunpack.c.l.s8.bf16 %v2857
          %v3050 = vunpack.c.l.s8.bf16 %v2858
          %v3051 = vunpack.c.l.s8.bf16 %v2859
          %v3052 = vunpack.c.l.s8.bf16 %v2860
          %v3053 = vunpack.c.l.s8.bf16 %v2861
          %v3054 = vunpack.c.l.s8.bf16 %v2862
          %v3055 = vunpack.c.h.s8.bf16 %v2857
          %v3056 = vunpack.c.h.s8.bf16 %v2858
          %v3057 = vunpack.c.h.s8.bf16 %v2859
          %v3058 = vunpack.c.h.s8.bf16 %v2860
          %v3059 = vunpack.c.h.s8.bf16 %v2861
          %v3060 = vunpack.c.h.s8.bf16 %v2862
          %v3061 = vunpack.c.l.s8.bf16 %v2863
          %v3062 = vunpack.c.l.s8.bf16 %v2864
          %v3063 = vunpack.c.l.s8.bf16 %v2865
          %v3064 = vunpack.c.l.s8.bf16 %v2866
          %v3065 = vunpack.c.l.s8.bf16 %v2867
          %v3066 = vunpack.c.l.s8.bf16 %v2868
          %v3067 = vunpack.c.h.s8.bf16 %v2863
          %v3068 = vunpack.c.h.s8.bf16 %v2864
          %v3069 = vunpack.c.h.s8.bf16 %v2865
          %v3070 = vunpack.c.h.s8.bf16 %v2866
          %v3071 = vunpack.c.h.s8.bf16 %v2867
          %v3072 = vunpack.c.h.s8.bf16 %v2868
          %v3073 = vunpack.c.l.s8.bf16 %v2869
          %v3074 = vunpack.c.l.s8.bf16 %v2870
          %v3075 = vunpack.c.l.s8.bf16 %v2871
          %v3076 = vunpack.c.l.s8.bf16 %v2872
          %v3077 = vunpack.c.l.s8.bf16 %v2873
          %v3078 = vunpack.c.l.s8.bf16 %v2874
          %v3079 = vunpack.c.h.s8.bf16 %v2869
          %v3080 = vunpack.c.h.s8.bf16 %v2870
          %v3081 = vunpack.c.h.s8.bf16 %v2871
          %v3082 = vunpack.c.h.s8.bf16 %v2872
          %v3083 = vunpack.c.h.s8.bf16 %v2873
          %v3084 = vunpack.c.h.s8.bf16 %v2874
          %v3085 = vunpack.c.l.s8.bf16 %v2875
          %v3086 = vunpack.c.l.s8.bf16 %v2876
          %v3087 = vunpack.c.l.s8.bf16 %v2877
          %v3088 = vunpack.c.l.s8.bf16 %v2878
          %v3089 = vunpack.c.l.s8.bf16 %v2879
          %v3090 = vunpack.c.l.s8.bf16 %v2880
          %v3091 = vunpack.c.h.s8.bf16 %v2875
          %v3092 = vunpack.c.h.s8.bf16 %v2876
          %v3093 = vunpack.c.h.s8.bf16 %v2877
          %v3094 = vunpack.c.h.s8.bf16 %v2878
          %v3095 = vunpack.c.h.s8.bf16 %v2879
          %v3096 = vunpack.c.h.s8.bf16 %v2880
          %v3097 = vunpack.c.l.s8.bf16 %v2881
          %v3098 = vunpack.c.l.s8.bf16 %v2882
          %v3099 = vunpack.c.l.s8.bf16 %v2883
          %v3100 = vunpack.c.l.s8.bf16 %v2884
          %v3101 = vunpack.c.l.s8.bf16 %v2885
          %v3102 = vunpack.c.l.s8.bf16 %v2886
          %v3103 = vunpack.c.h.s8.bf16 %v2881
          %v3104 = vunpack.c.h.s8.bf16 %v2882
          %v3105 = vunpack.c.h.s8.bf16 %v2883
          %v3106 = vunpack.c.h.s8.bf16 %v2884
          %v3107 = vunpack.c.h.s8.bf16 %v2885
          %v3108 = vunpack.c.h.s8.bf16 %v2886
          %v3109 = vunpack.c.l.s8.bf16 %v2887
          %v3110 = vunpack.c.l.s8.bf16 %v2888
          %v3111 = vunpack.c.l.s8.bf16 %v2889
          %v3112 = vunpack.c.l.s8.bf16 %v2890
          %v3113 = vunpack.c.l.s8.bf16 %v2891
          %v3114 = vunpack.c.l.s8.bf16 %v2892
          %v3115 = vunpack.c.h.s8.bf16 %v2887
          %v3116 = vunpack.c.h.s8.bf16 %v2888
          %v3117 = vunpack.c.h.s8.bf16 %v2889
          %v3118 = vunpack.c.h.s8.bf16 %v2890
          %v3119 = vunpack.c.h.s8.bf16 %v2891
          %v3120 = vunpack.c.h.s8.bf16 %v2892
          %v3121 = vunpack.c.l.s8.bf16 %v2893
          %v3122 = vunpack.c.l.s8.bf16 %v2894
          %v3123 = vunpack.c.l.s8.bf16 %v2895
          %v3124 = vunpack.c.l.s8.bf16 %v2896
          %v3125 = vunpack.c.l.s8.bf16 %v2897
          %v3126 = vunpack.c.l.s8.bf16 %v2898
          %v3127 = vunpack.c.h.s8.bf16 %v2893
          %v3128 = vunpack.c.h.s8.bf16 %v2894
          %v3129 = vunpack.c.h.s8.bf16 %v2895
          %v3130 = vunpack.c.h.s8.bf16 %v2896
          %v3131 = vunpack.c.h.s8.bf16 %v2897
          %v3132 = vunpack.c.h.s8.bf16 %v2898
          %v3133 = vunpack.c.l.s8.bf16 %v2899
          %v3134 = vunpack.c.l.s8.bf16 %v2900
          %v3135 = vunpack.c.l.s8.bf16 %v2901
          %v3136 = vunpack.c.l.s8.bf16 %v2902
          %v3137 = vunpack.c.l.s8.bf16 %v2903
          %v3138 = vunpack.c.l.s8.bf16 %v2904
          %v3139 = vunpack.c.h.s8.bf16 %v2899
          %v3140 = vunpack.c.h.s8.bf16 %v2900
          %v3141 = vunpack.c.h.s8.bf16 %v2901
          %v3142 = vunpack.c.h.s8.bf16 %v2902
          %v3143 = vunpack.c.h.s8.bf16 %v2903
          %v3144 = vunpack.c.h.s8.bf16 %v2904
          %v3145 = vunpack.c.l.s8.bf16 %v2905
          %v3146 = vunpack.c.l.s8.bf16 %v2906
          %v3147 = vunpack.c.l.s8.bf16 %v2907
          %v3148 = vunpack.c.l.s8.bf16 %v2908
          %v3149 = vunpack.c.l.s8.bf16 %v2909
          %v3150 = vunpack.c.l.s8.bf16 %v2910
          %v3151 = vunpack.c.h.s8.bf16 %v2905
          %v3152 = vunpack.c.h.s8.bf16 %v2906
          %v3153 = vunpack.c.h.s8.bf16 %v2907
          %v3154 = vunpack.c.h.s8.bf16 %v2908
          %v3155 = vunpack.c.h.s8.bf16 %v2909
          %v3156 = vunpack.c.h.s8.bf16 %v2910
          %v3157 = vunpack.c.l.s8.bf16 %v2911
          %v3158 = vunpack.c.l.s8.bf16 %v2912
          %v3159 = vunpack.c.l.s8.bf16 %v2913
          %v3160 = vunpack.c.l.s8.bf16 %v2914
          %v3161 = vunpack.c.l.s8.bf16 %v2915
          %v3162 = vunpack.c.l.s8.bf16 %v2916
          %v3163 = vunpack.c.h.s8.bf16 %v2911
          %v3164 = vunpack.c.h.s8.bf16 %v2912
          %v3165 = vunpack.c.h.s8.bf16 %v2913
          %v3166 = vunpack.c.h.s8.bf16 %v2914
          %v3167 = vunpack.c.h.s8.bf16 %v2915
          %v3168 = vunpack.c.h.s8.bf16 %v2916
          %v3169 = vunpack.c.l.s8.bf16 %v2917
          %v3170 = vunpack.c.l.s8.bf16 %v2918
          %v3171 = vunpack.c.l.s8.bf16 %v2919
          %v3172 = vunpack.c.l.s8.bf16 %v2920
          %v3173 = vunpack.c.l.s8.bf16 %v2921
          %v3174 = vunpack.c.l.s8.bf16 %v2922
          %v3175 = vunpack.c.h.s8.bf16 %v2917
          %v3176 = vunpack.c.h.s8.bf16 %v2918
          %v3177 = vunpack.c.h.s8.bf16 %v2919
          %v3178 = vunpack.c.h.s8.bf16 %v2920
          %v3179 = vunpack.c.h.s8.bf16 %v2921
          %v3180 = vunpack.c.h.s8.bf16 %v2922
          %v3181 = vunpack.c.l.s8.bf16 %v2923
          %v3182 = vunpack.c.l.s8.bf16 %v2924
          %v3183 = vunpack.c.l.s8.bf16 %v2925
          %v3184 = vunpack.c.l.s8.bf16 %v2926
          %v3185 = vunpack.c.l.s8.bf16 %v2927
          %v3186 = vunpack.c.l.s8.bf16 %v2928
          %v3187 = vunpack.c.h.s8.bf16 %v2923
          %v3188 = vunpack.c.h.s8.bf16 %v2924
          %v3189 = vunpack.c.h.s8.bf16 %v2925
          %v3190 = vunpack.c.h.s8.bf16 %v2926
          %v3191 = vunpack.c.h.s8.bf16 %v2927
          %v3192 = vunpack.c.h.s8.bf16 %v2928
          %v3193 = vunpack.c.l.s8.bf16 %v2929
          %v3194 = vunpack.c.l.s8.bf16 %v2930
          %v3195 = vunpack.c.l.s8.bf16 %v2931
          %v3196 = vunpack.c.l.s8.bf16 %v2932
          %v3197 = vunpack.c.l.s8.bf16 %v2933
          %v3198 = vunpack.c.l.s8.bf16 %v2934
          %v3199 = vunpack.c.h.s8.bf16 %v2929
          %v3200 = vunpack.c.h.s8.bf16 %v2930
          %v3201 = vunpack.c.h.s8.bf16 %v2931
          %v3202 = vunpack.c.h.s8.bf16 %v2932
          %v3203 = vunpack.c.h.s8.bf16 %v2933
          %v3204 = vunpack.c.h.s8.bf16 %v2934
          %v3205 = vunpack.c.l.s8.bf16 %v2935
          %v3206 = vunpack.c.l.s8.bf16 %v2936
          %v3207 = vunpack.c.l.s8.bf16 %v2937
          %v3208 = vunpack.c.l.s8.bf16 %v2938
          %v3209 = vunpack.c.l.s8.bf16 %v2939
          %v3210 = vunpack.c.l.s8.bf16 %v2940
          %v3211 = vunpack.c.h.s8.bf16 %v2935
          %v3212 = vunpack.c.h.s8.bf16 %v2936
          %v3213 = vunpack.c.h.s8.bf16 %v2937
          %v3214 = vunpack.c.h.s8.bf16 %v2938
          %v3215 = vunpack.c.h.s8.bf16 %v2939
          %v3216 = vunpack.c.h.s8.bf16 %v2940
          %v3217 = vunpack.c.l.s8.bf16 %v2941
          %v3218 = vunpack.c.l.s8.bf16 %v2942
          %v3219 = vunpack.c.l.s8.bf16 %v2943
          %v3220 = vunpack.c.l.s8.bf16 %v2944
          %v3221 = vunpack.c.l.s8.bf16 %v2945
          %v3222 = vunpack.c.l.s8.bf16 %v2946
          %v3223 = vunpack.c.h.s8.bf16 %v2941
          %v3224 = vunpack.c.h.s8.bf16 %v2942
          %v3225 = vunpack.c.h.s8.bf16 %v2943
          %v3226 = vunpack.c.h.s8.bf16 %v2944
          %v3227 = vunpack.c.h.s8.bf16 %v2945
          %v3228 = vunpack.c.h.s8.bf16 %v2946
          %v3229 = vunpack.c.l.s8.bf16 %v2947
          %v3230 = vunpack.c.l.s8.bf16 %v2948
          %v3231 = vunpack.c.l.s8.bf16 %v2949
          %v3232 = vunpack.c.l.s8.bf16 %v2950
          %v3233 = vunpack.c.l.s8.bf16 %v2951
          %v3234 = vunpack.c.l.s8.bf16 %v2952
          %v3235 = vunpack.c.h.s8.bf16 %v2947
          %v3236 = vunpack.c.h.s8.bf16 %v2948
          %v3237 = vunpack.c.h.s8.bf16 %v2949
          %v3238 = vunpack.c.h.s8.bf16 %v2950
          %v3239 = vunpack.c.h.s8.bf16 %v2951
          %v3240 = vunpack.c.h.s8.bf16 %v2952
          %v3241 = vpack.c.bf16 %v2663, %v2663
          %v3242 = vpack.c.bf16 %v2665, %v2665
          %v3243 = vpack.c.bf16 %v2734, %v2734
          %v3244 = vpack.c.bf16 %v2736, %v2736
          %v3245 = vpack.c.bf16 %v2805, %v2805
          %v3246 = vpack.c.bf16 %v2807, %v2807
          %3247 = vmatprep.subr.bf16.mxu0 %v2954
          %3248 = vmatpush1.bf16.msra.mxu0 %v2953
          %3249 = vmatprep.subr.bf16.mxu0 %v2960
          %3250 = vmatpush1.bf16.msra.mxu0 %v2959
          %3251 = vmatprep.subr.bf16.mxu0 %v2966
          %3252 = vmatpush1.bf16.msra.mxu0 %v2965
          %3253 = vmatprep.subr.bf16.mxu0 %v2972
          %3254 = vmatpush1.bf16.msra.mxu0 %v2971
          %3255 = vmatprep.subr.bf16.mxu0 %v2978
          %3256 = vmatpush1.bf16.msra.mxu0 %v2977
          %3257 = vmatprep.subr.bf16.mxu0 %v2984
          %3258 = vmatpush1.bf16.msra.mxu0 %v2983
          %3259 = vmatprep.subr.bf16.mxu0 %v2990
          %3260 = vmatpush1.bf16.msra.mxu0 %v2989
          %3261 = vmatprep.subr.bf16.mxu0 %v2996
          %3262 = vmatpush1.bf16.msra.mxu0 %v2995
          %3263 = vmatprep.subr.bf16.mxu0 %v3002
          %3264 = vmatpush1.bf16.msra.mxu0 %v3001
          %3265 = vmatprep.subr.bf16.mxu0 %v3008
          %3266 = vmatpush1.bf16.msra.mxu0 %v3007
          %3267 = vmatprep.subr.bf16.mxu0 %v3014
          %3268 = vmatpush1.bf16.msra.mxu0 %v3013
          %3269 = vmatprep.subr.bf16.mxu0 %v3020
          %3270 = vmatpush1.bf16.msra.mxu0 %v3019
          %3271 = vmatprep.subr.bf16.mxu0 %v3026
          %3272 = vmatpush1.bf16.msra.mxu0 %v3025
          %3273 = vmatprep.subr.bf16.mxu0 %v3032
          %3274 = vmatpush1.bf16.msra.mxu0 %v3031
          %3275 = vmatprep.subr.bf16.mxu0 %v3038
          %3276 = vmatpush1.bf16.msra.mxu0 %v3037
          %3277 = vmatprep.subr.bf16.mxu0 %v3044
          %3278 = vmatpush1.bf16.msra.mxu0 %v3043
          %3279 = vmatprep.mubr.bf16.mxu0 %v3242
          %3280 = vmatmul.mubr.bf16.gmra.mrb[0].mxu0 %v3241
          %v3281 = vpop.f32.mrb[0].mxu0
          %v3282 = vadd.f32 0.0, %v3281
          %v3283 = vpop.f32.mrb[0].mxu0
          %v3284 = vadd.f32 0.0, %v3283
          %v3285 = vpop.f32.mrb[0].mxu0
          %v3286 = vpop.f32.mrb[0].mxu0
          %3287 = vdwg.mxu0
          %3288 = vmatprep.subr.bf16.mxu0 %v3050
          %3289 = vmatpush1.bf16.msra.mxu0 %v3049
          %3290 = vmatprep.subr.bf16.mxu0 %v3056
          %3291 = vmatpush1.bf16.msra.mxu0 %v3055
          %3292 = vmatprep.subr.bf16.mxu0 %v3062
          %3293 = vmatpush1.bf16.msra.mxu0 %v3061
          %3294 = vmatprep.subr.bf16.mxu0 %v3068
          %3295 = vmatpush1.bf16.msra.mxu0 %v3067
          %3296 = vmatprep.subr.bf16.mxu0 %v3074
          %3297 = vmatpush1.bf16.msra.mxu0 %v3073
          %3298 = vmatprep.subr.bf16.mxu0 %v3080
          %3299 = vmatpush1.bf16.msra.mxu0 %v3079
          %3300 = vmatprep.subr.bf16.mxu0 %v3086
          %3301 = vmatpush1.bf16.msra.mxu0 %v3085
          %3302 = vmatprep.subr.bf16.mxu0 %v3092
          %3303 = vmatpush1.bf16.msra.mxu0 %v3091
          %3304 = vmatprep.subr.bf16.mxu0 %v3098
          %3305 = vmatpush1.bf16.msra.mxu0 %v3097
          %3306 = vmatprep.subr.bf16.mxu0 %v3104
          %3307 = vmatpush1.bf16.msra.mxu0 %v3103
          %3308 = vmatprep.subr.bf16.mxu0 %v3110
          %3309 = vmatpush1.bf16.msra.mxu0 %v3109
          %3310 = vmatprep.subr.bf16.mxu0 %v3116
          %3311 = vmatpush1.bf16.msra.mxu0 %v3115
          %3312 = vmatprep.subr.bf16.mxu0 %v3122
          %3313 = vmatpush1.bf16.msra.mxu0 %v3121
          %3314 = vmatprep.subr.bf16.mxu0 %v3128
          %3315 = vmatpush1.bf16.msra.mxu0 %v3127
          %3316 = vmatprep.subr.bf16.mxu0 %v3134
          %3317 = vmatpush1.bf16.msra.mxu0 %v3133
          %3318 = vmatprep.subr.bf16.mxu0 %v3140
          %3319 = vmatpush1.bf16.msra.mxu0 %v3139
          %3320 = vmatprep.mubr.bf16.mxu0 %v3244
          %3321 = vmatmul.mubr.bf16.gmra.mrb[0].mxu0 %v3243
          %v3322 = vpop.f32.mrb[0].mxu0
          %v3323 = vadd.f32 %v3282, %v3322
          %v3324 = vpop.f32.mrb[0].mxu0
          %v3325 = vadd.f32 %v3284, %v3324
          %v3326 = vpop.f32.mrb[0].mxu0
          %v3327 = vpop.f32.mrb[0].mxu0
          %3328 = vdwg.mxu0
          %3329 = vmatprep.subr.bf16.mxu0 %v3146
          %3330 = vmatpush1.bf16.msra.mxu0 %v3145
          %3331 = vmatprep.subr.bf16.mxu0 %v3152
          %3332 = vmatpush1.bf16.msra.mxu0 %v3151
          %3333 = vmatprep.subr.bf16.mxu0 %v3158
          %3334 = vmatpush1.bf16.msra.mxu0 %v3157
          %3335 = vmatprep.subr.bf16.mxu0 %v3164
          %3336 = vmatpush1.bf16.msra.mxu0 %v3163
          %3337 = vmatprep.subr.bf16.mxu0 %v3170
          %3338 = vmatpush1.bf16.msra.mxu0 %v3169
          %3339 = vmatprep.subr.bf16.mxu0 %v3176
          %3340 = vmatpush1.bf16.msra.mxu0 %v3175
          %3341 = vmatprep.subr.bf16.mxu0 %v3182
          %3342 = vmatpush1.bf16.msra.mxu0 %v3181
          %3343 = vmatprep.subr.bf16.mxu0 %v3188
          %3344 = vmatpush1.bf16.msra.mxu0 %v3187
          %3345 = vmatprep.subr.bf16.mxu0 %v3194
          %3346 = vmatpush1.bf16.msra.mxu0 %v3193
          %3347 = vmatprep.subr.bf16.mxu0 %v3200
          %3348 = vmatpush1.bf16.msra.mxu0 %v3199
          %3349 = vmatprep.subr.bf16.mxu0 %v3206
          %3350 = vmatpush1.bf16.msra.mxu0 %v3205
          %3351 = vmatprep.subr.bf16.mxu0 %v3212
          %3352 = vmatpush1.bf16.msra.mxu0 %v3211
          %3353 = vmatprep.subr.bf16.mxu0 %v3218
          %3354 = vmatpush1.bf16.msra.mxu0 %v3217
          %3355 = vmatprep.subr.bf16.mxu0 %v3224
          %3356 = vmatpush1.bf16.msra.mxu0 %v3223
          %3357 = vmatprep.subr.bf16.mxu0 %v3230
          %3358 = vmatpush1.bf16.msra.mxu0 %v3229
          %3359 = vmatprep.subr.bf16.mxu0 %v3236
          %3360 = vmatpush1.bf16.msra.mxu0 %v3235
          %3361 = vmatprep.mubr.bf16.mxu0 %v3246
          %3362 = vmatmul.mubr.bf16.gmra.mrb[0].mxu0 %v3245
          %v3363 = vpop.f32.mrb[0].mxu0
          %v3364 = vadd.f32 %v3323, %v3363
          %v3365 = vpop.f32.mrb[0].mxu0
          %v3366 = vadd.f32 %v3325, %v3365
          %v3367 = vpop.f32.mrb[0].mxu0
          %v3368 = vpop.f32.mrb[0].mxu0
          %3369 = vdwg.mxu0
          %3370 = vmatprep.subr.bf16.mxu0 %v2956
          %3371 = vmatpush1.bf16.msra.mxu0 %v2955
          %3372 = vmatprep.subr.bf16.mxu0 %v2962
          %3373 = vmatpush1.bf16.msra.mxu0 %v2961
          %3374 = vmatprep.subr.bf16.mxu0 %v2968
          %3375 = vmatpush1.bf16.msra.mxu0 %v2967
          %3376 = vmatprep.subr.bf16.mxu0 %v2974
          %3377 = vmatpush1.bf16.msra.mxu0 %v2973
          %3378 = vmatprep.subr.bf16.mxu0 %v2980
          %3379 = vmatpush1.bf16.msra.mxu0 %v2979
          %3380 = vmatprep.subr.bf16.mxu0 %v2986
          %3381 = vmatpush1.bf16.msra.mxu0 %v2985
          %3382 = vmatprep.subr.bf16.mxu0 %v2992
          %3383 = vmatpush1.bf16.msra.mxu0 %v2991
          %3384 = vmatprep.subr.bf16.mxu0 %v2998
          %3385 = vmatpush1.bf16.msra.mxu0 %v2997
          %3386 = vmatprep.subr.bf16.mxu0 %v3004
          %3387 = vmatpush1.bf16.msra.mxu0 %v3003
          %3388 = vmatprep.subr.bf16.mxu0 %v3010
          %3389 = vmatpush1.bf16.msra.mxu0 %v3009
          %3390 = vmatprep.subr.bf16.mxu0 %v3016
          %3391 = vmatpush1.bf16.msra.mxu0 %v3015
          %3392 = vmatprep.subr.bf16.mxu0 %v3022
          %3393 = vmatpush1.bf16.msra.mxu0 %v3021
          %3394 = vmatprep.subr.bf16.mxu0 %v3028
          %3395 = vmatpush1.bf16.msra.mxu0 %v3027
          %3396 = vmatprep.subr.bf16.mxu0 %v3034
          %3397 = vmatpush1.bf16.msra.mxu0 %v3033
          %3398 = vmatprep.subr.bf16.mxu0 %v3040
          %3399 = vmatpush1.bf16.msra.mxu0 %v3039
          %3400 = vmatprep.subr.bf16.mxu0 %v3046
          %3401 = vmatpush1.bf16.msra.mxu0 %v3045
          %3402 = vmatprep.mubr.bf16.mxu0 %v3242
          %3403 = vmatmul.mubr.bf16.gmra.mrb[0].mxu0 %v3241
          %v3404 = vpop.f32.mrb[0].mxu0
          %v3405 = vadd.f32 0.0, %v3404
          %v3406 = vpop.f32.mrb[0].mxu0
          %v3407 = vadd.f32 0.0, %v3406
          %v3408 = vpop.f32.mrb[0].mxu0
          %v3409 = vpop.f32.mrb[0].mxu0
          %3410 = vdwg.mxu0
          %3411 = vmatprep.subr.bf16.mxu0 %v3052
          %3412 = vmatpush1.bf16.msra.mxu0 %v3051
          %3413 = vmatprep.subr.bf16.mxu0 %v3058
          %3414 = vmatpush1.bf16.msra.mxu0 %v3057
          %3415 = vmatprep.subr.bf16.mxu0 %v3064
          %3416 = vmatpush1.bf16.msra.mxu0 %v3063
          %3417 = vmatprep.subr.bf16.mxu0 %v3070
          %3418 = vmatpush1.bf16.msra.mxu0 %v3069
          %3419 = vmatprep.subr.bf16.mxu0 %v3076
          %3420 = vmatpush1.bf16.msra.mxu0 %v3075
          %3421 = vmatprep.subr.bf16.mxu0 %v3082
          %3422 = vmatpush1.bf16.msra.mxu0 %v3081
          %3423 = vmatprep.subr.bf16.mxu0 %v3088
          %3424 = vmatpush1.bf16.msra.mxu0 %v3087
          %3425 = vmatprep.subr.bf16.mxu0 %v3094
          %3426 = vmatpush1.bf16.msra.mxu0 %v3093
          %3427 = vmatprep.subr.bf16.mxu0 %v3100
          %3428 = vmatpush1.bf16.msra.mxu0 %v3099
          %3429 = vmatprep.subr.bf16.mxu0 %v3106
          %3430 = vmatpush1.bf16.msra.mxu0 %v3105
          %3431 = vmatprep.subr.bf16.mxu0 %v3112
          %3432 = vmatpush1.bf16.msra.mxu0 %v3111
          %3433 = vmatprep.subr.bf16.mxu0 %v3118
          %3434 = vmatpush1.bf16.msra.mxu0 %v3117
          %3435 = vmatprep.subr.bf16.mxu0 %v3124
          %3436 = vmatpush1.bf16.msra.mxu0 %v3123
          %3437 = vmatprep.subr.bf16.mxu0 %v3130
          %3438 = vmatpush1.bf16.msra.mxu0 %v3129
          %3439 = vmatprep.subr.bf16.mxu0 %v3136
          %3440 = vmatpush1.bf16.msra.mxu0 %v3135
          %3441 = vmatprep.subr.bf16.mxu0 %v3142
          %3442 = vmatpush1.bf16.msra.mxu0 %v3141
          %3443 = vmatprep.mubr.bf16.mxu0 %v3244
          %3444 = vmatmul.mubr.bf16.gmra.mrb[0].mxu0 %v3243
          %v3445 = vpop.f32.mrb[0].mxu0
          %v3446 = vadd.f32 %v3405, %v3445
          %v3447 = vpop.f32.mrb[0].mxu0
          %v3448 = vadd.f32 %v3407, %v3447
          %v3449 = vpop.f32.mrb[0].mxu0
          %v3450 = vpop.f32.mrb[0].mxu0
          %3451 = vdwg.mxu0
          %3452 = vmatprep.subr.bf16.mxu0 %v3148
          %3453 = vmatpush1.bf16.msra.mxu0 %v3147
          %3454 = vmatprep.subr.bf16.mxu0 %v3154
          %3455 = vmatpush1.bf16.msra.mxu0 %v3153
          %3456 = vmatprep.subr.bf16.mxu0 %v3160
          %3457 = vmatpush1.bf16.msra.mxu0 %v3159
          %3458 = vmatprep.subr.bf16.mxu0 %v3166
          %3459 = vmatpush1.bf16.msra.mxu0 %v3165
          %3460 = vmatprep.subr.bf16.mxu0 %v3172
          %3461 = vmatpush1.bf16.msra.mxu0 %v3171
          %3462 = vmatprep.subr.bf16.mxu0 %v3178
          %3463 = vmatpush1.bf16.msra.mxu0 %v3177
          %3464 = vmatprep.subr.bf16.mxu0 %v3184
          %3465 = vmatpush1.bf16.msra.mxu0 %v3183
          %3466 = vmatprep.subr.bf16.mxu0 %v3190
          %3467 = vmatpush1.bf16.msra.mxu0 %v3189
          %3468 = vmatprep.subr.bf16.mxu0 %v3196
          %3469 = vmatpush1.bf16.msra.mxu0 %v3195
          %3470 = vmatprep.subr.bf16.mxu0 %v3202
          %3471 = vmatpush1.bf16.msra.mxu0 %v3201
          %3472 = vmatprep.subr.bf16.mxu0 %v3208
          %3473 = vmatpush1.bf16.msra.mxu0 %v3207
          %3474 = vmatprep.subr.bf16.mxu0 %v3214
          %3475 = vmatpush1.bf16.msra.mxu0 %v3213
          %3476 = vmatprep.subr.bf16.mxu0 %v3220
          %3477 = vmatpush1.bf16.msra.mxu0 %v3219
          %3478 = vmatprep.subr.bf16.mxu0 %v3226
          %3479 = vmatpush1.bf16.msra.mxu0 %v3225
          %3480 = vmatprep.subr.bf16.mxu0 %v3232
          %3481 = vmatpush1.bf16.msra.mxu0 %v3231
          %3482 = vmatprep.subr.bf16.mxu0 %v3238
          %3483 = vmatpush1.bf16.msra.mxu0 %v3237
          %3484 = vmatprep.mubr.bf16.mxu0 %v3246
          %3485 = vmatmul.mubr.bf16.gmra.mrb[0].mxu0 %v3245
          %v3486 = vpop.f32.mrb[0].mxu0
          %v3487 = vadd.f32 %v3446, %v3486
          %v3488 = vpop.f32.mrb[0].mxu0
          %v3489 = vadd.f32 %v3448, %v3488
          %v3490 = vpop.f32.mrb[0].mxu0
          %v3491 = vpop.f32.mrb[0].mxu0
          %3492 = vdwg.mxu0
          %3493 = vmatprep.subr.bf16.mxu0 %v2958
          %3494 = vmatpush1.bf16.msra.mxu0 %v2957
          %3495 = vmatprep.subr.bf16.mxu0 %v2964
          %3496 = vmatpush1.bf16.msra.mxu0 %v2963
          %3497 = vmatprep.subr.bf16.mxu0 %v2970
          %3498 = vmatpush1.bf16.msra.mxu0 %v2969
          %3499 = vmatprep.subr.bf16.mxu0 %v2976
          %3500 = vmatpush1.bf16.msra.mxu0 %v2975
          %3501 = vmatprep.subr.bf16.mxu0 %v2982
          %3502 = vmatpush1.bf16.msra.mxu0 %v2981
          %3503 = vmatprep.subr.bf16.mxu0 %v2988
          %3504 = vmatpush1.bf16.msra.mxu0 %v2987
          %3505 = vmatprep.subr.bf16.mxu0 %v2994
          %3506 = vmatpush1.bf16.msra.mxu0 %v2993
          %3507 = vmatprep.subr.bf16.mxu0 %v3000
          %3508 = vmatpush1.bf16.msra.mxu0 %v2999
          %3509 = vmatprep.subr.bf16.mxu0 %v3006
          %3510 = vmatpush1.bf16.msra.mxu0 %v3005
          %3511 = vmatprep.subr.bf16.mxu0 %v3012
          %3512 = vmatpush1.bf16.msra.mxu0 %v3011
          %3513 = vmatprep.subr.bf16.mxu0 %v3018
          %3514 = vmatpush1.bf16.msra.mxu0 %v3017
          %3515 = vmatprep.subr.bf16.mxu0 %v3024
          %3516 = vmatpush1.bf16.msra.mxu0 %v3023
          %3517 = vmatprep.subr.bf16.mxu0 %v3030
          %3518 = vmatpush1.bf16.msra.mxu0 %v3029
          %3519 = vmatprep.subr.bf16.mxu0 %v3036
          %3520 = vmatpush1.bf16.msra.mxu0 %v3035
          %3521 = vmatprep.subr.bf16.mxu0 %v3042
          %3522 = vmatpush1.bf16.msra.mxu0 %v3041
          %3523 = vmatprep.subr.bf16.mxu0 %v3048
          %3524 = vmatpush1.bf16.msra.mxu0 %v3047
          %3525 = vmatprep.mubr.bf16.mxu0 %v3242
          %3526 = vmatmul.mubr.bf16.gmra.mrb[0].mxu0 %v3241
          %v3527 = vpop.f32.mrb[0].mxu0
          %v3528 = vadd.f32 0.0, %v3527
          %v3529 = vpop.f32.mrb[0].mxu0
          %v3530 = vadd.f32 0.0, %v3529
          %v3531 = vpop.f32.mrb[0].mxu0
          %v3532 = vpop.f32.mrb[0].mxu0
          %3533 = vdwg.mxu0
          %3534 = vmatprep.subr.bf16.mxu0 %v3054
          %3535 = vmatpush1.bf16.msra.mxu0 %v3053
          %3536 = vmatprep.subr.bf16.mxu0 %v3060
          %3537 = vmatpush1.bf16.msra.mxu0 %v3059
          %3538 = vmatprep.subr.bf16.mxu0 %v3066
          %3539 = vmatpush1.bf16.msra.mxu0 %v3065
          %3540 = vmatprep.subr.bf16.mxu0 %v3072
          %3541 = vmatpush1.bf16.msra.mxu0 %v3071
          %3542 = vmatprep.subr.bf16.mxu0 %v3078
          %3543 = vmatpush1.bf16.msra.mxu0 %v3077
          %3544 = vmatprep.subr.bf16.mxu0 %v3084
          %3545 = vmatpush1.bf16.msra.mxu0 %v3083
          %3546 = vmatprep.subr.bf16.mxu0 %v3090
          %3547 = vmatpush1.bf16.msra.mxu0 %v3089
          %3548 = vmatprep.subr.bf16.mxu0 %v3096
          %3549 = vmatpush1.bf16.msra.mxu0 %v3095
          %3550 = vmatprep.subr.bf16.mxu0 %v3102
          %3551 = vmatpush1.bf16.msra.mxu0 %v3101
          %3552 = vmatprep.subr.bf16.mxu0 %v3108
          %3553 = vmatpush1.bf16.msra.mxu0 %v3107
          %3554 = vmatprep.subr.bf16.mxu0 %v3114
          %3555 = vmatpush1.bf16.msra.mxu0 %v3113
          %3556 = vmatprep.subr.bf16.mxu0 %v3120
          %3557 = vmatpush1.bf16.msra.mxu0 %v3119
          %3558 = vmatprep.subr.bf16.mxu0 %v3126
          %3559 = vmatpush1.bf16.msra.mxu0 %v3125
          %3560 = vmatprep.subr.bf16.mxu0 %v3132
          %3561 = vmatpush1.bf16.msra.mxu0 %v3131
          %3562 = vmatprep.subr.bf16.mxu0 %v3138
          %3563 = vmatpush1.bf16.msra.mxu0 %v3137
          %3564 = vmatprep.subr.bf16.mxu0 %v3144
          %3565 = vmatpush1.bf16.msra.mxu0 %v3143
          %3566 = vmatprep.mubr.bf16.mxu0 %v3244
          %3567 = vmatmul.mubr.bf16.gmra.mrb[0].mxu0 %v3243
          %v3568 = vpop.f32.mrb[0].mxu0
          %v3569 = vadd.f32 %v3528, %v3568
          %v3570 = vpop.f32.mrb[0].mxu0
          %v3571 = vadd.f32 %v3530, %v3570
          %v3572 = vpop.f32.mrb[0].mxu0
          %v3573 = vpop.f32.mrb[0].mxu0
          %3574 = vdwg.mxu0
          %3575 = vmatprep.subr.bf16.mxu0 %v3150
          %3576 = vmatpush1.bf16.msra.mxu0 %v3149
          %3577 = vmatprep.subr.bf16.mxu0 %v3156
          %3578 = vmatpush1.bf16.msra.mxu0 %v3155
          %3579 = vmatprep.subr.bf16.mxu0 %v3162
          %3580 = vmatpush1.bf16.msra.mxu0 %v3161
          %3581 = vmatprep.subr.bf16.mxu0 %v3168
          %3582 = vmatpush1.bf16.msra.mxu0 %v3167
          %3583 = vmatprep.subr.bf16.mxu0 %v3174
          %3584 = vmatpush1.bf16.msra.mxu0 %v3173
          %3585 = vmatprep.subr.bf16.mxu0 %v3180
          %3586 = vmatpush1.bf16.msra.mxu0 %v3179
          %3587 = vmatprep.subr.bf16.mxu0 %v3186
          %3588 = vmatpush1.bf16.msra.mxu0 %v3185
          %3589 = vmatprep.subr.bf16.mxu0 %v3192
          %3590 = vmatpush1.bf16.msra.mxu0 %v3191
          %3591 = vmatprep.subr.bf16.mxu0 %v3198
          %3592 = vmatpush1.bf16.msra.mxu0 %v3197
          %3593 = vmatprep.subr.bf16.mxu0 %v3204
          %3594 = vmatpush1.bf16.msra.mxu0 %v3203
          %3595 = vmatprep.subr.bf16.mxu0 %v3210
          %3596 = vmatpush1.bf16.msra.mxu0 %v3209
          %3597 = vmatprep.subr.bf16.mxu0 %v3216
          %3598 = vmatpush1.bf16.msra.mxu0 %v3215
          %3599 = vmatprep.subr.bf16.mxu0 %v3222
          %3600 = vmatpush1.bf16.msra.mxu0 %v3221
          %3601 = vmatprep.subr.bf16.mxu0 %v3228
          %3602 = vmatpush1.bf16.msra.mxu0 %v3227
          %3603 = vmatprep.subr.bf16.mxu0 %v3234
          %3604 = vmatpush1.bf16.msra.mxu0 %v3233
          %3605 = vmatprep.subr.bf16.mxu0 %v3240
          %3606 = vmatpush1.bf16.msra.mxu0 %v3239
          %3607 = vmatprep.mubr.bf16.mxu0 %v3246
          %3608 = vmatmul.mubr.bf16.gmra.mrb[0].mxu0 %v3245
          %v3609 = vpop.f32.mrb[0].mxu0
          %v3610 = vadd.f32 %v3569, %v3609
          %v3611 = vpop.f32.mrb[0].mxu0
          %v3612 = vadd.f32 %v3571, %v3611
          %v3613 = vpop.f32.mrb[0].mxu0
          %v3614 = vpop.f32.mrb[0].mxu0
          %3615 = vdwg.mxu0
          %v3616 = vld [vmem:[#allocation9] sm:$0x3f]
          %v3618 = vlaneseq
          %v3619 = vshrl.u32 %v3618, 7
          %v3620 = vsub.s32 0, %v3619
          %v3621 = vrot.slane %v3616, %v3620
          %v3622 = vlaneseq
          %v3623 = vshrl.u32 %v3622, 7
          %v3624 = vsub.s32 1, %v3623
          %v3625 = vrot.slane %v3616, %v3624
          %v3626 = vlaneseq
          %v3627 = vshrl.u32 %v3626, 7
          %v3628 = vsub.s32 2, %v3627
          %v3629 = vrot.slane %v3616, %v3628
          %v3630 = vlaneseq
          %v3631 = vshrl.u32 %v3630, 7
          %v3632 = vsub.s32 3, %v3631
          %v3633 = vrot.slane %v3616, %v3632
          %v3634 = vlaneseq
          %v3635 = vshrl.u32 %v3634, 7
          %v3636 = vsub.s32 4, %v3635
          %v3637 = vrot.slane %v3616, %v3636
          %v3638 = vlaneseq
          %v3639 = vshrl.u32 %v3638, 7
          %v3640 = vsub.s32 5, %v3639
          %v3641 = vrot.slane %v3616, %v3640
          %v3648 = vmul.f32 %v3364, %v3621
          %v3649 = vmul.f32 %v3366, %v3625
          %v3650 = vmul.f32 %v3487, %v3629
          %v3651 = vmul.f32 %v3489, %v3633
          %v3652 = vmul.f32 %v3610, %v3637
          %v3653 = vmul.f32 %v3612, %v3641
          %v3654 = vld [vmem:[%s1] sm:$0xff]
          %v3655 = vld [vmem:[%s1 + $0x8] sm:$0xf]
          %v3662 = vcombine.low %v3648, %v3649
          %v3663 = vcombine.low %v3650, %v3651
          %v3665 = vunpack.c.l.s4 1983009808
          %v3666 = vunpack.c.0.s8 %v3665
          %v3667 = vlaneseq
          %v3668 = vshrl.u32 %v3667, 7
          %v3669 = vsub.s32 %v3666, %v3668
          %v3670 = vrot.slane %v3662, %v3669
          %v3672 = vunpack.c.l.s4 1983009808
          %v3673 = vunpack.c.0.s8 %v3672
          %v3674 = vlaneseq
          %v3675 = vshrl.u32 %v3674, 7
          %v3676 = vsub.s32 %v3673, %v3675
          %v3677 = vrot.slane %v3663, %v3676
          %v3678 = vcombine.low %v3670, %v3677
          %v3679 = vcombine.low %v3652, %v3653
          %v3681 = vunpack.c.l.s4 1983009808
          %v3682 = vunpack.c.0.s8 %v3681
          %v3683 = vlaneseq
          %v3684 = vshrl.u32 %v3683, 7
          %v3685 = vsub.s32 %v3682, %v3684
          %v3686 = vrot.slane %v3679, %v3685
          %v3689 = vadd.f32 %v3654, %v3678
          %v3690 = vadd.f32 %v3655, %v3686
          %v3693 = vcombine.high %v3689, %v3689
          %v3695 = vunpack.c.l.s4 1983009808
          %v3696 = vunpack.c.0.s8 %v3695
          %v3697 = vlaneseq
          %v3698 = vshrl.u32 %v3697, 7
          %v3699 = vsub.s32 %v3696, %v3698
          %v3700 = vrot.slane %v3689, %v3699
          %v3702 = vunpack.c.l.s4 1983009808
          %v3703 = vunpack.c.0.s8 %v3702
          %v3704 = vlaneseq
          %v3705 = vshrl.u32 %v3704, 7
          %v3706 = vsub.s32 %v3703, %v3705
          %v3707 = vrot.slane %v3693, %v3706
          %v3708 = vcombine.high %v3700, %v3700
          %v3709 = vcombine.high %v3707, %v3707
          %v3711 = vunpack.c.l.s4 1983009808
          %v3712 = vunpack.c.0.s8 %v3711
          %v3713 = vlaneseq
          %v3714 = vshrl.u32 %v3713, 7
          %v3715 = vsub.s32 %v3712, %v3714
          %v3716 = vrot.slane %v3690, %v3715
          %v3717 = vcombine.high %v3716, %v3716
          %vm3724 = vcmask 1041408
          %v3725 = vsel %vm3724, %v3700, 0.0
          %v3726 = vsel %vm3724, %v3708, 0.0
          %v3727 = vadd.f32 %v3725, %v3726
          %v3728 = vsel %vm3724, %v3707, 0.0
          %v3729 = vadd.f32 %v3727, %v3728
          %v3730 = vsel %vm3724, %v3709, 0.0
          %v3731 = vadd.f32 %v3729, %v3730
          %v3732 = vsel %vm3724, %v3716, 0.0
          %v3733 = vadd.f32 %v3731, %v3732
          %v3734 = vsel %vm3724, %v3717, 0.0
          %v3735 = vadd.f32 %v3733, %v3734
          %3736 = vadd.xlane.f32.xlu0 %v3735
          %v3737 = vpop.xlane.xlu0 %3736
          %v3738 = vrcp.pop 768.0
          %v3739 = vmul.f32 %v3737, %v3738
          %v3742 = vunpack.c.l.s4 269488144
          %v3743 = vunpack.c.0.s8 %v3742
          %v3744 = vlaneseq
          %v3745 = vshrl.u32 %v3744, 7
          %v3746 = vsub.s32 %v3743, %v3745
          %v3747 = vrot.slane %v3739, %v3746
          %v3749 = vsub.f32 %v3689, %v3747
          %v3750 = vsub.f32 %v3690, %v3747
          %v3751 = vmul.f32 %v3749, %v3749
          %v3752 = vmul.f32 %v3750, %v3750
          %v3755 = vcombine.high %v3751, %v3751
          %v3757 = vunpack.c.l.s4 1983009808
          %v3758 = vunpack.c.0.s8 %v3757
          %v3759 = vlaneseq
          %v3760 = vshrl.u32 %v3759, 7
          %v3761 = vsub.s32 %v3758, %v3760
          %v3762 = vrot.slane %v3751, %v3761
          %v3764 = vunpack.c.l.s4 1983009808
          %v3765 = vunpack.c.0.s8 %v3764
          %v3766 = vlaneseq
          %v3767 = vshrl.u32 %v3766, 7
          %v3768 = vsub.s32 %v3765, %v3767
          %v3769 = vrot.slane %v3755, %v3768
          %v3770 = vcombine.high %v3762, %v3762
          %v3771 = vcombine.high %v3769, %v3769
          %v3773 = vunpack.c.l.s4 1983009808
          %v3774 = vunpack.c.0.s8 %v3773
          %v3775 = vlaneseq
          %v3776 = vshrl.u32 %v3775, 7
          %v3777 = vsub.s32 %v3774, %v3776
          %v3778 = vrot.slane %v3752, %v3777
          %v3779 = vcombine.high %v3778, %v3778
          %v3786 = vsel %vm3724, %v3762, 0.0
          %v3787 = vsel %vm3724, %v3770, 0.0
          %v3788 = vadd.f32 %v3786, %v3787
          %v3789 = vsel %vm3724, %v3769, 0.0
          %v3790 = vadd.f32 %v3788, %v3789
          %v3791 = vsel %vm3724, %v3771, 0.0
          %v3792 = vadd.f32 %v3790, %v3791
          %v3793 = vsel %vm3724, %v3778, 0.0
          %v3794 = vadd.f32 %v3792, %v3793
          %v3795 = vsel %vm3724, %v3779, 0.0
          %v3796 = vadd.f32 %v3794, %v3795
          %3797 = vadd.xlane.f32.xlu0 %v3796
          %v3798 = vpop.xlane.xlu0 %3797
          %v3799 = vmul.f32 %v3798, %v3738
          %v3800 = vld [vmem:[#allocation11] ss:$2 sm:$0x3f]
          %s3801 = scalar_lea.vmem [#allocation11], 1
          %v3802 = vld [vmem:[%s3801] ss:$2 sm:$0x3f]
          %v3803 = vadd.f32 %v3799, 1e-12
          %v3804 = vrsqrt.pop %v3803
          %v3807 = vunpack.c.l.s4 269488144
          %v3808 = vunpack.c.0.s8 %v3807
          %v3809 = vlaneseq
          %v3810 = vshrl.u32 %v3809, 7
          %v3811 = vsub.s32 %v3808, %v3810
          %v3812 = vrot.slane %v3804, %v3811
          %v3814 = vmul.f32 %v3749, %v3812
          %v3815 = vmul.f32 %v3750, %v3812
          %v3817 = vlaneseq
          %v3818 = vshrl.u32 %v3817, 7
          %v3819 = vsub.s32 0, %v3818
          %v3820 = vrot.slane %v3800, %v3819
          %v3821 = vlaneseq
          %v3822 = vshrl.u32 %v3821, 7
          %v3823 = vsub.s32 1, %v3822
          %v3824 = vrot.slane %v3800, %v3823
          %v3825 = vlaneseq
          %v3826 = vshrl.u32 %v3825, 7
          %v3827 = vsub.s32 2, %v3826
          %v3828 = vrot.slane %v3800, %v3827
          %v3829 = vlaneseq
          %v3830 = vshrl.u32 %v3829, 7
          %v3831 = vsub.s32 3, %v3830
          %v3832 = vrot.slane %v3800, %v3831
          %v3833 = vlaneseq
          %v3834 = vshrl.u32 %v3833, 7
          %v3835 = vsub.s32 4, %v3834
          %v3836 = vrot.slane %v3800, %v3835
          %v3837 = vlaneseq
          %v3838 = vshrl.u32 %v3837, 7
          %v3839 = vsub.s32 5, %v3838
          %v3840 = vrot.slane %v3800, %v3839
          %v3841 = vcombine.low %v3820, %v3824
          %v3842 = vcombine.low %v3828, %v3832
          %v3844 = vunpack.c.l.s4 1983009808
          %v3845 = vunpack.c.0.s8 %v3844
          %v3846 = vlaneseq
          %v3847 = vshrl.u32 %v3846, 7
          %v3848 = vsub.s32 %v3845, %v3847
          %v3849 = vrot.slane %v3841, %v3848
          %v3851 = vunpack.c.l.s4 1983009808
          %v3852 = vunpack.c.0.s8 %v3851
          %v3853 = vlaneseq
          %v3854 = vshrl.u32 %v3853, 7
          %v3855 = vsub.s32 %v3852, %v3854
          %v3856 = vrot.slane %v3842, %v3855
          %v3857 = vcombine.low %v3849, %v3856
          %v3858 = vcombine.low %v3836, %v3840
          %v3860 = vunpack.c.l.s4 1983009808
          %v3861 = vunpack.c.0.s8 %v3860
          %v3862 = vlaneseq
          %v3863 = vshrl.u32 %v3862, 7
          %v3864 = vsub.s32 %v3861, %v3863
          %v3865 = vrot.slane %v3858, %v3864
          %v3868 = vmul.f32 %v3814, %v3857
          %v3869 = vmul.f32 %v3815, %v3865
          %v3871 = vlaneseq
          %v3872 = vshrl.u32 %v3871, 7
          %v3873 = vsub.s32 0, %v3872
          %v3874 = vrot.slane %v3802, %v3873
          %v3875 = vlaneseq
          %v3876 = vshrl.u32 %v3875, 7
          %v3877 = vsub.s32 1, %v3876
          %v3878 = vrot.slane %v3802, %v3877
          %v3879 = vlaneseq
          %v3880 = vshrl.u32 %v3879, 7
          %v3881 = vsub.s32 2, %v3880
          %v3882 = vrot.slane %v3802, %v3881
          %v3883 = vlaneseq
          %v3884 = vshrl.u32 %v3883, 7
          %v3885 = vsub.s32 3, %v3884
          %v3886 = vrot.slane %v3802, %v3885
          %v3887 = vlaneseq
          %v3888 = vshrl.u32 %v3887, 7
          %v3889 = vsub.s32 4, %v3888
          %v3890 = vrot.slane %v3802, %v3889
          %v3891 = vlaneseq
          %v3892 = vshrl.u32 %v3891, 7
          %v3893 = vsub.s32 5, %v3892
          %v3894 = vrot.slane %v3802, %v3893
          %v3895 = vcombine.low %v3874, %v3878
          %v3896 = vcombine.low %v3882, %v3886
          %v3898 = vunpack.c.l.s4 1983009808
          %v3899 = vunpack.c.0.s8 %v3898
          %v3900 = vlaneseq
          %v3901 = vshrl.u32 %v3900, 7
          %v3902 = vsub.s32 %v3899, %v3901
          %v3903 = vrot.slane %v3895, %v3902
          %v3905 = vunpack.c.l.s4 1983009808
          %v3906 = vunpack.c.0.s8 %v3905
          %v3907 = vlaneseq
          %v3908 = vshrl.u32 %v3907, 7
          %v3909 = vsub.s32 %v3906, %v3908
          %v3910 = vrot.slane %v3896, %v3909
          %v3911 = vcombine.low %v3903, %v3910
          %v3912 = vcombine.low %v3890, %v3894
          %v3914 = vunpack.c.l.s4 1983009808
          %v3915 = vunpack.c.0.s8 %v3914
          %v3916 = vlaneseq
          %v3917 = vshrl.u32 %v3916, 7
          %v3918 = vsub.s32 %v3915, %v3917
          %v3919 = vrot.slane %v3912, %v3918
          %v3922 = vadd.f32 %v3868, %v3911
          %v3923 = vadd.f32 %v3869, %v3919
          %v3924 = vld [vmem:[%s3] sm:$0x3]
          %v3925 = vld [vmem:[#allocation12] sm:$0xf]
          %v3928 = vcombine.high %v3922, %v3922
          %v3930 = vunpack.c.l.s4 1983009808
          %v3931 = vunpack.c.0.s8 %v3930
          %v3932 = vlaneseq
          %v3933 = vshrl.u32 %v3932, 7
          %v3934 = vsub.s32 %v3931, %v3933
          %v3935 = vrot.slane %v3922, %v3934
          %v3937 = vunpack.c.l.s4 1983009808
          %v3938 = vunpack.c.0.s8 %v3937
          %v3939 = vlaneseq
          %v3940 = vshrl.u32 %v3939, 7
          %v3941 = vsub.s32 %v3938, %v3940
          %v3942 = vrot.slane %v3928, %v3941
          %v3943 = vcombine.high %v3935, %v3935
          %v3944 = vcombine.high %v3942, %v3942
          %v3946 = vunpack.c.l.s4 1983009808
          %v3947 = vunpack.c.0.s8 %v3946
          %v3948 = vlaneseq
          %v3949 = vshrl.u32 %v3948, 7
          %v3950 = vsub.s32 %v3947, %v3949
          %v3951 = vrot.slane %v3923, %v3950
          %v3952 = vcombine.high %v3951, %v3951
          %v3959 = vpack.c.bf16 %v3935, %v3935
          %v3960 = vpack.c.bf16 %v3943, %v3943
          %v3961 = vpack.c.bf16 %v3942, %v3942
          %v3962 = vpack.c.bf16 %v3944, %v3944
          %v3963 = vpack.c.bf16 %v3951, %v3951
          %v3964 = vpack.c.bf16 %v3952, %v3952
          %v3965 = vld [vmem:[%s9] sm:$0xf]
          %v3966 = vld [vmem:[%s9 + $0x4] sm:$0xf]
          %v3967 = vld [vmem:[%s9 + $0x8] sm:$0xf]
          %v3968 = vld [vmem:[%s9 + $0xc] sm:$0xf]
          %v3969 = vld [vmem:[%s9 + $0x10] sm:$0xf]
          %v3970 = vld [vmem:[%s9 + $0x14] sm:$0xf]
          %v3971 = vld [vmem:[%s9 + $0x18] sm:$0xf]
          %v3972 = vld [vmem:[%s9 + $0x1c] sm:$0xf]
          %v3973 = vld [vmem:[%s9 + $0x20] sm:$0xf]
          %v3974 = vld [vmem:[%s9 + $0x24] sm:$0xf]
          %v3975 = vld [vmem:[%s9 + $0x28] sm:$0xf]
          %v3976 = vld [vmem:[%s9 + $0x2c] sm:$0xf]
          %v3977 = vld [vmem:[%s9 + $0x30] sm:$0xf]
          %v3978 = vld [vmem:[%s9 + $0x34] sm:$0xf]
          %v3979 = vld [vmem:[%s9 + $0x38] sm:$0xf]
          %v3980 = vld [vmem:[%s9 + $0x3c] sm:$0xf]
          %v3981 = vld [vmem:[%s9 + $0x40] sm:$0xf]
          %v3982 = vld [vmem:[%s9 + $0x44] sm:$0xf]
          %v3983 = vld [vmem:[%s9 + $0x48] sm:$0xf]
          %v3984 = vld [vmem:[%s9 + $0x4c] sm:$0xf]
          %v3985 = vld [vmem:[%s9 + $0x50] sm:$0xf]
          %v3986 = vld [vmem:[%s9 + $0x54] sm:$0xf]
          %v3987 = vld [vmem:[%s9 + $0x58] sm:$0xf]
          %v3988 = vld [vmem:[%s9 + $0x5c] sm:$0xf]
          %v3989 = vld [vmem:[%s9 + $0x60] sm:$0xf]
          %v3990 = vld [vmem:[%s9 + $0x64] sm:$0xf]
          %v3991 = vld [vmem:[%s9 + $0x68] sm:$0xf]
          %v3992 = vld [vmem:[%s9 + $0x6c] sm:$0xf]
          %v3993 = vld [vmem:[%s9 + $0x70] sm:$0xf]
          %v3994 = vld [vmem:[%s9 + $0x74] sm:$0xf]
          %v3995 = vld [vmem:[%s9 + $0x78] sm:$0xf]
          %v3996 = vld [vmem:[%s9 + $0x7c] sm:$0xf]
          %v3997 = vld [vmem:[%s9 + $0x80] sm:$0xf]
          %v3998 = vld [vmem:[%s9 + $0x84] sm:$0xf]
          %v3999 = vld [vmem:[%s9 + $0x88] sm:$0xf]
          %v4000 = vld [vmem:[%s9 + $0x8c] sm:$0xf]
          %v4001 = vld [vmem:[%s9 + $0x90] sm:$0xf]
          %v4002 = vld [vmem:[%s9 + $0x94] sm:$0xf]
          %v4003 = vld [vmem:[%s9 + $0x98] sm:$0xf]
          %v4004 = vld [vmem:[%s9 + $0x9c] sm:$0xf]
          %v4005 = vld [vmem:[%s9 + $0xa0] sm:$0xf]
          %v4006 = vld [vmem:[%s9 + $0xa4] sm:$0xf]
          %v4007 = vld [vmem:[%s9 + $0xa8] sm:$0xf]
          %v4008 = vld [vmem:[%s9 + $0xac] sm:$0xf]
          %v4009 = vld [vmem:[%s9 + $0xb0] sm:$0xf]
          %v4010 = vld [vmem:[%s9 + $0xb4] sm:$0xf]
          %v4011 = vld [vmem:[%s9 + $0xb8] sm:$0xf]
          %v4012 = vld [vmem:[%s9 + $0xbc] sm:$0xf]
          %v4013 = vld [vmem:[%s9 + $0xc0] sm:$0xf]
          %v4014 = vld [vmem:[%s9 + $0xc4] sm:$0xf]
          %v4015 = vld [vmem:[%s9 + $0xc8] sm:$0xf]
          %v4016 = vld [vmem:[%s9 + $0xcc] sm:$0xf]
          %v4017 = vld [vmem:[%s9 + $0xd0] sm:$0xf]
          %v4018 = vld [vmem:[%s9 + $0xd4] sm:$0xf]
          %v4019 = vld [vmem:[%s9 + $0xd8] sm:$0xf]
          %v4020 = vld [vmem:[%s9 + $0xdc] sm:$0xf]
          %v4021 = vld [vmem:[%s9 + $0xe0] sm:$0xf]
          %v4022 = vld [vmem:[%s9 + $0xe4] sm:$0xf]
          %v4023 = vld [vmem:[%s9 + $0xe8] sm:$0xf]
          %v4024 = vld [vmem:[%s9 + $0xec] sm:$0xf]
          %v4025 = vld [vmem:[%s9 + $0xf0] sm:$0xf]
          %v4026 = vld [vmem:[%s9 + $0xf4] sm:$0xf]
          %v4027 = vld [vmem:[%s9 + $0xf8] sm:$0xf]
          %v4028 = vld [vmem:[%s9 + $0xfc] sm:$0xf]
          %v4029 = vld [vmem:[%s9 + $0x100] sm:$0xf]
          %v4030 = vld [vmem:[%s9 + $0x104] sm:$0xf]
          %v4031 = vld [vmem:[%s9 + $0x108] sm:$0xf]
          %v4032 = vld [vmem:[%s9 + $0x10c] sm:$0xf]
          %v4033 = vld [vmem:[%s9 + $0x110] sm:$0xf]
          %v4034 = vld [vmem:[%s9 + $0x114] sm:$0xf]
          %v4035 = vld [vmem:[%s9 + $0x118] sm:$0xf]
          %v4036 = vld [vmem:[%s9 + $0x11c] sm:$0xf]
          %v4037 = vld [vmem:[%s9 + $0x120] sm:$0xf]
          %v4038 = vld [vmem:[%s9 + $0x124] sm:$0xf]
          %v4039 = vld [vmem:[%s9 + $0x128] sm:$0xf]
          %v4040 = vld [vmem:[%s9 + $0x12c] sm:$0xf]
          %v4041 = vld [vmem:[%s9 + $0x130] sm:$0xf]
          %v4042 = vld [vmem:[%s9 + $0x134] sm:$0xf]
          %v4043 = vld [vmem:[%s9 + $0x138] sm:$0xf]
          %v4044 = vld [vmem:[%s9 + $0x13c] sm:$0xf]
          %v4045 = vld [vmem:[%s9 + $0x140] sm:$0xf]
          %v4046 = vld [vmem:[%s9 + $0x144] sm:$0xf]
          %v4047 = vld [vmem:[%s9 + $0x148] sm:$0xf]
          %v4048 = vld [vmem:[%s9 + $0x14c] sm:$0xf]
          %v4049 = vld [vmem:[%s9 + $0x150] sm:$0xf]
          %v4050 = vld [vmem:[%s9 + $0x154] sm:$0xf]
          %v4051 = vld [vmem:[%s9 + $0x158] sm:$0xf]
          %v4052 = vld [vmem:[%s9 + $0x15c] sm:$0xf]
          %v4053 = vld [vmem:[%s9 + $0x160] sm:$0xf]
          %v4054 = vld [vmem:[%s9 + $0x164] sm:$0xf]
          %v4055 = vld [vmem:[%s9 + $0x168] sm:$0xf]
          %v4056 = vld [vmem:[%s9 + $0x16c] sm:$0xf]
          %v4057 = vld [vmem:[%s9 + $0x170] sm:$0xf]
          %v4058 = vld [vmem:[%s9 + $0x174] sm:$0xf]
          %v4059 = vld [vmem:[%s9 + $0x178] sm:$0xf]
          %v4060 = vld [vmem:[%s9 + $0x17c] sm:$0xf]
          %4062 = vset.pattern.permute.xlu0 0
          %4063 = vperm.xlu0 %4062, %v3924
          %v4064 = vpop.permute.xlu0 %4063
          %v4066 = vlaneseq
          %v4067 = vshrl.u32 %v4066, 7
          %v4068 = vsub.s32 0, %v4067
          %v4069 = vrot.slane %v3925, %v4068
          %v4070 = vmul.f32 %v4064, %v4069
          %v4167 = vunpack.c.l.b16 %v3965
          %v4168 = vunpack.c.l.b16 %v3966
          %v4169 = vunpack.c.l.b16 %v3967
          %v4170 = vunpack.c.l.b16 %v3968
          %v4171 = vunpack.c.l.b16 %v3969
          %v4172 = vunpack.c.l.b16 %v3970
          %v4173 = vunpack.c.l.b16 %v3971
          %v4174 = vunpack.c.l.b16 %v3972
          %v4175 = vunpack.c.l.b16 %v3973
          %v4176 = vunpack.c.l.b16 %v3974
          %v4177 = vunpack.c.l.b16 %v3975
          %v4178 = vunpack.c.l.b16 %v3976
          %v4179 = vunpack.c.l.b16 %v3977
          %v4180 = vunpack.c.l.b16 %v3978
          %v4181 = vunpack.c.l.b16 %v3979
          %v4182 = vunpack.c.l.b16 %v3980
          %v4183 = vunpack.c.l.b16 %v3981
          %v4184 = vunpack.c.l.b16 %v3982
          %v4185 = vunpack.c.l.b16 %v3983
          %v4186 = vunpack.c.l.b16 %v3984
          %v4187 = vunpack.c.l.b16 %v3985
          %v4188 = vunpack.c.l.b16 %v3986
          %v4189 = vunpack.c.l.b16 %v3987
          %v4190 = vunpack.c.l.b16 %v3988
          %v4191 = vunpack.c.l.b16 %v3989
          %v4192 = vunpack.c.l.b16 %v3990
          %v4193 = vunpack.c.l.b16 %v3991
          %v4194 = vunpack.c.l.b16 %v3992
          %v4195 = vunpack.c.l.b16 %v3993
          %v4196 = vunpack.c.l.b16 %v3994
          %v4197 = vunpack.c.l.b16 %v3995
          %v4198 = vunpack.c.l.b16 %v3996
          %v4199 = vunpack.c.l.b16 %v3997
          %v4200 = vunpack.c.l.b16 %v3998
          %v4201 = vunpack.c.l.b16 %v3999
          %v4202 = vunpack.c.l.b16 %v4000
          %v4203 = vunpack.c.l.b16 %v4001
          %v4204 = vunpack.c.l.b16 %v4002
          %v4205 = vunpack.c.l.b16 %v4003
          %v4206 = vunpack.c.l.b16 %v4004
          %v4207 = vunpack.c.l.b16 %v4005
          %v4208 = vunpack.c.l.b16 %v4006
          %v4209 = vunpack.c.l.b16 %v4007
          %v4210 = vunpack.c.l.b16 %v4008
          %v4211 = vunpack.c.l.b16 %v4009
          %v4212 = vunpack.c.l.b16 %v4010
          %v4213 = vunpack.c.l.b16 %v4011
          %v4214 = vunpack.c.l.b16 %v4012
          %v4215 = vunpack.c.l.b16 %v4013
          %v4216 = vunpack.c.l.b16 %v4014
          %v4217 = vunpack.c.l.b16 %v4015
          %v4218 = vunpack.c.l.b16 %v4016
          %v4219 = vunpack.c.l.b16 %v4017
          %v4220 = vunpack.c.l.b16 %v4018
          %v4221 = vunpack.c.l.b16 %v4019
          %v4222 = vunpack.c.l.b16 %v4020
          %v4223 = vunpack.c.l.b16 %v4021
          %v4224 = vunpack.c.l.b16 %v4022
          %v4225 = vunpack.c.l.b16 %v4023
          %v4226 = vunpack.c.l.b16 %v4024
          %v4227 = vunpack.c.l.b16 %v4025
          %v4228 = vunpack.c.l.b16 %v4026
          %v4229 = vunpack.c.l.b16 %v4027
          %v4230 = vunpack.c.l.b16 %v4028
          %v4231 = vunpack.c.l.b16 %v4029
          %v4232 = vunpack.c.l.b16 %v4030
          %v4233 = vunpack.c.l.b16 %v4031
          %v4234 = vunpack.c.l.b16 %v4032
          %v4235 = vunpack.c.l.b16 %v4033
          %v4236 = vunpack.c.l.b16 %v4034
          %v4237 = vunpack.c.l.b16 %v4035
          %v4238 = vunpack.c.l.b16 %v4036
          %v4239 = vunpack.c.l.b16 %v4037
          %v4240 = vunpack.c.l.b16 %v4038
          %v4241 = vunpack.c.l.b16 %v4039
          %v4242 = vunpack.c.l.b16 %v4040
          %v4243 = vunpack.c.l.b16 %v4041
          %v4244 = vunpack.c.l.b16 %v4042
          %v4245 = vunpack.c.l.b16 %v4043
          %v4246 = vunpack.c.l.b16 %v4044
          %v4247 = vunpack.c.l.b16 %v4045
          %v4248 = vunpack.c.l.b16 %v4046
          %v4249 = vunpack.c.l.b16 %v4047
          %v4250 = vunpack.c.l.b16 %v4048
          %v4251 = vunpack.c.l.b16 %v4049
          %v4252 = vunpack.c.l.b16 %v4050
          %v4253 = vunpack.c.l.b16 %v4051
          %v4254 = vunpack.c.l.b16 %v4052
          %v4255 = vunpack.c.l.b16 %v4053
          %v4256 = vunpack.c.l.b16 %v4054
          %v4257 = vunpack.c.l.b16 %v4055
          %v4258 = vunpack.c.l.b16 %v4056
          %v4259 = vunpack.c.l.b16 %v4057
          %v4260 = vunpack.c.l.b16 %v4058
          %v4261 = vunpack.c.l.b16 %v4059
          %v4262 = vunpack.c.l.b16 %v4060
          %v4263 = vpack.c.b16 %v4168, %v4167
          %v4264 = vpack.c.b16 %v4170, %v4169
          %v4265 = vpack.c.b16 %v4172, %v4171
          %v4266 = vpack.c.b16 %v4174, %v4173
          %v4267 = vpack.c.b16 %v4176, %v4175
          %v4268 = vpack.c.b16 %v4178, %v4177
          %v4269 = vpack.c.b16 %v4180, %v4179
          %v4270 = vpack.c.b16 %v4182, %v4181
          %v4271 = vpack.c.b16 %v4184, %v4183
          %v4272 = vpack.c.b16 %v4186, %v4185
          %v4273 = vpack.c.b16 %v4188, %v4187
          %v4274 = vpack.c.b16 %v4190, %v4189
          %v4275 = vpack.c.b16 %v4192, %v4191
          %v4276 = vpack.c.b16 %v4194, %v4193
          %v4277 = vpack.c.b16 %v4196, %v4195
          %v4278 = vpack.c.b16 %v4198, %v4197
          %v4279 = vpack.c.b16 %v4200, %v4199
          %v4280 = vpack.c.b16 %v4202, %v4201
          %v4281 = vpack.c.b16 %v4204, %v4203
          %v4282 = vpack.c.b16 %v4206, %v4205
          %v4283 = vpack.c.b16 %v4208, %v4207
          %v4284 = vpack.c.b16 %v4210, %v4209
          %v4285 = vpack.c.b16 %v4212, %v4211
          %v4286 = vpack.c.b16 %v4214, %v4213
          %v4287 = vpack.c.b16 %v4216, %v4215
          %v4288 = vpack.c.b16 %v4218, %v4217
          %v4289 = vpack.c.b16 %v4220, %v4219
          %v4290 = vpack.c.b16 %v4222, %v4221
          %v4291 = vpack.c.b16 %v4224, %v4223
          %v4292 = vpack.c.b16 %v4226, %v4225
          %v4293 = vpack.c.b16 %v4228, %v4227
          %v4294 = vpack.c.b16 %v4230, %v4229
          %v4295 = vpack.c.b16 %v4232, %v4231
          %v4296 = vpack.c.b16 %v4234, %v4233
          %v4297 = vpack.c.b16 %v4236, %v4235
          %v4298 = vpack.c.b16 %v4238, %v4237
          %v4299 = vpack.c.b16 %v4240, %v4239
          %v4300 = vpack.c.b16 %v4242, %v4241
          %v4301 = vpack.c.b16 %v4244, %v4243
          %v4302 = vpack.c.b16 %v4246, %v4245
          %v4303 = vpack.c.b16 %v4248, %v4247
          %v4304 = vpack.c.b16 %v4250, %v4249
          %v4305 = vpack.c.b16 %v4252, %v4251
          %v4306 = vpack.c.b16 %v4254, %v4253
          %v4307 = vpack.c.b16 %v4256, %v4255
          %v4308 = vpack.c.b16 %v4258, %v4257
          %v4309 = vpack.c.b16 %v4260, %v4259
          %v4310 = vpack.c.b16 %v4262, %v4261
          %4359 = vmatprep.subr.bf16.mxu0 0
          %4360 = vmatpush1.bf16.msra.mxu0 %v4263
          %4361 = vmatprep.subr.bf16.mxu0 0
          %4362 = vmatpush1.bf16.msra.mxu0 %v4264
          %4363 = vmatprep.subr.bf16.mxu0 0
          %4364 = vmatpush1.bf16.msra.mxu0 %v4265
          %4365 = vmatprep.subr.bf16.mxu0 0
          %4366 = vmatpush1.bf16.msra.mxu0 %v4266
          %4367 = vmatprep.subr.bf16.mxu0 0
          %4368 = vmatpush1.bf16.msra.mxu0 %v4267
          %4369 = vmatprep.subr.bf16.mxu0 0
          %4370 = vmatpush1.bf16.msra.mxu0 %v4268
          %4371 = vmatprep.subr.bf16.mxu0 0
          %4372 = vmatpush1.bf16.msra.mxu0 %v4269
          %4373 = vmatprep.subr.bf16.mxu0 0
          %4374 = vmatpush1.bf16.msra.mxu0 %v4270
          %4375 = vmatprep.subr.bf16.mxu0 0
          %4376 = vmatpush1.bf16.msra.mxu0 %v4271
          %4377 = vmatprep.subr.bf16.mxu0 0
          %4378 = vmatpush1.bf16.msra.mxu0 %v4272
          %4379 = vmatprep.subr.bf16.mxu0 0
          %4380 = vmatpush1.bf16.msra.mxu0 %v4273
          %4381 = vmatprep.subr.bf16.mxu0 0
          %4382 = vmatpush1.bf16.msra.mxu0 %v4274
          %4383 = vmatprep.subr.bf16.mxu0 0
          %4384 = vmatpush1.bf16.msra.mxu0 %v4275
          %4385 = vmatprep.subr.bf16.mxu0 0
          %4386 = vmatpush1.bf16.msra.mxu0 %v4276
          %4387 = vmatprep.subr.bf16.mxu0 0
          %4388 = vmatpush1.bf16.msra.mxu0 %v4277
          %4389 = vmatprep.subr.bf16.mxu0 0
          %4390 = vmatpush1.bf16.msra.mxu0 %v4278
          %4391 = vmatprep.mubr.bf16.mxu0 %v3960
          %4392 = vmatmul.mubr.bf16.gmra.mrb[0].mxu0 %v3959
          %v4393 = vpop.f32.mrb[0].mxu0
          %v4394 = vadd.f32 %v4070, %v4393
          %v4395 = vpop.f32.mrb[0].mxu0
          %v4396 = vpop.f32.mrb[0].mxu0
          %v4397 = vpop.f32.mrb[0].mxu0
          %4398 = vdwg.mxu0
          %4399 = vmatprep.subr.bf16.mxu0 0
          %4400 = vmatpush1.bf16.msra.mxu0 %v4279
          %4401 = vmatprep.subr.bf16.mxu0 0
          %4402 = vmatpush1.bf16.msra.mxu0 %v4280
          %4403 = vmatprep.subr.bf16.mxu0 0
          %4404 = vmatpush1.bf16.msra.mxu0 %v4281
          %4405 = vmatprep.subr.bf16.mxu0 0
          %4406 = vmatpush1.bf16.msra.mxu0 %v4282
          %4407 = vmatprep.subr.bf16.mxu0 0
          %4408 = vmatpush1.bf16.msra.mxu0 %v4283
          %4409 = vmatprep.subr.bf16.mxu0 0
          %4410 = vmatpush1.bf16.msra.mxu0 %v4284
          %4411 = vmatprep.subr.bf16.mxu0 0
          %4412 = vmatpush1.bf16.msra.mxu0 %v4285
          %4413 = vmatprep.subr.bf16.mxu0 0
          %4414 = vmatpush1.bf16.msra.mxu0 %v4286
          %4415 = vmatprep.subr.bf16.mxu0 0
          %4416 = vmatpush1.bf16.msra.mxu0 %v4287
          %4417 = vmatprep.subr.bf16.mxu0 0
          %4418 = vmatpush1.bf16.msra.mxu0 %v4288
          %4419 = vmatprep.subr.bf16.mxu0 0
          %4420 = vmatpush1.bf16.msra.mxu0 %v4289
          %4421 = vmatprep.subr.bf16.mxu0 0
          %4422 = vmatpush1.bf16.msra.mxu0 %v4290
          %4423 = vmatprep.subr.bf16.mxu0 0
          %4424 = vmatpush1.bf16.msra.mxu0 %v4291
          %4425 = vmatprep.subr.bf16.mxu0 0
          %4426 = vmatpush1.bf16.msra.mxu0 %v4292
          %4427 = vmatprep.subr.bf16.mxu0 0
          %4428 = vmatpush1.bf16.msra.mxu0 %v4293
          %4429 = vmatprep.subr.bf16.mxu0 0
          %4430 = vmatpush1.bf16.msra.mxu0 %v4294
          %4431 = vmatprep.mubr.bf16.mxu0 %v3962
          %4432 = vmatmul.mubr.bf16.gmra.mrb[0].mxu0 %v3961
          %v4433 = vpop.f32.mrb[0].mxu0
          %v4434 = vadd.f32 %v4394, %v4433
          %v4435 = vpop.f32.mrb[0].mxu0
          %v4436 = vpop.f32.mrb[0].mxu0
          %v4437 = vpop.f32.mrb[0].mxu0
          %4438 = vdwg.mxu0
          %4439 = vmatprep.subr.bf16.mxu0 0
          %4440 = vmatpush1.bf16.msra.mxu0 %v4295
          %4441 = vmatprep.subr.bf16.mxu0 0
          %4442 = vmatpush1.bf16.msra.mxu0 %v4296
          %4443 = vmatprep.subr.bf16.mxu0 0
          %4444 = vmatpush1.bf16.msra.mxu0 %v4297
          %4445 = vmatprep.subr.bf16.mxu0 0
          %4446 = vmatpush1.bf16.msra.mxu0 %v4298
          %4447 = vmatprep.subr.bf16.mxu0 0
          %4448 = vmatpush1.bf16.msra.mxu0 %v4299
          %4449 = vmatprep.subr.bf16.mxu0 0
          %4450 = vmatpush1.bf16.msra.mxu0 %v4300
          %4451 = vmatprep.subr.bf16.mxu0 0
          %4452 = vmatpush1.bf16.msra.mxu0 %v4301
          %4453 = vmatprep.subr.bf16.mxu0 0
          %4454 = vmatpush1.bf16.msra.mxu0 %v4302
          %4455 = vmatprep.subr.bf16.mxu0 0
          %4456 = vmatpush1.bf16.msra.mxu0 %v4303
          %4457 = vmatprep.subr.bf16.mxu0 0
          %4458 = vmatpush1.bf16.msra.mxu0 %v4304
          %4459 = vmatprep.subr.bf16.mxu0 0
          %4460 = vmatpush1.bf16.msra.mxu0 %v4305
          %4461 = vmatprep.subr.bf16.mxu0 0
          %4462 = vmatpush1.bf16.msra.mxu0 %v4306
          %4463 = vmatprep.subr.bf16.mxu0 0
          %4464 = vmatpush1.bf16.msra.mxu0 %v4307
          %4465 = vmatprep.subr.bf16.mxu0 0
          %4466 = vmatpush1.bf16.msra.mxu0 %v4308
          %4467 = vmatprep.subr.bf16.mxu0 0
          %4468 = vmatpush1.bf16.msra.mxu0 %v4309
          %4469 = vmatprep.subr.bf16.mxu0 0
          %4470 = vmatpush1.bf16.msra.mxu0 %v4310
          %4471 = vmatprep.mubr.bf16.mxu0 %v3964
          %4472 = vmatmul.mubr.bf16.gmra.mrb[0].mxu0 %v3963
          %v4473 = vpop.f32.mrb[0].mxu0
          %v4474 = vadd.f32 %v4434, %v4473
          %v4475 = vpop.f32.mrb[0].mxu0
          %v4476 = vpop.f32.mrb[0].mxu0
          %v4477 = vpop.f32.mrb[0].mxu0
          %4478 = vdwg.mxu0
          %4479 = vset.pattern.permute.xlu0 1
          %4480 = vperm.xlu0 %4479, %v3924
          %v4481 = vpop.permute.xlu0 %4480
          %v4483 = vlaneseq
          %v4484 = vshrl.u32 %v4483, 7
          %v4485 = vsub.s32 1, %v4484
          %v4486 = vrot.slane %v3925, %v4485
          %v4487 = vmul.f32 %v4481, %v4486
          %v4488 = vadd.f32 %v4474, %v4487
          %v4489 = vlaneseq
          %v4490 = vshrl.u32 %v4489, 7
          %v4491 = vsub.s32 2, %v4490
          %v4492 = vrot.slane %v3925, %v4491
          %v4493 = vadd.f32 %v4488, %v4492
          %4495 = vset.pattern.permute.xlu0 0
          %4496 = vperm.xlu0 %4495, %v4493
          %v4497 = vpop.permute.xlu0 %4496
          %v4499 = vlaneseq
          %v4500 = vshrl.u32 %v4499, 7
          %v4501 = vsub.s32 3, %v4500
          %v4502 = vrot.slane %v3925, %v4501
          %v4503 = vmul.f32 %v4497, %v4502
          %v4504 = vadd.f32 %v4493, %v4503
          %vm4505 = vcmask 66568
          %v4506 = vsel %vm4505, %v4504, -inf
          %4507 = vmax.xlane.f32.xlu0 %v4506
          %v4508 = vpop.xlane.xlu0 %4507
          %v4509 = vsub.f32 %v4504, %v4508
          %v4510 = vmul.f32 %v4509, 1.442695
          %v4511 = vpow.pop %v4510
          %4513 = vrot.lane.b32.xlu0 %v4511, 127
          %v4514 = vpop.permute.xlu0 %4513
          %vm4516 = vcmask 58368
          %v4517 = vsel %vm4516, %v4514, 0.0
          %4518 = vadd.xlane.f32.xlu0 %v4517
          %v4519 = vpop.xlane.xlu0 %4518
          %v4520 = vlog2.pop %v4519
          %v4521 = vmul.f32 %v4520, 0.6931472
          %v4522 = vadd.f32 %v4521, %v4508
          %v4523 = vsub.f32 %v4504, %v4522
          %vm4524 = vcmask 7168
          %v4525 = vsel %vm4524, %v4493, %v4523
          %vm4526 = vcmask 72704
          %v4527 = vsel %vm4526, %v4525, 0.0
          %4528 = vst [vmem:[%s11] sm:$0x3] %v4527
        $region100: #{markdown_two_stage_forward.1} parent=63 // pred_fallthru
          _
        // Predicated region
        $region101: #{markdown_two_stage_forward.1} parent=63 // pred_check
          %p4529 = pneg %p284
        $region102: #{markdown_two_stage_forward.1} parent=63 // pred_check_branch
          %4531 = sbr.rel (%p4529) target = $region104
        $region103: #{markdown_two_stage_forward.1} parent=63 // pred_region
          _
        $region104: #{markdown_two_stage_forward.1} parent=63 // pred_fallthru
          _
        // Predicated region
        $region105: #{markdown_two_stage_forward.1} parent=63 // pred_check
          %p4532 = pneg %p284
        $region106: #{markdown_two_stage_forward.1} parent=63 // pred_check_branch
          %4534 = sbr.rel (%p4532) target = $region108
        $region107: #{markdown_two_stage_forward.1} parent=63 // pred_region
          _
        $region108: #{markdown_two_stage_forward.1} parent=63 // pred_fallthru
          _
      $region64: #{markdown_two_stage_forward.1} parent=5 // pred_fallthru
        _
      %p4535 = scmp.le.s32.totalorder 2, %s25
      // Predicated region
      $region109: #{markdown_two_stage_forward.1} parent=5 // pred_check
        %p4536 = pneg %p4535
      $region110: #{markdown_two_stage_forward.1} parent=5 // pred_check_branch
        %4538 = sbr.rel (%p4536) target = $region112
      $region111: #{markdown_two_stage_forward.1} parent=5 // pred_region
        %s4539 = ssub.s32 %s25, 2
      $region112: #{markdown_two_stage_forward.1} parent=5 // pred_fallthru
        _
    $region6: #{markdown_two_stage_forward.1} parent=1 // loop_footer
      %s29 = sadd.s32 1, %s25
    $region7: #{markdown_two_stage_forward.1} parent=1 // loop_footer_branch
      %24 = sbr.rel target = $region3
    $region8: #{markdown_two_stage_forward.1} parent=1 // loop_exit
      _
    %4540 = vsyncpa [#allocation5], 1
    %s4541 = scalar_lea.sflag [#allocation5], 1
    %4542 = vsyncpa %s4541, 1
    %4543 = vsyncpa [#allocation7], 1
    %s4544 = scalar_lea.sflag [#allocation7], 1
    %4545 = vsyncpa %s4544, 1
    %4546 = vsyncpa [#allocation10], 1
    %4547 = vsyncpa [#allocation13], 1

</llo_original>
